<compile_context>
chip_gen: v7x
topology: tpu7x:2x2x1
jax: 0.10.0
libtpu: 0.0.40
codegen_flags: <defaults>
</compile_context>

<pallas_src>
import functools
import math

import jax
import jax.numpy as jnp
from jax import lax
from jax.experimental import pallas as pl
from jax.experimental.pallas import tpu as pltpu


# ---------------------------------------------------------------------------
# Fused decoder-layer kernel: one (batch element, query-row tile) per grid step
# ---------------------------------------------------------------------------

def decoder_layer_kernel(x_ref, enc_ref,
                         sa_w_ref, sa_b_ref, ca_w_ref, ca_b_ref,
                         ff_w1_ref, ff_b1_ref, ff_w2_ref, ff_b2_ref,
                         ln_g_ref, ln_b_ref,
                         o_ref,
                         kv_self_ref, kv_cross_ref,
                         *, n_heads, tq, eps):
    qt = pl.program_id(1)               # query-tile index within this batch element
    T = x_ref.shape[0]                  # target sequence length
    Ts = enc_ref.shape[0]               # source sequence length
    E = x_ref.shape[1]
    H = n_heads
    D = E // H

    def layer_norm(h, idx):
        g = ln_g_ref[idx:idx + 1, :]                 # (1, E) f32
        b = ln_b_ref[idx:idx + 1, :]
        mu = jnp.mean(h, axis=-1, keepdims=True)
        var = jnp.mean(jnp.square(h - mu), axis=-1, keepdims=True)
        return (h - mu) * lax.rsqrt(var + eps) * g + b

    # ---- Once per batch element (query-tile 0): project K/V for self- and
    # cross-attention and cache them head-major (H, D, S) bf16 in VMEM
    # scratch.  The cache persists across the "arbitrary" q-tile grid axis so
    # K/V projections are NOT recomputed per query tile and cross-attention
    # K/V stay fully VMEM resident across tiles.
    @pl.when(qt == 0)
    def _():
        xb = x_ref[...].astype(jnp.bfloat16)         # (T,  E)
        eb = enc_ref[...].astype(jnp.bfloat16)       # (Ts, E)

        def project_kv(inp, w_ref, b_ref, s_len):
            k = jnp.dot(inp, w_ref[1], preferred_element_type=jnp.float32) + b_ref[1:2, :]
            v = jnp.dot(inp, w_ref[2], preferred_element_type=jnp.float32) + b_ref[2:3, :]
            # (S, E) -> K^T (E, S) -> head-major (H, D, S); bf16 MXU operands.
            return (k.T.reshape(H, D, s_len).astype(jnp.bfloat16),
                    v.T.reshape(H, D, s_len).astype(jnp.bfloat16))

        k_s, v_s = project_kv(xb, sa_w_ref, sa_b_ref, T)
        kv_self_ref[0] = k_s
        kv_self_ref[1] = v_s
        k_c, v_c = project_kv(eb, ca_w_ref, ca_b_ref, Ts)
        kv_cross_ref[0] = k_c
        kv_cross_ref[1] = v_c

    def attention(xq, kv_ref, s_len, w_ref, b_ref, causal, row0):
        # Q projection: ONE (TQ,E)@(E,E) matmul (full K=E contraction).
        q = jnp.dot(xq.astype(jnp.bfloat16), w_ref[0],
                    preferred_element_type=jnp.float32) + b_ref[0:1, :]        # (TQ, E)
        # Head-major layout via 2D transpose + sublane split + minor-dim swap
        # (single relayout per tile; no per-head lane slicing).
        qh = jnp.swapaxes(q.T.reshape(H, D, tq), 1, 2).astype(jnp.bfloat16)    # (H, TQ, D)
        kh = kv_ref[0]                                                         # (H, D, S)
        vh = kv_ref[1]                                                         # (H, D, S)
        # All-head scores in one batched MXU op (1/sqrt(D) folded into Wq/bq).
        s = lax.dot_general(qh, kh, (((2,), (1,)), ((0,), (0,))),
                            preferred_element_type=jnp.float32)                # (H, TQ, S)
        if causal:
            # Additive causal bias generated in-kernel (no HBM mask tensor).
            row = row0 + lax.broadcasted_iota(jnp.int32, (tq, s_len), 0)
            col = lax.broadcasted_iota(jnp.int32, (tq, s_len), 1)
            s = s + jnp.where(col > row, -1e9, 0.0).astype(jnp.float32)[None]
        s = s - jnp.max(s, axis=-1, keepdims=True)                             # f32 softmax
        p = jnp.exp(s)
        p = p * pl.reciprocal(jnp.sum(p, axis=-1, keepdims=True), approx=True)
        # P @ V for all heads, produced transposed (H, D, TQ): the concat over
        # heads becomes a free sublane merge (no per-head accumulation chain).
        ot = lax.dot_general(vh, p.astype(jnp.bfloat16),
                             (((2,), (2,)), ((0,), (0,))),
                             preferred_element_type=jnp.float32)               # (H, D, TQ)
        attn = ot.reshape(E, tq).T                                             # (TQ, E)
        # Output projection: ONE (TQ,E)@(E,E) matmul over concatenated heads.
        return jnp.dot(attn.astype(jnp.bfloat16), w_ref[3],
                       preferred_element_type=jnp.float32) + b_ref[3:4, :]

    row0 = pl.multiple_of(qt * tq, tq)
    x_t = x_ref[pl.ds(row0, tq), :]                                            # (TQ, E)

    # --- self attention + residual + LayerNorm (dropout = identity) ----------
    h = layer_norm(x_t + attention(x_t, kv_self_ref, T, sa_w_ref, sa_b_ref,
                                   causal=True, row0=row0), 0)
    # --- encoder-decoder attention + residual + LayerNorm --------------------
    h = layer_norm(h + attention(h, kv_cross_ref, Ts, ca_w_ref, ca_b_ref,
                                 causal=False, row0=row0), 1)
    # --- feed forward + residual + LayerNorm ---------------------------------
    f1 = jnp.dot(h.astype(jnp.bfloat16), ff_w1_ref[...],
                 preferred_element_type=jnp.float32) + ff_b1_ref[...]
    f1 = jnp.maximum(f1, 0.0)
    ff = jnp.dot(f1.astype(jnp.bfloat16), ff_w2_ref[...],
                 preferred_element_type=jnp.float32) + ff_b2_ref[...]
    h = layer_norm(h + ff, 2)
    # --- final Decoder LayerNorm (reference returns right after layer 0) -----
    o_ref[...] = layer_norm(h, 3)


# ---------------------------------------------------------------------------
# Wrapper
# ---------------------------------------------------------------------------

def _pick_query_tile(T):
    # Largest query-row tile dividing T, capped at 256 so (H,TQ,S) scores and
    # the (TQ,4E) FFN intermediate stay bounded in VMEM.
    for cand in (256, 128, 64, 32, 16, 8):
        if T % cand == 0:
            return cand
    return T


def _vmem_limit_bytes():
    # Generation-aware VMEM budget: ~75% of physical capacity
    # (v5e/v6e: 128 MiB -> 96 MiB;  v7x: 64 MiB -> 48 MiB).
    cap = 128 * 1024 * 1024
    try:
        cap = int(getattr(pltpu.get_tpu_info(), "vmem_capacity_bytes", cap))
    except Exception:
        pass
    return (cap * 3) // 4


def decoder_layer_fused(x, enc, packed, n_heads):
    B, T, E = x.shape
    Ts = enc.shape[1]
    Hf = packed["ff_w1"].shape[1]
    D = E // n_heads
    tq = _pick_query_tile(T)
    nq = T // tq

    # Advisory cost hint for XLA scheduling around the fused custom call.
    flops = 2 * B * (4 * T * E * E + 2 * T * T * E
                     + 2 * T * E * E + 2 * Ts * E * E + 2 * T * Ts * E
                     + 2 * T * E * Hf)
    transcendentals = B * (n_heads * (T * T + T * Ts) + 8 * T)
    args = (x, enc,
            packed["sa_w"], packed["sa_b"], packed["ca_w"], packed["ca_b"],
            packed["ff_w1"], packed["ff_b1"], packed["ff_w2"], packed["ff_b2"],
            packed["ln_g"], packed["ln_b"])
    bytes_accessed = sum(int(a.size) * a.dtype.itemsize for a in args) + B * T * E * 4

    single = pl.Buffered(1)  # grid-invariant weights: no double buffering
    in_specs = [
        pl.BlockSpec((None, T, E), lambda b, q: (b, 0, 0)),      # x (full target seq)
        pl.BlockSpec((None, Ts, E), lambda b, q: (b, 0, 0)),     # enc_output
        pl.BlockSpec((4, E, E), lambda b, q: (0, 0, 0), pipeline_mode=single),  # self-attn W (bf16)
        pl.BlockSpec((4, E), lambda b, q: (0, 0), pipeline_mode=single),        # self-attn b (f32)
        pl.BlockSpec((4, E, E), lambda b, q: (0, 0, 0), pipeline_mode=single),  # cross-attn W (bf16)
        pl.BlockSpec((4, E), lambda b, q: (0, 0), pipeline_mode=single),        # cross-attn b (f32)
        pl.BlockSpec((E, Hf), lambda b, q: (0, 0), pipeline_mode=single),       # ff_w1 (bf16)
        pl.BlockSpec((1, Hf), lambda b, q: (0, 0), pipeline_mode=single),       # ff_b1
        pl.BlockSpec((Hf, E), lambda b, q: (0, 0), pipeline_mode=single),       # ff_w2 (bf16)
        pl.BlockSpec((1, E), lambda b, q: (0, 0), pipeline_mode=single),        # ff_b2
        pl.BlockSpec((4, E), lambda b, q: (0, 0), pipeline_mode=single),        # LN gammas
        pl.BlockSpec((4, E), lambda b, q: (0, 0), pipeline_mode=single),        # LN betas
    ]

    kernel = functools.partial(decoder_layer_kernel, n_heads=n_heads, tq=tq, eps=1e-5)
    return pl.pallas_call(
        kernel,
        out_shape=jax.ShapeDtypeStruct((B, T, E), jnp.float32),
        grid=(B, nq),
        in_specs=in_specs,
        out_specs=pl.BlockSpec((None, tq, E), lambda b, q: (b, q, 0)),
        scratch_shapes=[
            pltpu.VMEM((2, n_heads, D, T), jnp.bfloat16),    # self-attn  K^T/V^T cache
            pltpu.VMEM((2, n_heads, D, Ts), jnp.bfloat16),   # cross-attn K^T/V^T cache
        ],
        compiler_params=pltpu.CompilerParams(
            # Batch axis "parallel" (megacore on v7x); query-tile axis is
            # "arbitrary" because the K/V scratch cache carries state across it.
            dimension_semantics=("parallel", "arbitrary"),
            vmem_limit_bytes=_vmem_limit_bytes()),
        cost_estimate=pl.CostEstimate(flops=int(flops),
                                      transcendentals=int(transcendentals),
                                      bytes_accessed=int(bytes_accessed)),
    )(*args)


def decoder_forward(x, enc_output, packed_params, n_heads):
    layers = packed_params["layers"]
    assert len(layers) >= 1, "Decoder requires at least one layer"
    # The reference Decoder.forward returns INSIDE the layer loop: only layer 0
    # runs, followed by the final LayerNorm (fused as LN index 3 in the kernel).
    return decoder_layer_fused(x, enc_output, layers[0], n_heads)


# ---------------------------------------------------------------------------
# Deterministic parameter construction + packing into the kernel layout
# ---------------------------------------------------------------------------

def _init_linear(key, fan_in, fan_out):
    kw, kb = jax.random.split(key)
    bound = 1.0 / math.sqrt(fan_in)
    w = jax.random.uniform(kw, (fan_in, fan_out), jnp.float32, -bound, bound)
    b = jax.random.uniform(kb, (fan_out,), jnp.float32, -bound, bound)
    return w, b


def _init_mha(key, emb_dim):
    ks = jax.random.split(key, 4)
    wq, bq = _init_linear(ks[0], emb_dim, emb_dim)
    wk, bk = _init_linear(ks[1], emb_dim, emb_dim)
    wv, bv = _init_linear(ks[2], emb_dim, emb_dim)
    wo, bo = _init_linear(ks[3], emb_dim, emb_dim)
    return dict(wq=wq, bq=bq, wk=wk, bk=bk, wv=wv, bv=bv, wo=wo, bo=bo)


def init_decoder_params(key, config):
    E = config["emb_dim"]
    H = 4 * E  # TODO(synk): feed_forward hidden size undefined in source; use 4*emb_dim.
    layers = []
    for lk in jax.random.split(key, config["n_layers"]):
        k1, k2, k3, k4 = jax.random.split(lk, 4)
        ff_w1, ff_b1 = _init_linear(k3, E, H)
        ff_w2, ff_b2 = _init_linear(k4, H, E)
        layers.append(dict(
            self_attn=_init_mha(k1, E),
            cross_attn=_init_mha(k2, E),
            ff_w1=ff_w1, ff_b1=ff_b1, ff_w2=ff_w2, ff_b2=ff_b2,
            norm1_g=jnp.ones((E,), jnp.float32), norm1_b=jnp.zeros((E,), jnp.float32),
            norm2_g=jnp.ones((E,), jnp.float32), norm2_b=jnp.zeros((E,), jnp.float32),
            norm3_g=jnp.ones((E,), jnp.float32), norm3_b=jnp.zeros((E,), jnp.float32),
        ))
    return dict(layers=layers,
                norm_g=jnp.ones((E,), jnp.float32),
                norm_b=jnp.zeros((E,), jnp.float32))


def _pack_mha(p, inv_scale):
    # 1/sqrt(head_dim) folded into W_q / b_q; weights cast to bf16 (MXU operands),
    # biases stay f32 (added after the f32-accumulating matmul).
    w = jnp.stack([p["wq"] * inv_scale, p["wk"], p["wv"], p["wo"]]).astype(jnp.bfloat16)
    b = jnp.stack([p["bq"] * inv_scale, p["bk"], p["bv"], p["bo"]]).astype(jnp.float32)
    return w, b


def pack_decoder_params(params, config):
    inv_scale = 1.0 / math.sqrt(config["emb_dim"] // config["n_heads"])
    packed_layers = []
    for lp in params["layers"]:
        sa_w, sa_b = _pack_mha(lp["self_attn"], inv_scale)
        ca_w, ca_b = _pack_mha(lp["cross_attn"], inv_scale)
        packed_layers.append(dict(
            sa_w=sa_w, sa_b=sa_b, ca_w=ca_w, ca_b=ca_b,
            ff_w1=lp["ff_w1"].astype(jnp.bfloat16),
            ff_b1=lp["ff_b1"].reshape(1, -1).astype(jnp.float32),
            ff_w2=lp["ff_w2"].astype(jnp.bfloat16),
            ff_b2=lp["ff_b2"].reshape(1, -1).astype(jnp.float32),
            # [norm1, norm2, norm3, final Decoder norm]
            ln_g=jnp.stack([lp["norm1_g"], lp["norm2_g"], lp["norm3_g"], params["norm_g"]]),
            ln_b=jnp.stack([lp["norm1_b"], lp["norm2_b"], lp["norm3_b"], params["norm_b"]]),
        ))
    return dict(layers=packed_layers)


# ---------------------------------------------------------------------------
# Pure-JAX reference (f32) for a loose numerical sanity check
# ---------------------------------------------------------------------------

def _reference_forward(x, enc, params, n_heads):
    E = x.shape[-1]
    D = E // n_heads

    def mha(xq, xkv, p, causal):
        q = xq @ p["wq"] + p["bq"]
        k = xkv @ p["wk"] + p["bk"]
        v = xkv @ p["wv"] + p["bv"]
        B, Tq, _ = q.shape
        Tk = k.shape[1]
        qh = q.reshape(B, Tq, n_heads, D).transpose(0, 2, 1, 3)
        kh = k.reshape(B, Tk, n_heads, D).transpose(0, 2, 1, 3)
        vh = v.reshape(B, Tk, n_heads, D).transpose(0, 2, 1, 3)
        s = jnp.einsum("bhqd,bhkd->bhqk", qh, kh) / math.sqrt(D)
        if causal:
            keep = jnp.tril(jnp.ones((Tq, Tk), jnp.float32))
            s = jnp.where(keep == 0, -1e9, s)
        att = jax.nn.softmax(s, axis=-1)
        o = jnp.einsum("bhqk,bhkd->bhqd", att, vh)
        o = o.transpose(0, 2, 1, 3).reshape(B, Tq, E)
        return o @ p["wo"] + p["bo"]

    def ln(h, g, b):
        mu = h.mean(-1, keepdims=True)
        var = ((h - mu) ** 2).mean(-1, keepdims=True)
        return (h - mu) / jnp.sqrt(var + 1e-5) * g + b

    lp = params["layers"][0]
    h = ln(x + mha(x, x, lp["self_attn"], True), lp["norm1_g"], lp["norm1_b"])
    h = ln(h + mha(h, enc, lp["cross_attn"], False), lp["norm2_g"], lp["norm2_b"])
    f = jnp.maximum(h @ lp["ff_w1"] + lp["ff_b1"], 0.0) @ lp["ff_w2"] + lp["ff_b2"]
    h = ln(h + f, lp["norm3_g"], lp["norm3_b"])
    return ln(h, params["norm_g"], params["norm_b"])


# ---------------------------------------------------------------------------
# Main
# ---------------------------------------------------------------------------

if __name__ == "__main__":
    config = dict(emb_dim=32, n_heads=4, n_layers=2, drop_rate=0.1, qkv_bias=True)
    B, T_tgt, T_src = 2, 8, 8

    key = jax.random.PRNGKey(0)
    k_x, k_enc, k_p = jax.random.split(key, 3)
    x = jax.random.normal(k_x, (B, T_tgt, config["emb_dim"]), jnp.float32)
    enc_output = jax.random.normal(k_enc, (B, T_src, config["emb_dim"]), jnp.float32)

    params = init_decoder_params(k_p, config)
    packed = pack_decoder_params(params, config)

    fwd = jax.jit(functools.partial(decoder_forward, n_heads=config["n_heads"]))
    out = jax.block_until_ready(fwd(x, enc_output, packed))
    assert out.shape == (B, T_tgt, config["emb_dim"])
    assert bool(jnp.all(jnp.isfinite(out)))

    # Loose tolerance: kernel uses bf16 MXU operands + approx reciprocal.
    ref = _reference_forward(x, enc_output, params, config["n_heads"])
    assert float(jnp.max(jnp.abs(out - ref))) < 8e-2
    print("KERNEL_OK")
</pallas_src>

<mosaic_0001>
module attributes {stable_mosaic.version = 11 : i64} {
  func.func @decoder_layer_kernel(%arg0: i32, %arg1: i32, %arg2: memref<1x8x32xf32, #tpu.memory_space<vmem>>, %arg3: memref<1x8x32xf32, #tpu.memory_space<vmem>>, %arg4: memref<4x32x32xbf16, #tpu.memory_space<vmem>>, %arg5: memref<4x32xf32, #tpu.memory_space<vmem>>, %arg6: memref<4x32x32xbf16, #tpu.memory_space<vmem>>, %arg7: memref<4x32xf32, #tpu.memory_space<vmem>>, %arg8: memref<32x128xbf16, #tpu.memory_space<vmem>>, %arg9: memref<1x128xf32, #tpu.memory_space<vmem>>, %arg10: memref<128x32xbf16, #tpu.memory_space<vmem>>, %arg11: memref<1x32xf32, #tpu.memory_space<vmem>>, %arg12: memref<4x32xf32, #tpu.memory_space<vmem>>, %arg13: memref<4x32xf32, #tpu.memory_space<vmem>>, %arg14: memref<1x8x32xf32, #tpu.memory_space<vmem>>, %arg15: memref<2x4x8x8xbf16, #tpu.memory_space<vmem>>, %arg16: memref<2x4x8x8xbf16, #tpu.memory_space<vmem>>) attributes {dimension_semantics = [#tpu.dimension_semantics<parallel>, #tpu.dimension_semantics<arbitrary>], iteration_bounds = array<i64: 2, 1>, scalar_prefetch = 0 : i64, scratch_operands = 2 : i64, tpu.core_type = #tpu.core_type<tc>, window_params = [{transform_indices = @transform_0, window_bounds = array<i64: 1, 8, 32>}, {transform_indices = @transform_1, window_bounds = array<i64: 1, 8, 32>}, {pipeline_mode = #tpu.pipeline_mode<synchronous>, transform_indices = @transform_2, window_bounds = array<i64: 4, 32, 32>}, {pipeline_mode = #tpu.pipeline_mode<synchronous>, transform_indices = @transform_3, window_bounds = array<i64: 4, 32>}, {pipeline_mode = #tpu.pipeline_mode<synchronous>, transform_indices = @transform_4, window_bounds = array<i64: 4, 32, 32>}, {pipeline_mode = #tpu.pipeline_mode<synchronous>, transform_indices = @transform_5, window_bounds = array<i64: 4, 32>}, {pipeline_mode = #tpu.pipeline_mode<synchronous>, transform_indices = @transform_6, window_bounds = array<i64: 32, 128>}, {pipeline_mode = #tpu.pipeline_mode<synchronous>, transform_indices = @transform_7, window_bounds = array<i64: 1, 128>}, {pipeline_mode = #tpu.pipeline_mode<synchronous>, transform_indices = @transform_8, window_bounds = array<i64: 128, 32>}, {pipeline_mode = #tpu.pipeline_mode<synchronous>, transform_indices = @transform_9, window_bounds = array<i64: 1, 32>}, {pipeline_mode = #tpu.pipeline_mode<synchronous>, transform_indices = @transform_10, window_bounds = array<i64: 4, 32>}, {pipeline_mode = #tpu.pipeline_mode<synchronous>, transform_indices = @transform_11, window_bounds = array<i64: 4, 32>}, {transform_indices = @transform_12, window_bounds = array<i64: 1, 8, 32>}]} {
    %c0_i32 = arith.constant 0 : i32
    %0 = arith.cmpi eq, %arg1, %c0_i32 : i32
    %1 = arith.extui %0 : i1 to i32
    %c0_i32_0 = arith.constant 0 : i32
    %2 = arith.cmpi ne, %1, %c0_i32_0 : i32
    scf.if %2 {
      %c0_98 = arith.constant 0 : index
      %c0_99 = arith.constant 0 : index
      %c0_100 = arith.constant 0 : index
      %209 = vector.load %arg2[%c0_98, %c0_99, %c0_100] : memref<1x8x32xf32, #tpu.memory_space<vmem>>, vector<1x8x32xf32>
      %210 = vector.shape_cast %209 : vector<1x8x32xf32> to vector<8x32xf32>
      %211 = arith.truncf %210 : vector<8x32xf32> to vector<8x32xbf16>
      %c0_101 = arith.constant 0 : index
      %c0_102 = arith.constant 0 : index
      %c0_103 = arith.constant 0 : index
      %212 = vector.load %arg3[%c0_101, %c0_102, %c0_103] : memref<1x8x32xf32, #tpu.memory_space<vmem>>, vector<1x8x32xf32>
      %213 = vector.shape_cast %212 : vector<1x8x32xf32> to vector<8x32xf32>
      %214 = arith.truncf %213 : vector<8x32xf32> to vector<8x32xbf16>
      %c1_104 = arith.constant 1 : index
      %c0_105 = arith.constant 0 : index
      %c0_106 = arith.constant 0 : index
      %215 = vector.load %arg4[%c1_104, %c0_105, %c0_106] : memref<4x32x32xbf16, #tpu.memory_space<vmem>>, vector<1x32x32xbf16>
      %216 = vector.shape_cast %215 : vector<1x32x32xbf16> to vector<32x32xbf16>
      %cst_107 = arith.constant dense<0.000000e+00> : vector<8x32xf32>
      %217 = tpu.matmul %211, %216, %cst_107 {dimension_numbers = #tpu.dot_dimension_numbers<[1], [0], [0], [1], [0, 0, 1, 1], [], []>} : vector<8x32xbf16>, vector<32x32xbf16>, vector<8x32xf32> -> vector<8x32xf32>
      %c1_108 = arith.constant 1 : index
      %c0_109 = arith.constant 0 : index
      %218 = vector.load %arg5[%c1_108, %c0_109] : memref<4x32xf32, #tpu.memory_space<vmem>>, vector<1x32xf32>
      %219 = vector.broadcast %218 : vector<1x32xf32> to vector<8x32xf32>
      %220 = arith.addf %217, %219 : vector<8x32xf32>
      %c2_110 = arith.constant 2 : index
      %c0_111 = arith.constant 0 : index
      %c0_112 = arith.constant 0 : index
      %221 = vector.load %arg4[%c2_110, %c0_111, %c0_112] : memref<4x32x32xbf16, #tpu.memory_space<vmem>>, vector<1x32x32xbf16>
      %222 = vector.shape_cast %221 : vector<1x32x32xbf16> to vector<32x32xbf16>
      %cst_113 = arith.constant dense<0.000000e+00> : vector<8x32xf32>
      %223 = tpu.matmul %211, %222, %cst_113 {dimension_numbers = #tpu.dot_dimension_numbers<[1], [0], [0], [1], [0, 0, 1, 1], [], []>} : vector<8x32xbf16>, vector<32x32xbf16>, vector<8x32xf32> -> vector<8x32xf32>
      %c2_114 = arith.constant 2 : index
      %c0_115 = arith.constant 0 : index
      %224 = vector.load %arg5[%c2_114, %c0_115] : memref<4x32xf32, #tpu.memory_space<vmem>>, vector<1x32xf32>
      %225 = vector.broadcast %224 : vector<1x32xf32> to vector<8x32xf32>
      %226 = arith.addf %223, %225 : vector<8x32xf32>
      %227 = tpu.transpose %220, [1, 0] : vector<8x32xf32> -> vector<32x8xf32>
      %228 = vector.shape_cast %227 : vector<32x8xf32> to vector<4x8x8xf32>
      %229 = arith.truncf %228 : vector<4x8x8xf32> to vector<4x8x8xbf16>
      %230 = tpu.transpose %226, [1, 0] : vector<8x32xf32> -> vector<32x8xf32>
      %231 = vector.shape_cast %230 : vector<32x8xf32> to vector<4x8x8xf32>
      %232 = arith.truncf %231 : vector<4x8x8xf32> to vector<4x8x8xbf16>
      %c0_116 = arith.constant 0 : index
      %c0_117 = arith.constant 0 : index
      %c0_118 = arith.constant 0 : index
      %c0_119 = arith.constant 0 : index
      %233 = vector.load %arg15[%c0_116, %c0_117, %c0_118, %c0_119] : memref<2x4x8x8xbf16, #tpu.memory_space<vmem>>, vector<1x4x8x8xbf16>
      %234 = vector.shape_cast %233 : vector<1x4x8x8xbf16> to vector<4x8x8xbf16>
      %235 = vector.shape_cast %229 : vector<4x8x8xbf16> to vector<1x4x8x8xbf16>
      tpu.vector_store %arg15[%c0_116, %c0_117, %c0_118, %c0_119], %235 {strides = array<i32>} : memref<2x4x8x8xbf16, #tpu.memory_space<vmem>>, vector<1x4x8x8xbf16>,
      %c1_120 = arith.constant 1 : index
      %c0_121 = arith.constant 0 : index
      %c0_122 = arith.constant 0 : index
      %c0_123 = arith.constant 0 : index
      %236 = vector.load %arg15[%c1_120, %c0_121, %c0_122, %c0_123] : memref<2x4x8x8xbf16, #tpu.memory_space<vmem>>, vector<1x4x8x8xbf16>
      %237 = vector.shape_cast %236 : vector<1x4x8x8xbf16> to vector<4x8x8xbf16>
      %238 = vector.shape_cast %232 : vector<4x8x8xbf16> to vector<1x4x8x8xbf16>
      tpu.vector_store %arg15[%c1_120, %c0_121, %c0_122, %c0_123], %238 {strides = array<i32>} : memref<2x4x8x8xbf16, #tpu.memory_space<vmem>>, vector<1x4x8x8xbf16>,
      %c1_124 = arith.constant 1 : index
      %c0_125 = arith.constant 0 : index
      %c0_126 = arith.constant 0 : index
      %239 = vector.load %arg6[%c1_124, %c0_125, %c0_126] : memref<4x32x32xbf16, #tpu.memory_space<vmem>>, vector<1x32x32xbf16>
      %240 = vector.shape_cast %239 : vector<1x32x32xbf16> to vector<32x32xbf16>
      %cst_127 = arith.constant dense<0.000000e+00> : vector<8x32xf32>
      %241 = tpu.matmul %214, %240, %cst_127 {dimension_numbers = #tpu.dot_dimension_numbers<[1], [0], [0], [1], [0, 0, 1, 1], [], []>} : vector<8x32xbf16>, vector<32x32xbf16>, vector<8x32xf32> -> vector<8x32xf32>
      %c1_128 = arith.constant 1 : index
      %c0_129 = arith.constant 0 : index
      %242 = vector.load %arg7[%c1_128, %c0_129] : memref<4x32xf32, #tpu.memory_space<vmem>>, vector<1x32xf32>
      %243 = vector.broadcast %242 : vector<1x32xf32> to vector<8x32xf32>
      %244 = arith.addf %241, %243 : vector<8x32xf32>
      %c2_130 = arith.constant 2 : index
      %c0_131 = arith.constant 0 : index
      %c0_132 = arith.constant 0 : index
      %245 = vector.load %arg6[%c2_130, %c0_131, %c0_132] : memref<4x32x32xbf16, #tpu.memory_space<vmem>>, vector<1x32x32xbf16>
      %246 = vector.shape_cast %245 : vector<1x32x32xbf16> to vector<32x32xbf16>
      %cst_133 = arith.constant dense<0.000000e+00> : vector<8x32xf32>
      %247 = tpu.matmul %214, %246, %cst_133 {dimension_numbers = #tpu.dot_dimension_numbers<[1], [0], [0], [1], [0, 0, 1, 1], [], []>} : vector<8x32xbf16>, vector<32x32xbf16>, vector<8x32xf32> -> vector<8x32xf32>
      %c2_134 = arith.constant 2 : index
      %c0_135 = arith.constant 0 : index
      %248 = vector.load %arg7[%c2_134, %c0_135] : memref<4x32xf32, #tpu.memory_space<vmem>>, vector<1x32xf32>
      %249 = vector.broadcast %248 : vector<1x32xf32> to vector<8x32xf32>
      %250 = arith.addf %247, %249 : vector<8x32xf32>
      %251 = tpu.transpose %244, [1, 0] : vector<8x32xf32> -> vector<32x8xf32>
      %252 = vector.shape_cast %251 : vector<32x8xf32> to vector<4x8x8xf32>
      %253 = arith.truncf %252 : vector<4x8x8xf32> to vector<4x8x8xbf16>
      %254 = tpu.transpose %250, [1, 0] : vector<8x32xf32> -> vector<32x8xf32>
      %255 = vector.shape_cast %254 : vector<32x8xf32> to vector<4x8x8xf32>
      %256 = arith.truncf %255 : vector<4x8x8xf32> to vector<4x8x8xbf16>
      %c0_136 = arith.constant 0 : index
      %c0_137 = arith.constant 0 : index
      %c0_138 = arith.constant 0 : index
      %c0_139 = arith.constant 0 : index
      %257 = vector.load %arg16[%c0_136, %c0_137, %c0_138, %c0_139] : memref<2x4x8x8xbf16, #tpu.memory_space<vmem>>, vector<1x4x8x8xbf16>
      %258 = vector.shape_cast %257 : vector<1x4x8x8xbf16> to vector<4x8x8xbf16>
      %259 = vector.shape_cast %253 : vector<4x8x8xbf16> to vector<1x4x8x8xbf16>
      tpu.vector_store %arg16[%c0_136, %c0_137, %c0_138, %c0_139], %259 {strides = array<i32>} : memref<2x4x8x8xbf16, #tpu.memory_space<vmem>>, vector<1x4x8x8xbf16>,
      %c1_140 = arith.constant 1 : index
      %c0_141 = arith.constant 0 : index
      %c0_142 = arith.constant 0 : index
      %c0_143 = arith.constant 0 : index
      %260 = vector.load %arg16[%c1_140, %c0_141, %c0_142, %c0_143] : memref<2x4x8x8xbf16, #tpu.memory_space<vmem>>, vector<1x4x8x8xbf16>
      %261 = vector.shape_cast %260 : vector<1x4x8x8xbf16> to vector<4x8x8xbf16>
      %262 = vector.shape_cast %256 : vector<4x8x8xbf16> to vector<1x4x8x8xbf16>
      tpu.vector_store %arg16[%c1_140, %c0_141, %c0_142, %c0_143], %262 {strides = array<i32>} : memref<2x4x8x8xbf16, #tpu.memory_space<vmem>>, vector<1x4x8x8xbf16>,
    } else {
    }
    %c8_i32 = arith.constant 8 : i32
    %3 = arith.muli %arg1, %c8_i32 : i32
    %4 = tpu.assume_multiple %3, 8 : i32
    %c0 = arith.constant 0 : index
    %5 = arith.index_cast %4 : i32 to index
    %c0_1 = arith.constant 0 : index
    %6 = vector.load %arg2[%c0, %5, %c0_1] : memref<1x8x32xf32, #tpu.memory_space<vmem>>, vector<1x8x32xf32>
    %7 = vector.shape_cast %6 : vector<1x8x32xf32> to vector<8x32xf32>
    %8 = arith.truncf %7 : vector<8x32xf32> to vector<8x32xbf16>
    %c0_2 = arith.constant 0 : index
    %c0_3 = arith.constant 0 : index
    %c0_4 = arith.constant 0 : index
    %9 = vector.load %arg4[%c0_2, %c0_3, %c0_4] : memref<4x32x32xbf16, #tpu.memory_space<vmem>>, vector<1x32x32xbf16>
    %10 = vector.shape_cast %9 : vector<1x32x32xbf16> to vector<32x32xbf16>
    %cst = arith.constant dense<0.000000e+00> : vector<8x32xf32>
    %11 = tpu.matmul %8, %10, %cst {dimension_numbers = #tpu.dot_dimension_numbers<[1], [0], [0], [1], [0, 0, 1, 1], [], []>} : vector<8x32xbf16>, vector<32x32xbf16>, vector<8x32xf32> -> vector<8x32xf32>
    %c0_5 = arith.constant 0 : index
    %c0_6 = arith.constant 0 : index
    %12 = vector.load %arg5[%c0_5, %c0_6] : memref<4x32xf32, #tpu.memory_space<vmem>>, vector<1x32xf32>
    %13 = vector.broadcast %12 : vector<1x32xf32> to vector<8x32xf32>
    %14 = arith.addf %11, %13 : vector<8x32xf32>
    %15 = tpu.transpose %14, [1, 0] : vector<8x32xf32> -> vector<32x8xf32>
    %16 = vector.shape_cast %15 : vector<32x8xf32> to vector<4x8x8xf32>
    %17 = tpu.transpose %16, [0, 2, 1] : vector<4x8x8xf32> -> vector<4x8x8xf32>
    %18 = arith.truncf %17 : vector<4x8x8xf32> to vector<4x8x8xbf16>
    %c0_7 = arith.constant 0 : index
    %c0_8 = arith.constant 0 : index
    %c0_9 = arith.constant 0 : index
    %c0_10 = arith.constant 0 : index
    %19 = vector.load %arg15[%c0_7, %c0_8, %c0_9, %c0_10] : memref<2x4x8x8xbf16, #tpu.memory_space<vmem>>, vector<1x4x8x8xbf16>
    %20 = vector.shape_cast %19 : vector<1x4x8x8xbf16> to vector<4x8x8xbf16>
    %c1 = arith.constant 1 : index
    %c0_11 = arith.constant 0 : index
    %c0_12 = arith.constant 0 : index
    %c0_13 = arith.constant 0 : index
    %21 = vector.load %arg15[%c1, %c0_11, %c0_12, %c0_13] : memref<2x4x8x8xbf16, #tpu.memory_space<vmem>>, vector<1x4x8x8xbf16>
    %22 = vector.shape_cast %21 : vector<1x4x8x8xbf16> to vector<4x8x8xbf16>
    %cst_14 = arith.constant dense<0.000000e+00> : vector<4x8x8xf32>
    %23 = tpu.matmul %18, %20, %cst_14 {dimension_numbers = #tpu.dot_dimension_numbers<[2], [1], [1], [2], [0, 0, 0, 1, 1, 2], [0], [0]>} : vector<4x8x8xbf16>, vector<4x8x8xbf16>, vector<4x8x8xf32> -> vector<4x8x8xf32>
    %24 = tpu.iota {dimensions = array<i32: 0>} : vector<8x8xi32>
    %25 = vector.broadcast %4 : i32 to vector<8x8xi32>
    %26 = arith.addi %25, %24 : vector<8x8xi32>
    %27 = tpu.iota {dimensions = array<i32: 1>} : vector<8x8xi32>
    %28 = arith.cmpi sgt, %27, %26 : vector<8x8xi32>
    %cst_15 = arith.constant -1.000000e+09 : f32
    %cst_16 = arith.constant 0.000000e+00 : f32
    %29 = vector.broadcast %cst_15 : f32 to vector<8x8xf32>
    %30 = vector.broadcast %cst_16 : f32 to vector<8x8xf32>
    %31 = arith.select %28, %29, %30 : vector<8x8xi1>, vector<8x8xf32>
    %32 = vector.shape_cast %31 : vector<8x8xf32> to vector<1x8x8xf32>
    %33 = vector.broadcast %32 : vector<1x8x8xf32> to vector<4x8x8xf32>
    %34 = arith.addf %23, %33 : vector<4x8x8xf32>
    %cst_17 = arith.constant dense<0xFF800000> : vector<4x8xf32>
    %35 = vector.multi_reduction <maximumf>, %34, %cst_17 [2] : vector<4x8x8xf32> to vector<4x8xf32>
    %36 = vector.shape_cast %35 : vector<4x8xf32> to vector<4x8x1xf32>
    %37 = vector.broadcast %36 : vector<4x8x1xf32> to vector<4x8x8xf32>
    %38 = arith.subf %34, %37 : vector<4x8x8xf32>
    %39 = math.exp %38 : vector<4x8x8xf32>
    %cst_18 = arith.constant dense<0.000000e+00> : vector<4x8xf32>
    %40 = vector.multi_reduction <add>, %39, %cst_18 [2] : vector<4x8x8xf32> to vector<4x8xf32>
    %41 = vector.shape_cast %40 : vector<4x8xf32> to vector<4x8x1xf32>
    %42 = tpu.reciprocal %41 {approx = true} : vector<4x8x1xf32> -> vector<4x8x1xf32>
    %43 = vector.broadcast %42 : vector<4x8x1xf32> to vector<4x8x8xf32>
    %44 = arith.mulf %39, %43 : vector<4x8x8xf32>
    %45 = arith.truncf %44 : vector<4x8x8xf32> to vector<4x8x8xbf16>
    %cst_19 = arith.constant dense<0.000000e+00> : vector<4x8x8xf32>
    %46 = tpu.matmul %22, %45, %cst_19 {dimension_numbers = #tpu.dot_dimension_numbers<[2], [2], [1], [1], [0, 0, 0, 1, 1, 1], [0], [0]>} : vector<4x8x8xbf16>, vector<4x8x8xbf16>, vector<4x8x8xf32> -> vector<4x8x8xf32>
    %47 = vector.shape_cast %46 : vector<4x8x8xf32> to vector<32x8xf32>
    %48 = tpu.transpose %47, [1, 0] : vector<32x8xf32> -> vector<8x32xf32>
    %49 = arith.truncf %48 : vector<8x32xf32> to vector<8x32xbf16>
    %c3 = arith.constant 3 : index
    %c0_20 = arith.constant 0 : index
    %c0_21 = arith.constant 0 : index
    %50 = vector.load %arg4[%c3, %c0_20, %c0_21] : memref<4x32x32xbf16, #tpu.memory_space<vmem>>, vector<1x32x32xbf16>
    %51 = vector.shape_cast %50 : vector<1x32x32xbf16> to vector<32x32xbf16>
    %cst_22 = arith.constant dense<0.000000e+00> : vector<8x32xf32>
    %52 = tpu.matmul %49, %51, %cst_22 {dimension_numbers = #tpu.dot_dimension_numbers<[1], [0], [0], [1], [0, 0, 1, 1], [], []>} : vector<8x32xbf16>, vector<32x32xbf16>, vector<8x32xf32> -> vector<8x32xf32>
    %c3_23 = arith.constant 3 : index
    %c0_24 = arith.constant 0 : index
    %53 = vector.load %arg5[%c3_23, %c0_24] : memref<4x32xf32, #tpu.memory_space<vmem>>, vector<1x32xf32>
    %54 = vector.broadcast %53 : vector<1x32xf32> to vector<8x32xf32>
    %55 = arith.addf %52, %54 : vector<8x32xf32>
    %56 = arith.addf %7, %55 : vector<8x32xf32>
    %c0_25 = arith.constant 0 : index
    %c0_26 = arith.constant 0 : index
    %57 = vector.load %arg12[%c0_25, %c0_26] : memref<4x32xf32, #tpu.memory_space<vmem>>, vector<1x32xf32>
    %c0_27 = arith.constant 0 : index
    %c0_28 = arith.constant 0 : index
    %58 = vector.load %arg13[%c0_27, %c0_28] : memref<4x32xf32, #tpu.memory_space<vmem>>, vector<1x32xf32>
    %cst_29 = arith.constant dense<0.000000e+00> : vector<8xf32>
    %59 = vector.multi_reduction <add>, %56, %cst_29 [1] : vector<8x32xf32> to vector<8xf32>
    %60 = vector.shape_cast %59 : vector<8xf32> to vector<8x1xf32>
    %cst_30 = arith.constant 3.200000e+01 : f32
    %61 = vector.broadcast %cst_30 : f32 to vector<8x1xf32>
    %62 = arith.divf %60, %61 : vector<8x1xf32>
    %63 = vector.broadcast %62 : vector<8x1xf32> to vector<8x32xf32>
    %64 = arith.subf %56, %63 : vector<8x32xf32>
    %65 = arith.mulf %64, %64 : vector<8x32xf32>
    %cst_31 = arith.constant dense<0.000000e+00> : vector<8xf32>
    %66 = vector.multi_reduction <add>, %65, %cst_31 [1] : vector<8x32xf32> to vector<8xf32>
    %67 = vector.shape_cast %66 : vector<8xf32> to vector<8x1xf32>
    %cst_32 = arith.constant 3.200000e+01 : f32
    %68 = vector.broadcast %cst_32 : f32 to vector<8x1xf32>
    %69 = arith.divf %67, %68 : vector<8x1xf32>
    %70 = vector.broadcast %62 : vector<8x1xf32> to vector<8x32xf32>
    %71 = arith.subf %56, %70 : vector<8x32xf32>
    %cst_33 = arith.constant 9.99999974E-6 : f32
    %72 = vector.broadcast %cst_33 : f32 to vector<8x1xf32>
    %73 = arith.addf %69, %72 : vector<8x1xf32>
    %74 = math.rsqrt %73 : vector<8x1xf32>
    %75 = vector.broadcast %74 : vector<8x1xf32> to vector<8x32xf32>
    %76 = arith.mulf %71, %75 : vector<8x32xf32>
    %77 = vector.broadcast %57 : vector<1x32xf32> to vector<8x32xf32>
    %78 = arith.mulf %76, %77 : vector<8x32xf32>
    %79 = vector.broadcast %58 : vector<1x32xf32> to vector<8x32xf32>
    %80 = arith.addf %78, %79 : vector<8x32xf32>
    %81 = arith.truncf %80 : vector<8x32xf32> to vector<8x32xbf16>
    %c0_34 = arith.constant 0 : index
    %c0_35 = arith.constant 0 : index
    %c0_36 = arith.constant 0 : index
    %82 = vector.load %arg6[%c0_34, %c0_35, %c0_36] : memref<4x32x32xbf16, #tpu.memory_space<vmem>>, vector<1x32x32xbf16>
    %83 = vector.shape_cast %82 : vector<1x32x32xbf16> to vector<32x32xbf16>
    %cst_37 = arith.constant dense<0.000000e+00> : vector<8x32xf32>
    %84 = tpu.matmul %81, %83, %cst_37 {dimension_numbers = #tpu.dot_dimension_numbers<[1], [0], [0], [1], [0, 0, 1, 1], [], []>} : vector<8x32xbf16>, vector<32x32xbf16>, vector<8x32xf32> -> vector<8x32xf32>
    %c0_38 = arith.constant 0 : index
    %c0_39 = arith.constant 0 : index
    %85 = vector.load %arg7[%c0_38, %c0_39] : memref<4x32xf32, #tpu.memory_space<vmem>>, vector<1x32xf32>
    %86 = vector.broadcast %85 : vector<1x32xf32> to vector<8x32xf32>
    %87 = arith.addf %84, %86 : vector<8x32xf32>
    %88 = tpu.transpose %87, [1, 0] : vector<8x32xf32> -> vector<32x8xf32>
    %89 = vector.shape_cast %88 : vector<32x8xf32> to vector<4x8x8xf32>
    %90 = tpu.transpose %89, [0, 2, 1] : vector<4x8x8xf32> -> vector<4x8x8xf32>
    %91 = arith.truncf %90 : vector<4x8x8xf32> to vector<4x8x8xbf16>
    %c0_40 = arith.constant 0 : index
    %c0_41 = arith.constant 0 : index
    %c0_42 = arith.constant 0 : index
    %c0_43 = arith.constant 0 : index
    %92 = vector.load %arg16[%c0_40, %c0_41, %c0_42, %c0_43] : memref<2x4x8x8xbf16, #tpu.memory_space<vmem>>, vector<1x4x8x8xbf16>
    %93 = vector.shape_cast %92 : vector<1x4x8x8xbf16> to vector<4x8x8xbf16>
    %c1_44 = arith.constant 1 : index
    %c0_45 = arith.constant 0 : index
    %c0_46 = arith.constant 0 : index
    %c0_47 = arith.constant 0 : index
    %94 = vector.load %arg16[%c1_44, %c0_45, %c0_46, %c0_47] : memref<2x4x8x8xbf16, #tpu.memory_space<vmem>>, vector<1x4x8x8xbf16>
    %95 = vector.shape_cast %94 : vector<1x4x8x8xbf16> to vector<4x8x8xbf16>
    %cst_48 = arith.constant dense<0.000000e+00> : vector<4x8x8xf32>
    %96 = tpu.matmul %91, %93, %cst_48 {dimension_numbers = #tpu.dot_dimension_numbers<[2], [1], [1], [2], [0, 0, 0, 1, 1, 2], [0], [0]>} : vector<4x8x8xbf16>, vector<4x8x8xbf16>, vector<4x8x8xf32> -> vector<4x8x8xf32>
    %cst_49 = arith.constant dense<0xFF800000> : vector<4x8xf32>
    %97 = vector.multi_reduction <maximumf>, %96, %cst_49 [2] : vector<4x8x8xf32> to vector<4x8xf32>
    %98 = vector.shape_cast %97 : vector<4x8xf32> to vector<4x8x1xf32>
    %99 = vector.broadcast %98 : vector<4x8x1xf32> to vector<4x8x8xf32>
    %100 = arith.subf %96, %99 : vector<4x8x8xf32>
    %101 = math.exp %100 : vector<4x8x8xf32>
    %cst_50 = arith.constant dense<0.000000e+00> : vector<4x8xf32>
    %102 = vector.multi_reduction <add>, %101, %cst_50 [2] : vector<4x8x8xf32> to vector<4x8xf32>
    %103 = vector.shape_cast %102 : vector<4x8xf32> to vector<4x8x1xf32>
    %104 = tpu.reciprocal %103 {approx = true} : vector<4x8x1xf32> -> vector<4x8x1xf32>
    %105 = vector.broadcast %104 : vector<4x8x1xf32> to vector<4x8x8xf32>
    %106 = arith.mulf %101, %105 : vector<4x8x8xf32>
    %107 = arith.truncf %106 : vector<4x8x8xf32> to vector<4x8x8xbf16>
    %cst_51 = arith.constant dense<0.000000e+00> : vector<4x8x8xf32>
    %108 = tpu.matmul %95, %107, %cst_51 {dimension_numbers = #tpu.dot_dimension_numbers<[2], [2], [1], [1], [0, 0, 0, 1, 1, 1], [0], [0]>} : vector<4x8x8xbf16>, vector<4x8x8xbf16>, vector<4x8x8xf32> -> vector<4x8x8xf32>
    %109 = vector.shape_cast %108 : vector<4x8x8xf32> to vector<32x8xf32>
    %110 = tpu.transpose %109, [1, 0] : vector<32x8xf32> -> vector<8x32xf32>
    %111 = arith.truncf %110 : vector<8x32xf32> to vector<8x32xbf16>
    %c3_52 = arith.constant 3 : index
    %c0_53 = arith.constant 0 : index
    %c0_54 = arith.constant 0 : index
    %112 = vector.load %arg6[%c3_52, %c0_53, %c0_54] : memref<4x32x32xbf16, #tpu.memory_space<vmem>>, vector<1x32x32xbf16>
    %113 = vector.shape_cast %112 : vector<1x32x32xbf16> to vector<32x32xbf16>
    %cst_55 = arith.constant dense<0.000000e+00> : vector<8x32xf32>
    %114 = tpu.matmul %111, %113, %cst_55 {dimension_numbers = #tpu.dot_dimension_numbers<[1], [0], [0], [1], [0, 0, 1, 1], [], []>} : vector<8x32xbf16>, vector<32x32xbf16>, vector<8x32xf32> -> vector<8x32xf32>
    %c3_56 = arith.constant 3 : index
    %c0_57 = arith.constant 0 : index
    %115 = vector.load %arg7[%c3_56, %c0_57] : memref<4x32xf32, #tpu.memory_space<vmem>>, vector<1x32xf32>
    %116 = vector.broadcast %115 : vector<1x32xf32> to vector<8x32xf32>
    %117 = arith.addf %114, %116 : vector<8x32xf32>
    %118 = arith.addf %80, %117 : vector<8x32xf32>
    %c1_58 = arith.constant 1 : index
    %c0_59 = arith.constant 0 : index
    %119 = vector.load %arg12[%c1_58, %c0_59] : memref<4x32xf32, #tpu.memory_space<vmem>>, vector<1x32xf32>
    %c1_60 = arith.constant 1 : index
    %c0_61 = arith.constant 0 : index
    %120 = vector.load %arg13[%c1_60, %c0_61] : memref<4x32xf32, #tpu.memory_space<vmem>>, vector<1x32xf32>
    %cst_62 = arith.constant dense<0.000000e+00> : vector<8xf32>
    %121 = vector.multi_reduction <add>, %118, %cst_62 [1] : vector<8x32xf32> to vector<8xf32>
    %122 = vector.shape_cast %121 : vector<8xf32> to vector<8x1xf32>
    %cst_63 = arith.constant 3.200000e+01 : f32
    %123 = vector.broadcast %cst_63 : f32 to vector<8x1xf32>
    %124 = arith.divf %122, %123 : vector<8x1xf32>
    %125 = vector.broadcast %124 : vector<8x1xf32> to vector<8x32xf32>
    %126 = arith.subf %118, %125 : vector<8x32xf32>
    %127 = arith.mulf %126, %126 : vector<8x32xf32>
    %cst_64 = arith.constant dense<0.000000e+00> : vector<8xf32>
    %128 = vector.multi_reduction <add>, %127, %cst_64 [1] : vector<8x32xf32> to vector<8xf32>
    %129 = vector.shape_cast %128 : vector<8xf32> to vector<8x1xf32>
    %cst_65 = arith.constant 3.200000e+01 : f32
    %130 = vector.broadcast %cst_65 : f32 to vector<8x1xf32>
    %131 = arith.divf %129, %130 : vector<8x1xf32>
    %132 = vector.broadcast %124 : vector<8x1xf32> to vector<8x32xf32>
    %133 = arith.subf %118, %132 : vector<8x32xf32>
    %cst_66 = arith.constant 9.99999974E-6 : f32
    %134 = vector.broadcast %cst_66 : f32 to vector<8x1xf32>
    %135 = arith.addf %131, %134 : vector<8x1xf32>
    %136 = math.rsqrt %135 : vector<8x1xf32>
    %137 = vector.broadcast %136 : vector<8x1xf32> to vector<8x32xf32>
    %138 = arith.mulf %133, %137 : vector<8x32xf32>
    %139 = vector.broadcast %119 : vector<1x32xf32> to vector<8x32xf32>
    %140 = arith.mulf %138, %139 : vector<8x32xf32>
    %141 = vector.broadcast %120 : vector<1x32xf32> to vector<8x32xf32>
    %142 = arith.addf %140, %141 : vector<8x32xf32>
    %143 = arith.truncf %142 : vector<8x32xf32> to vector<8x32xbf16>
    %c0_67 = arith.constant 0 : index
    %c0_68 = arith.constant 0 : index
    %144 = vector.load %arg8[%c0_67, %c0_68] : memref<32x128xbf16, #tpu.memory_space<vmem>>, vector<32x128xbf16>
    %cst_69 = arith.constant dense<0.000000e+00> : vector<8x128xf32>
    %145 = tpu.matmul %143, %144, %cst_69 {dimension_numbers = #tpu.dot_dimension_numbers<[1], [0], [0], [1], [0, 0, 1, 1], [], []>} : vector<8x32xbf16>, vector<32x128xbf16>, vector<8x128xf32> -> vector<8x128xf32>
    %c0_70 = arith.constant 0 : index
    %c0_71 = arith.constant 0 : index
    %146 = vector.load %arg9[%c0_70, %c0_71] : memref<1x128xf32, #tpu.memory_space<vmem>>, vector<1x128xf32>
    %147 = vector.broadcast %146 : vector<1x128xf32> to vector<8x128xf32>
    %148 = arith.addf %145, %147 : vector<8x128xf32>
    %cst_72 = arith.constant 0.000000e+00 : f32
    %149 = vector.broadcast %cst_72 : f32 to vector<8x128xf32>
    %150 = arith.maximumf %148, %149 : vector<8x128xf32>
    %151 = arith.truncf %150 : vector<8x128xf32> to vector<8x128xbf16>
    %c0_73 = arith.constant 0 : index
    %c0_74 = arith.constant 0 : index
    %152 = vector.load %arg10[%c0_73, %c0_74] : memref<128x32xbf16, #tpu.memory_space<vmem>>, vector<128x32xbf16>
    %cst_75 = arith.constant dense<0.000000e+00> : vector<8x32xf32>
    %153 = tpu.matmul %151, %152, %cst_75 {dimension_numbers = #tpu.dot_dimension_numbers<[1], [0], [0], [1], [0, 0, 1, 1], [], []>} : vector<8x128xbf16>, vector<128x32xbf16>, vector<8x32xf32> -> vector<8x32xf32>
    %c0_76 = arith.constant 0 : index
    %c0_77 = arith.constant 0 : index
    %154 = vector.load %arg11[%c0_76, %c0_77] : memref<1x32xf32, #tpu.memory_space<vmem>>, vector<1x32xf32>
    %155 = vector.broadcast %154 : vector<1x32xf32> to vector<8x32xf32>
    %156 = arith.addf %153, %155 : vector<8x32xf32>
    %157 = arith.addf %142, %156 : vector<8x32xf32>
    %c2 = arith.constant 2 : index
    %c0_78 = arith.constant 0 : index
    %158 = vector.load %arg12[%c2, %c0_78] : memref<4x32xf32, #tpu.memory_space<vmem>>, vector<1x32xf32>
    %c2_79 = arith.constant 2 : index
    %c0_80 = arith.constant 0 : index
    %159 = vector.load %arg13[%c2_79, %c0_80] : memref<4x32xf32, #tpu.memory_space<vmem>>, vector<1x32xf32>
    %cst_81 = arith.constant dense<0.000000e+00> : vector<8xf32>
    %160 = vector.multi_reduction <add>, %157, %cst_81 [1] : vector<8x32xf32> to vector<8xf32>
    %161 = vector.shape_cast %160 : vector<8xf32> to vector<8x1xf32>
    %cst_82 = arith.constant 3.200000e+01 : f32
    %162 = vector.broadcast %cst_82 : f32 to vector<8x1xf32>
    %163 = arith.divf %161, %162 : vector<8x1xf32>
    %164 = vector.broadcast %163 : vector<8x1xf32> to vector<8x32xf32>
    %165 = arith.subf %157, %164 : vector<8x32xf32>
    %166 = arith.mulf %165, %165 : vector<8x32xf32>
    %cst_83 = arith.constant dense<0.000000e+00> : vector<8xf32>
    %167 = vector.multi_reduction <add>, %166, %cst_83 [1] : vector<8x32xf32> to vector<8xf32>
    %168 = vector.shape_cast %167 : vector<8xf32> to vector<8x1xf32>
    %cst_84 = arith.constant 3.200000e+01 : f32
    %169 = vector.broadcast %cst_84 : f32 to vector<8x1xf32>
    %170 = arith.divf %168, %169 : vector<8x1xf32>
    %171 = vector.broadcast %163 : vector<8x1xf32> to vector<8x32xf32>
    %172 = arith.subf %157, %171 : vector<8x32xf32>
    %cst_85 = arith.constant 9.99999974E-6 : f32
    %173 = vector.broadcast %cst_85 : f32 to vector<8x1xf32>
    %174 = arith.addf %170, %173 : vector<8x1xf32>
    %175 = math.rsqrt %174 : vector<8x1xf32>
    %176 = vector.broadcast %175 : vector<8x1xf32> to vector<8x32xf32>
    %177 = arith.mulf %172, %176 : vector<8x32xf32>
    %178 = vector.broadcast %158 : vector<1x32xf32> to vector<8x32xf32>
    %179 = arith.mulf %177, %178 : vector<8x32xf32>
    %180 = vector.broadcast %159 : vector<1x32xf32> to vector<8x32xf32>
    %181 = arith.addf %179, %180 : vector<8x32xf32>
    %c3_86 = arith.constant 3 : index
    %c0_87 = arith.constant 0 : index
    %182 = vector.load %arg12[%c3_86, %c0_87] : memref<4x32xf32, #tpu.memory_space<vmem>>, vector<1x32xf32>
    %c3_88 = arith.constant 3 : index
    %c0_89 = arith.constant 0 : index
    %183 = vector.load %arg13[%c3_88, %c0_89] : memref<4x32xf32, #tpu.memory_space<vmem>>, vector<1x32xf32>
    %cst_90 = arith.constant dense<0.000000e+00> : vector<8xf32>
    %184 = vector.multi_reduction <add>, %181, %cst_90 [1] : vector<8x32xf32> to vector<8xf32>
    %185 = vector.shape_cast %184 : vector<8xf32> to vector<8x1xf32>
    %cst_91 = arith.constant 3.200000e+01 : f32
    %186 = vector.broadcast %cst_91 : f32 to vector<8x1xf32>
    %187 = arith.divf %185, %186 : vector<8x1xf32>
    %188 = vector.broadcast %187 : vector<8x1xf32> to vector<8x32xf32>
    %189 = arith.subf %181, %188 : vector<8x32xf32>
    %190 = arith.mulf %189, %189 : vector<8x32xf32>
    %cst_92 = arith.constant dense<0.000000e+00> : vector<8xf32>
    %191 = vector.multi_reduction <add>, %190, %cst_92 [1] : vector<8x32xf32> to vector<8xf32>
    %192 = vector.shape_cast %191 : vector<8xf32> to vector<8x1xf32>
    %cst_93 = arith.constant 3.200000e+01 : f32
    %193 = vector.broadcast %cst_93 : f32 to vector<8x1xf32>
    %194 = arith.divf %192, %193 : vector<8x1xf32>
    %195 = vector.broadcast %187 : vector<8x1xf32> to vector<8x32xf32>
    %196 = arith.subf %181, %195 : vector<8x32xf32>
    %cst_94 = arith.constant 9.99999974E-6 : f32
    %197 = vector.broadcast %cst_94 : f32 to vector<8x1xf32>
    %198 = arith.addf %194, %197 : vector<8x1xf32>
    %199 = math.rsqrt %198 : vector<8x1xf32>
    %200 = vector.broadcast %199 : vector<8x1xf32> to vector<8x32xf32>
    %201 = arith.mulf %196, %200 : vector<8x32xf32>
    %202 = vector.broadcast %182 : vector<1x32xf32> to vector<8x32xf32>
    %203 = arith.mulf %201, %202 : vector<8x32xf32>
    %204 = vector.broadcast %183 : vector<1x32xf32> to vector<8x32xf32>
    %205 = arith.addf %203, %204 : vector<8x32xf32>
    %c0_95 = arith.constant 0 : index
    %c0_96 = arith.constant 0 : index
    %c0_97 = arith.constant 0 : index
    %206 = vector.load %arg14[%c0_95, %c0_96, %c0_97] : memref<1x8x32xf32, #tpu.memory_space<vmem>>, vector<1x8x32xf32>
    %207 = vector.shape_cast %206 : vector<1x8x32xf32> to vector<8x32xf32>
    %208 = vector.shape_cast %205 : vector<8x32xf32> to vector<1x8x32xf32>
    tpu.vector_store %arg14[%c0_95, %c0_96, %c0_97], %208 {strides = array<i32>} : memref<1x8x32xf32, #tpu.memory_space<vmem>>, vector<1x8x32xf32>,
    return
  }
  func.func @transform_0(%arg0: i32, %arg1: i32) -> (i32, i32, i32) {
    %c0_i32 = arith.constant 0 : i32
    %c0_i32_0 = arith.constant 0 : i32
    %c0_i32_1 = arith.constant 0 : i32
    return %arg0, %c0_i32, %c0_i32_0 : i32, i32, i32
  }
  func.func @transform_1(%arg0: i32, %arg1: i32) -> (i32, i32, i32) {
    %c0_i32 = arith.constant 0 : i32
    %c0_i32_0 = arith.constant 0 : i32
    %c0_i32_1 = arith.constant 0 : i32
    return %arg0, %c0_i32, %c0_i32_0 : i32, i32, i32
  }
  func.func @transform_2(%arg0: i32, %arg1: i32) -> (i32, i32, i32) {
    %c0_i32 = arith.constant 0 : i32
    %c0_i32_0 = arith.constant 0 : i32
    %c0_i32_1 = arith.constant 0 : i32
    %c0_i32_2 = arith.constant 0 : i32
    return %c0_i32, %c0_i32_0, %c0_i32_1 : i32, i32, i32
  }
  func.func @transform_3(%arg0: i32, %arg1: i32) -> (i32, i32) {
    %c0_i32 = arith.constant 0 : i32
    %c0_i32_0 = arith.constant 0 : i32
    %c0_i32_1 = arith.constant 0 : i32
    return %c0_i32, %c0_i32_0 : i32, i32
  }
  func.func @transform_4(%arg0: i32, %arg1: i32) -> (i32, i32, i32) {
    %c0_i32 = arith.constant 0 : i32
    %c0_i32_0 = arith.constant 0 : i32
    %c0_i32_1 = arith.constant 0 : i32
    %c0_i32_2 = arith.constant 0 : i32
    return %c0_i32, %c0_i32_0, %c0_i32_1 : i32, i32, i32
  }
  func.func @transform_5(%arg0: i32, %arg1: i32) -> (i32, i32) {
    %c0_i32 = arith.constant 0 : i32
    %c0_i32_0 = arith.constant 0 : i32
    %c0_i32_1 = arith.constant 0 : i32
    return %c0_i32, %c0_i32_0 : i32, i32
  }
  func.func @transform_6(%arg0: i32, %arg1: i32) -> (i32, i32) {
    %c0_i32 = arith.constant 0 : i32
    %c0_i32_0 = arith.constant 0 : i32
    %c0_i32_1 = arith.constant 0 : i32
    return %c0_i32, %c0_i32_0 : i32, i32
  }
  func.func @transform_7(%arg0: i32, %arg1: i32) -> (i32, i32) {
    %c0_i32 = arith.constant 0 : i32
    %c0_i32_0 = arith.constant 0 : i32
    %c0_i32_1 = arith.constant 0 : i32
    return %c0_i32, %c0_i32_0 : i32, i32
  }
  func.func @transform_8(%arg0: i32, %arg1: i32) -> (i32, i32) {
    %c0_i32 = arith.constant 0 : i32
    %c0_i32_0 = arith.constant 0 : i32
    %c0_i32_1 = arith.constant 0 : i32
    return %c0_i32, %c0_i32_0 : i32, i32
  }
  func.func @transform_9(%arg0: i32, %arg1: i32) -> (i32, i32) {
    %c0_i32 = arith.constant 0 : i32
    %c0_i32_0 = arith.constant 0 : i32
    %c0_i32_1 = arith.constant 0 : i32
    return %c0_i32, %c0_i32_0 : i32, i32
  }
  func.func @transform_10(%arg0: i32, %arg1: i32) -> (i32, i32) {
    %c0_i32 = arith.constant 0 : i32
    %c0_i32_0 = arith.constant 0 : i32
    %c0_i32_1 = arith.constant 0 : i32
    return %c0_i32, %c0_i32_0 : i32, i32
  }
  func.func @transform_11(%arg0: i32, %arg1: i32) -> (i32, i32) {
    %c0_i32 = arith.constant 0 : i32
    %c0_i32_0 = arith.constant 0 : i32
    %c0_i32_1 = arith.constant 0 : i32
    return %c0_i32, %c0_i32_0 : i32, i32
  }
  func.func @transform_12(%arg0: i32, %arg1: i32) -> (i32, i32, i32) {
    %c0_i32 = arith.constant 0 : i32
    %c0_i32_0 = arith.constant 0 : i32
    return %arg0, %arg1, %c0_i32 : i32, i32, i32
  }
}

</mosaic_0001>

<llo_original>
// kernel: decoder_forward.1
$region0: #{decoder_forward.1}
  #allocation0 [shape = 'u32[]', space=smem, size = 0x4, offset = 0x4, fixed_abs, tag = 'smem constant byte address 0x4 - core index']
  #allocation1 [shape = 'u32[144,128]{1,0:T(1,128)}', space=vmem, size = 0x12000, scoped, tag = 'internal scratch']
  #allocation2 [shape = 'bf16[2,4,8,8]{3,2,1,0:T(8,128)(2,1)}', space=vmem, size = 0x4000, scoped, tag = 'scratch operand']
  #allocation3 [shape = 'bf16[2,4,8,8]{3,2,1,0:T(8,128)(2,1)}', space=vmem, size = 0x4000, scoped, tag = 'scratch operand']
  %s0 = inlined_call_operand.hbm [shape: f32[2,8,32], index: 0, kind: input, shape index: {}]
  %s1 = inlined_call_operand.hbm [shape: f32[2,8,32], index: 1, kind: input, shape index: {}]
  %s2 = inlined_call_operand.hbm [shape: bf16[4,32,32], index: 2, kind: input, shape index: {}]
  %s3 = inlined_call_operand.hbm [shape: f32[4,32], index: 3, kind: input, shape index: {}]
  %s4 = inlined_call_operand.hbm [shape: bf16[4,32,32], index: 4, kind: input, shape index: {}]
  %s5 = inlined_call_operand.hbm [shape: f32[4,32], index: 5, kind: input, shape index: {}]
  %s6 = inlined_call_operand.hbm [shape: bf16[32,128], index: 6, kind: input, shape index: {}]
  %s7 = inlined_call_operand.hbm [shape: f32[1,128], index: 7, kind: input, shape index: {}]
  %s8 = inlined_call_operand.hbm [shape: bf16[128,32], index: 8, kind: input, shape index: {}]
  %s9 = inlined_call_operand.hbm [shape: f32[1,32], index: 9, kind: input, shape index: {}]
  %s10 = inlined_call_operand.hbm [shape: f32[4,32], index: 10, kind: input, shape index: {}]
  %s11 = inlined_call_operand.hbm [shape: f32[4,32], index: 11, kind: input, shape index: {}]
  %s12 = inlined_call_operand.hbm [shape: f32[2,8,32], index: 12, kind: output, shape index: {}]
  %s13 = sld [smem:[#allocation0]]
  $region133: #{decoder_forward.1} parent=0
    _
  %s15 = ssub.s32 1, %s13
  %s16 = scalar_select 0, %s15, %s13
  $region1: #{decoder_forward.1} parent=0
    #allocation4 [shape = 'u8[8192]{0}', space=vmem, size = 0x2000, scoped, tag = 'input window, operand 0']
    #allocation5 [shape = 's32[2]{0}', space=sflag, size = 0x8, scoped, tag = 'scoped memory for decoder_forward.1']
    #allocation6 [shape = 's32[2]{0}', space=sflag, size = 0x8, scoped, tag = 'scoped memory for decoder_forward.1']
    #allocation7 [shape = 'u8[8192]{0}', space=vmem, size = 0x2000, scoped, tag = 'input window, operand 1']
    #allocation8 [shape = 's32[2]{0}', space=sflag, size = 0x8, scoped, tag = 'scoped memory for decoder_forward.1']
    #allocation9 [shape = 'u8[32768]{0}', space=vmem, size = 0x8000, scoped, tag = 'input window, operand 2, single buffered']
    #allocation10 [shape = 'u8[2048]{0}', space=vmem, size = 0x800, scoped, tag = 'input window, operand 3, single buffered']
    #allocation11 [shape = 's32[1]{0}', space=sflag, size = 0x4, scoped, tag = 'scoped memory for decoder_forward.1']
    #allocation12 [shape = 'u8[32768]{0}', space=vmem, size = 0x8000, scoped, tag = 'input window, operand 4, single buffered']
    #allocation13 [shape = 'u8[2048]{0}', space=vmem, size = 0x800, scoped, tag = 'input window, operand 5, single buffered']
    #allocation14 [shape = 's32[1]{0}', space=sflag, size = 0x4, scoped, tag = 'scoped memory for decoder_forward.1']
    #allocation15 [shape = 'u8[8192]{0}', space=vmem, size = 0x2000, scoped, tag = 'input window, operand 6, single buffered']
    #allocation16 [shape = 'u8[512]{0}', space=vmem, size = 0x400, scoped, tag = 'input window, operand 7, single buffered']
    #allocation17 [shape = 's32[1]{0}', space=sflag, size = 0x4, scoped, tag = 'scoped memory for decoder_forward.1']
    #allocation18 [shape = 'u8[32768]{0}', space=vmem, size = 0x8000, scoped, tag = 'input window, operand 8, single buffered']
    #allocation19 [shape = 'u8[512]{0}', space=vmem, size = 0x400, scoped, tag = 'input window, operand 9, single buffered']
    #allocation20 [shape = 's32[1]{0}', space=sflag, size = 0x4, scoped, tag = 'scoped memory for decoder_forward.1']
    #allocation21 [shape = 'u8[2048]{0}', space=vmem, size = 0x800, scoped, tag = 'input window, operand 10, single buffered']
    #allocation22 [shape = 'u8[2048]{0}', space=vmem, size = 0x800, scoped, tag = 'input window, operand 11, single buffered']
    #allocation23 [shape = 's32[1]{0}', space=sflag, size = 0x4, scoped, tag = 'scoped memory for decoder_forward.1']
    #allocation24 [shape = 'u8[8192]{0}', space=vmem, size = 0x2000, scoped, tag = 'output window, operand 0']
    %17 = vsyncpa [#allocation5], 0
    %s18 = scalar_lea.sflag [#allocation5], 1
    %19 = vsyncpa %s18, 0
    %20 = vsyncpa [#allocation8], 0
    %s21 = scalar_lea.sflag [#allocation8], 1
    %22 = vsyncpa %s21, 0
    %23 = vsyncpa [#allocation11], 0
    %24 = vsyncpa [#allocation14], 0
    %25 = vsyncpa [#allocation17], 0
    %26 = vsyncpa [#allocation20], 0
    %27 = vsyncpa [#allocation23], 0
    %28 = vsyncpa [#allocation6], 0
    %s29 = scalar_lea.sflag [#allocation6], 1
    %30 = vsyncpa %s29, 0
    loop: start=0, step=1, limit=4
    $region2: #{decoder_forward.1} parent=1 // loop_pre_header
      _
    $region3: #{decoder_forward.1} parent=1 // loop_header
      %s32 = sphi 0, %s36
      %p33 = scmp.ge.s32.totalorder %s32, 4
      %s39 = sphi 0, %s51
      %s40 = sphi 0, %s47
      %s41 = sphi 0, %s39
      %s42 = sphi 0, %s40
      %s43 = sphi 0, %s41
      %s44 = sphi 0, %s42
      %s54 = sphi 0, %s56
      %s57 = sphi 0, %s54
      %s58 = sphi 0, %s57
      %s74 = sphi 0, %s58
      %s80 = sphi 0, %s82
      %s83 = sphi 0, %s80
      %s84 = sphi 0, %s83
      %s100 = sphi 0, %s84
      %s104 = sphi 0, %s104
      %s106 = sphi 0, %s104
      %s107 = sphi 0, %s106
      %s121 = sphi 0, %s107
      %s125 = sphi 0, %s125
      %s127 = sphi 0, %s125
      %s128 = sphi 0, %s127
      %s142 = sphi 0, %s128
      %s146 = sphi 0, %s146
      %s148 = sphi 0, %s146
      %s149 = sphi 0, %s148
      %s163 = sphi 0, %s149
      %s167 = sphi 0, %s167
      %s169 = sphi 0, %s167
      %s170 = sphi 0, %s169
      %s184 = sphi 0, %s170
      %s188 = sphi 0, %s188
      %s190 = sphi 0, %s188
      %s191 = sphi 0, %s190
      %s205 = sphi 0, %s191
      %s209 = sphi 0, %s209
      %s211 = sphi 0, %s209
      %s212 = sphi 0, %s211
      %s226 = sphi 0, %s212
      %s230 = sphi 0, %s230
      %s232 = sphi 0, %s230
      %s233 = sphi 0, %s232
      %s247 = sphi 0, %s233
      %s251 = sphi 0, %s251
      %s253 = sphi 0, %s251
      %s254 = sphi 0, %s253
      %s268 = sphi 0, %s254
      %s272 = sphi 0, %s272
      %s274 = sphi 0, %s272
      %s275 = sphi 0, %s274
      %s289 = sphi 0, %s275
      %s293 = sphi 0, %s293
      %s295 = sphi 0, %s293
      %s296 = sphi 0, %s295
      %s310 = sphi 0, %s296
      %s318 = sphi 0, %s320
      %s321 = sphi 0, %s318
      %s322 = sphi 0, %s321
      %s338 = sphi 0, %s322
    $region4: #{decoder_forward.1} parent=1 // loop_header_branch
      %35 = sbr.rel (%p33) target = $region8
    $region5: #{decoder_forward.1} parent=1 // loop_body
      %s37 = ssub.s32 %s32, 1
      %s38 = ssub.s32 %s32, 2
      %s45 = sadd.s32 1, %s40
      %p46 = scmp.ge.s32.totalorder %s45, 1
      %s47 = scalar_select %p46, 0, %s45
      %s48 = sadd.s32 1, %s39
      %s49 = scalar_select %p46, %s48, %s39
      %p50 = scmp.ge.s32.totalorder %s49, 2
      %s51 = scalar_select %p50, 0, %s49
      %s52 = ssub.s32 %s39, %s51
      %p53 = scmp.eq.s32.totalorder %s52, 0
      %s55 = sadd.s32 %s54, 1
      %s56 = scalar_select %p53, %s54, %s55
      %p59 = pneg %p53
      %p60 = scmp.eq.s32.totalorder %s32, 1
      %p61 = por %p59, %p60
      %p62 = scmp.ne.s32.totalorder %s54, %s57
      %p63 = scmp.eq.s32.totalorder %s32, 0
      %p64 = por %p62, %p63
      %p65 = scmp.ne.s32.totalorder %s54, %s57
      %p66 = scmp.eq.s32.totalorder %s37, 1
      %p67 = por %p65, %p66
      %p68 = scmp.ne.s32.totalorder %s57, %s58
      %p69 = scmp.eq.s32.totalorder %s37, 0
      %p70 = por %p68, %p69
      %p71 = scmp.ne.s32.totalorder %s57, %s58
      %p72 = scmp.eq.s32.totalorder %s38, 1
      %p73 = por %p71, %p72
      %p75 = scmp.ne.s32.totalorder %s58, %s74
      %p76 = scmp.eq.s32.totalorder %s38, 0
      %p77 = por %p75, %p76
      %s78 = ssub.s32 %s39, %s51
      %p79 = scmp.eq.s32.totalorder %s78, 0
      %s81 = sadd.s32 %s80, 1
      %s82 = scalar_select %p79, %s80, %s81
      %p85 = pneg %p79
      %p86 = scmp.eq.s32.totalorder %s32, 1
      %p87 = por %p85, %p86
      %p88 = scmp.ne.s32.totalorder %s80, %s83
      %p89 = scmp.eq.s32.totalorder %s32, 0
      %p90 = por %p88, %p89
      %p91 = scmp.ne.s32.totalorder %s80, %s83
      %p92 = scmp.eq.s32.totalorder %s37, 1
      %p93 = por %p91, %p92
      %p94 = scmp.ne.s32.totalorder %s83, %s84
      %p95 = scmp.eq.s32.totalorder %s37, 0
      %p96 = por %p94, %p95
      %p97 = scmp.ne.s32.totalorder %s83, %s84
      %p98 = scmp.eq.s32.totalorder %s38, 1
      %p99 = por %p97, %p98
      %p101 = scmp.ne.s32.totalorder %s84, %s100
      %p102 = scmp.eq.s32.totalorder %s38, 0
      %p103 = por %p101, %p102
      %s105 = sadd.s32 %s104, 1
      %p108 = scmp.eq.s32.totalorder %s32, 1
      %p109 = scmp.ne.s32.totalorder %s104, %s106
      %p110 = scmp.eq.s32.totalorder %s32, 0
      %p111 = por %p109, %p110
      %p112 = scmp.ne.s32.totalorder %s104, %s106
      %p113 = scmp.eq.s32.totalorder %s37, 1
      %p114 = por %p112, %p113
      %p115 = scmp.ne.s32.totalorder %s106, %s107
      %p116 = scmp.eq.s32.totalorder %s37, 0
      %p117 = por %p115, %p116
      %p118 = scmp.ne.s32.totalorder %s106, %s107
      %p119 = scmp.eq.s32.totalorder %s38, 1
      %p120 = por %p118, %p119
      %p122 = scmp.ne.s32.totalorder %s107, %s121
      %p123 = scmp.eq.s32.totalorder %s38, 0
      %p124 = por %p122, %p123
      %s126 = sadd.s32 %s125, 1
      %p129 = scmp.eq.s32.totalorder %s32, 1
      %p130 = scmp.ne.s32.totalorder %s125, %s127
      %p131 = scmp.eq.s32.totalorder %s32, 0
      %p132 = por %p130, %p131
      %p133 = scmp.ne.s32.totalorder %s125, %s127
      %p134 = scmp.eq.s32.totalorder %s37, 1
      %p135 = por %p133, %p134
      %p136 = scmp.ne.s32.totalorder %s127, %s128
      %p137 = scmp.eq.s32.totalorder %s37, 0
      %p138 = por %p136, %p137
      %p139 = scmp.ne.s32.totalorder %s127, %s128
      %p140 = scmp.eq.s32.totalorder %s38, 1
      %p141 = por %p139, %p140
      %p143 = scmp.ne.s32.totalorder %s128, %s142
      %p144 = scmp.eq.s32.totalorder %s38, 0
      %p145 = por %p143, %p144
      %s147 = sadd.s32 %s146, 1
      %p150 = scmp.eq.s32.totalorder %s32, 1
      %p151 = scmp.ne.s32.totalorder %s146, %s148
      %p152 = scmp.eq.s32.totalorder %s32, 0
      %p153 = por %p151, %p152
      %p154 = scmp.ne.s32.totalorder %s146, %s148
      %p155 = scmp.eq.s32.totalorder %s37, 1
      %p156 = por %p154, %p155
      %p157 = scmp.ne.s32.totalorder %s148, %s149
      %p158 = scmp.eq.s32.totalorder %s37, 0
      %p159 = por %p157, %p158
      %p160 = scmp.ne.s32.totalorder %s148, %s149
      %p161 = scmp.eq.s32.totalorder %s38, 1
      %p162 = por %p160, %p161
      %p164 = scmp.ne.s32.totalorder %s149, %s163
      %p165 = scmp.eq.s32.totalorder %s38, 0
      %p166 = por %p164, %p165
      %s168 = sadd.s32 %s167, 1
      %p171 = scmp.eq.s32.totalorder %s32, 1
      %p172 = scmp.ne.s32.totalorder %s167, %s169
      %p173 = scmp.eq.s32.totalorder %s32, 0
      %p174 = por %p172, %p173
      %p175 = scmp.ne.s32.totalorder %s167, %s169
      %p176 = scmp.eq.s32.totalorder %s37, 1
      %p177 = por %p175, %p176
      %p178 = scmp.ne.s32.totalorder %s169, %s170
      %p179 = scmp.eq.s32.totalorder %s37, 0
      %p180 = por %p178, %p179
      %p181 = scmp.ne.s32.totalorder %s169, %s170
      %p182 = scmp.eq.s32.totalorder %s38, 1
      %p183 = por %p181, %p182
      %p185 = scmp.ne.s32.totalorder %s170, %s184
      %p186 = scmp.eq.s32.totalorder %s38, 0
      %p187 = por %p185, %p186
      %s189 = sadd.s32 %s188, 1
      %p192 = scmp.eq.s32.totalorder %s32, 1
      %p193 = scmp.ne.s32.totalorder %s188, %s190
      %p194 = scmp.eq.s32.totalorder %s32, 0
      %p195 = por %p193, %p194
      %p196 = scmp.ne.s32.totalorder %s188, %s190
      %p197 = scmp.eq.s32.totalorder %s37, 1
      %p198 = por %p196, %p197
      %p199 = scmp.ne.s32.totalorder %s190, %s191
      %p200 = scmp.eq.s32.totalorder %s37, 0
      %p201 = por %p199, %p200
      %p202 = scmp.ne.s32.totalorder %s190, %s191
      %p203 = scmp.eq.s32.totalorder %s38, 1
      %p204 = por %p202, %p203
      %p206 = scmp.ne.s32.totalorder %s191, %s205
      %p207 = scmp.eq.s32.totalorder %s38, 0
      %p208 = por %p206, %p207
      %s210 = sadd.s32 %s209, 1
      %p213 = scmp.eq.s32.totalorder %s32, 1
      %p214 = scmp.ne.s32.totalorder %s209, %s211
      %p215 = scmp.eq.s32.totalorder %s32, 0
      %p216 = por %p214, %p215
      %p217 = scmp.ne.s32.totalorder %s209, %s211
      %p218 = scmp.eq.s32.totalorder %s37, 1
      %p219 = por %p217, %p218
      %p220 = scmp.ne.s32.totalorder %s211, %s212
      %p221 = scmp.eq.s32.totalorder %s37, 0
      %p222 = por %p220, %p221
      %p223 = scmp.ne.s32.totalorder %s211, %s212
      %p224 = scmp.eq.s32.totalorder %s38, 1
      %p225 = por %p223, %p224
      %p227 = scmp.ne.s32.totalorder %s212, %s226
      %p228 = scmp.eq.s32.totalorder %s38, 0
      %p229 = por %p227, %p228
      %s231 = sadd.s32 %s230, 1
      %p234 = scmp.eq.s32.totalorder %s32, 1
      %p235 = scmp.ne.s32.totalorder %s230, %s232
      %p236 = scmp.eq.s32.totalorder %s32, 0
      %p237 = por %p235, %p236
      %p238 = scmp.ne.s32.totalorder %s230, %s232
      %p239 = scmp.eq.s32.totalorder %s37, 1
      %p240 = por %p238, %p239
      %p241 = scmp.ne.s32.totalorder %s232, %s233
      %p242 = scmp.eq.s32.totalorder %s37, 0
      %p243 = por %p241, %p242
      %p244 = scmp.ne.s32.totalorder %s232, %s233
      %p245 = scmp.eq.s32.totalorder %s38, 1
      %p246 = por %p244, %p245
      %p248 = scmp.ne.s32.totalorder %s233, %s247
      %p249 = scmp.eq.s32.totalorder %s38, 0
      %p250 = por %p248, %p249
      %s252 = sadd.s32 %s251, 1
      %p255 = scmp.eq.s32.totalorder %s32, 1
      %p256 = scmp.ne.s32.totalorder %s251, %s253
      %p257 = scmp.eq.s32.totalorder %s32, 0
      %p258 = por %p256, %p257
      %p259 = scmp.ne.s32.totalorder %s251, %s253
      %p260 = scmp.eq.s32.totalorder %s37, 1
      %p261 = por %p259, %p260
      %p262 = scmp.ne.s32.totalorder %s253, %s254
      %p263 = scmp.eq.s32.totalorder %s37, 0
      %p264 = por %p262, %p263
      %p265 = scmp.ne.s32.totalorder %s253, %s254
      %p266 = scmp.eq.s32.totalorder %s38, 1
      %p267 = por %p265, %p266
      %p269 = scmp.ne.s32.totalorder %s254, %s268
      %p270 = scmp.eq.s32.totalorder %s38, 0
      %p271 = por %p269, %p270
      %s273 = sadd.s32 %s272, 1
      %p276 = scmp.eq.s32.totalorder %s32, 1
      %p277 = scmp.ne.s32.totalorder %s272, %s274
      %p278 = scmp.eq.s32.totalorder %s32, 0
      %p279 = por %p277, %p278
      %p280 = scmp.ne.s32.totalorder %s272, %s274
      %p281 = scmp.eq.s32.totalorder %s37, 1
      %p282 = por %p280, %p281
      %p283 = scmp.ne.s32.totalorder %s274, %s275
      %p284 = scmp.eq.s32.totalorder %s37, 0
      %p285 = por %p283, %p284
      %p286 = scmp.ne.s32.totalorder %s274, %s275
      %p287 = scmp.eq.s32.totalorder %s38, 1
      %p288 = por %p286, %p287
      %p290 = scmp.ne.s32.totalorder %s275, %s289
      %p291 = scmp.eq.s32.totalorder %s38, 0
      %p292 = por %p290, %p291
      %s294 = sadd.s32 %s293, 1
      %p297 = scmp.eq.s32.totalorder %s32, 1
      %p298 = scmp.ne.s32.totalorder %s293, %s295
      %p299 = scmp.eq.s32.totalorder %s32, 0
      %p300 = por %p298, %p299
      %p301 = scmp.ne.s32.totalorder %s293, %s295
      %p302 = scmp.eq.s32.totalorder %s37, 1
      %p303 = por %p301, %p302
      %p304 = scmp.ne.s32.totalorder %s295, %s296
      %p305 = scmp.eq.s32.totalorder %s37, 0
      %p306 = por %p304, %p305
      %p307 = scmp.ne.s32.totalorder %s295, %s296
      %p308 = scmp.eq.s32.totalorder %s38, 1
      %p309 = por %p307, %p308
      %p311 = scmp.ne.s32.totalorder %s296, %s310
      %p312 = scmp.eq.s32.totalorder %s38, 0
      %p313 = por %p311, %p312
      %s314 = ssub.s32 %s39, %s51
      %s315 = ssub.s32 %s40, %s47
      %s316 = sor.u32 %s314, %s315
      %p317 = scmp.eq.s32.totalorder %s316, 0
      %s319 = sadd.s32 %s318, 1
      %s320 = scalar_select %p317, %s318, %s319
      %p323 = pneg %p317
      %p324 = scmp.eq.s32.totalorder %s32, 1
      %p325 = por %p323, %p324
      %p326 = scmp.ne.s32.totalorder %s318, %s321
      %p327 = scmp.eq.s32.totalorder %s32, 0
      %p328 = por %p326, %p327
      %p329 = scmp.ne.s32.totalorder %s318, %s321
      %p330 = scmp.eq.s32.totalorder %s37, 1
      %p331 = por %p329, %p330
      %p332 = scmp.ne.s32.totalorder %s321, %s322
      %p333 = scmp.eq.s32.totalorder %s37, 0
      %p334 = por %p332, %p333
      %p335 = scmp.ne.s32.totalorder %s321, %s322
      %p336 = scmp.eq.s32.totalorder %s38, 1
      %p337 = por %p335, %p336
      %p339 = scmp.ne.s32.totalorder %s322, %s338
      %p340 = scmp.eq.s32.totalorder %s38, 0
      %p341 = por %p339, %p340
      %p342 = scmp.le.s32.totalorder 1, %s32
      %p343 = scmp.lt.s32.totalorder %s32, 3
      %p344 = pnand %p342, %p343
      %p345 = pneg %p344
      // Predicated region
      $region9: #{decoder_forward.1} parent=5 // pred_check
        _
      $region10: #{decoder_forward.1} parent=5 // pred_check_branch
        %347 = sbr.rel (%p344) target = $region12
      $region11: #{decoder_forward.1} parent=5 // pred_region
        %s348 = ssub.s32 %s32, 1
        // Predicated region
        $region13: #{decoder_forward.1} parent=11 // pred_check
          %p349 = pneg %p117
        $region14: #{decoder_forward.1} parent=11 // pred_check_branch
          %351 = sbr.rel (%p349) target = $region16
        $region15: #{decoder_forward.1} parent=11 // pred_region
          %s353 = ssub.s32 1024, 1024
          %354 = vsyncadd [#allocation8], %s353
          %s355 = sshll.u32 [#allocation9], 4
          %s356 = int_to_ptr.vmem [resolvable:$true] %s355
          %361 = dma.hbm_to_vmem [thread:$0]  %s2, 1024, %s356, [#allocation8], 64, 64, 4
        $region16: #{decoder_forward.1} parent=11 // pred_fallthru
          _
        // Predicated region
        $region17: #{decoder_forward.1} parent=11 // pred_check
          %p362 = pneg %p138
        $region18: #{decoder_forward.1} parent=11 // pred_check_branch
          %364 = sbr.rel (%p362) target = $region20
        $region19: #{decoder_forward.1} parent=11 // pred_region
          %s366 = ssub.s32 64, 64
          %367 = vsyncadd [#allocation11], %s366
          %s369 = sshll.u32 [#allocation10], 4
          %s370 = int_to_ptr.vmem [resolvable:$true] %s369
          %372 = dma.hbm_to_vmem [thread:$0]  %s3, 64, %s370, [#allocation11]
        $region20: #{decoder_forward.1} parent=11 // pred_fallthru
          _
        // Predicated region
        $region21: #{decoder_forward.1} parent=11 // pred_check
          %p373 = pneg %p159
        $region22: #{decoder_forward.1} parent=11 // pred_check_branch
          %375 = sbr.rel (%p373) target = $region24
        $region23: #{decoder_forward.1} parent=11 // pred_region
          %s377 = ssub.s32 1024, 1024
          %378 = vsyncadd [#allocation11], %s377
          %s379 = sshll.u32 [#allocation12], 4
          %s380 = int_to_ptr.vmem [resolvable:$true] %s379
          %385 = dma.hbm_to_vmem [thread:$0]  %s4, 1024, %s380, [#allocation11], 64, 64, 4
        $region24: #{decoder_forward.1} parent=11 // pred_fallthru
          _
        // Predicated region
        $region25: #{decoder_forward.1} parent=11 // pred_check
          %p386 = pneg %p180
        $region26: #{decoder_forward.1} parent=11 // pred_check_branch
          %388 = sbr.rel (%p386) target = $region28
        $region27: #{decoder_forward.1} parent=11 // pred_region
          %s390 = ssub.s32 64, 64
          %391 = vsyncadd [#allocation14], %s390
          %s393 = sshll.u32 [#allocation13], 4
          %s394 = int_to_ptr.vmem [resolvable:$true] %s393
          %396 = dma.hbm_to_vmem [thread:$0]  %s5, 64, %s394, [#allocation14]
        $region28: #{decoder_forward.1} parent=11 // pred_fallthru
          _
        // Predicated region
        $region29: #{decoder_forward.1} parent=11 // pred_check
          %p397 = pneg %p201
        $region30: #{decoder_forward.1} parent=11 // pred_check_branch
          %399 = sbr.rel (%p397) target = $region32
        $region31: #{decoder_forward.1} parent=11 // pred_region
          %s401 = ssub.s32 256, 256
          %402 = vsyncadd [#allocation14], %s401
          %s403 = sshll.u32 [#allocation15], 4
          %s404 = int_to_ptr.vmem [resolvable:$true] %s403
          %409 = dma.hbm_to_vmem [thread:$0]  %s6, 256, %s404, [#allocation14], 64, 64, 4
        $region32: #{decoder_forward.1} parent=11 // pred_fallthru
          _
        // Predicated region
        $region33: #{decoder_forward.1} parent=11 // pred_check
          %p410 = pneg %p222
        $region34: #{decoder_forward.1} parent=11 // pred_check_branch
          %412 = sbr.rel (%p410) target = $region36
        $region35: #{decoder_forward.1} parent=11 // pred_region
          %s414 = ssub.s32 16, 16
          %415 = vsyncadd [#allocation17], %s414
          %s417 = sshll.u32 [#allocation16], 4
          %s418 = int_to_ptr.vmem [resolvable:$true] %s417
          %420 = dma.hbm_to_vmem [thread:$0]  %s7, 16, %s418, [#allocation17]
        $region36: #{decoder_forward.1} parent=11 // pred_fallthru
          _
        // Predicated region
        $region37: #{decoder_forward.1} parent=11 // pred_check
          %p421 = pneg %p243
        $region38: #{decoder_forward.1} parent=11 // pred_check_branch
          %423 = sbr.rel (%p421) target = $region40
        $region39: #{decoder_forward.1} parent=11 // pred_region
          %s425 = ssub.s32 1024, 1024
          %426 = vsyncadd [#allocation17], %s425
          %s427 = sshll.u32 [#allocation18], 4
          %s428 = int_to_ptr.vmem [resolvable:$true] %s427
          %433 = dma.hbm_to_vmem [thread:$0]  %s8, 1024, %s428, [#allocation17], 64, 64, 4
        $region40: #{decoder_forward.1} parent=11 // pred_fallthru
          _
        // Predicated region
        $region41: #{decoder_forward.1} parent=11 // pred_check
          %p434 = pneg %p264
        $region42: #{decoder_forward.1} parent=11 // pred_check_branch
          %436 = sbr.rel (%p434) target = $region44
        $region43: #{decoder_forward.1} parent=11 // pred_region
          %s438 = ssub.s32 16, 16
          %439 = vsyncadd [#allocation20], %s438
          %s441 = sshll.u32 [#allocation19], 4
          %s442 = int_to_ptr.vmem [resolvable:$true] %s441
          %444 = dma.hbm_to_vmem [thread:$0]  %s9, 16, %s442, [#allocation20]
        $region44: #{decoder_forward.1} parent=11 // pred_fallthru
          _
        // Predicated region
        $region45: #{decoder_forward.1} parent=11 // pred_check
          %p445 = pneg %p285
        $region46: #{decoder_forward.1} parent=11 // pred_check_branch
          %447 = sbr.rel (%p445) target = $region48
        $region47: #{decoder_forward.1} parent=11 // pred_region
          %s449 = ssub.s32 64, 64
          %450 = vsyncadd [#allocation20], %s449
          %s452 = sshll.u32 [#allocation21], 4
          %s453 = int_to_ptr.vmem [resolvable:$true] %s452
          %455 = dma.hbm_to_vmem [thread:$0]  %s10, 64, %s453, [#allocation20]
        $region48: #{decoder_forward.1} parent=11 // pred_fallthru
          _
        // Predicated region
        $region49: #{decoder_forward.1} parent=11 // pred_check
          %p456 = pneg %p306
        $region50: #{decoder_forward.1} parent=11 // pred_check_branch
          %458 = sbr.rel (%p456) target = $region52
        $region51: #{decoder_forward.1} parent=11 // pred_region
          %s460 = ssub.s32 64, 64
          %461 = vsyncadd [#allocation23], %s460
          %s463 = sshll.u32 [#allocation22], 4
          %s464 = int_to_ptr.vmem [resolvable:$true] %s463
          %466 = dma.hbm_to_vmem [thread:$0]  %s11, 64, %s464, [#allocation23]
        $region52: #{decoder_forward.1} parent=11 // pred_fallthru
          _
      $region12: #{decoder_forward.1} parent=5 // pred_fallthru
        _
      %p467 = scmp.lt.s32.totalorder %s32, 2
      // Predicated region
      $region53: #{decoder_forward.1} parent=5 // pred_check
        %p468 = pneg %p467
      $region54: #{decoder_forward.1} parent=5 // pred_check_branch
        %470 = sbr.rel (%p468) target = $region56
      $region55: #{decoder_forward.1} parent=5 // pred_region
        // Predicated region
        $region57: #{decoder_forward.1} parent=55 // pred_check
          %p471 = pneg %p64
        $region58: #{decoder_forward.1} parent=55 // pred_check_branch
          %473 = sbr.rel (%p471) target = $region60
        $region59: #{decoder_forward.1} parent=55 // pred_region
          %s474 = sand.u32 %s54, 1
          %s475 = scalar_lea.sflag [#allocation5], %s474
          %s476 = sand.u32 %s54, 1
          %s477 = smul.addr %s476, 8
          %s478 = scalar_lea.vmem [#allocation4], %s477
          %s480 = ssub.s32 128, 128
          %481 = vsyncadd %s475, %s480
          %s482 = smul.addr %s39, 128
          %s483 = scalar_lea.hbm %s0, %s482
          %s485 = sshll.u32 %s478, 4
          %s486 = int_to_ptr.vmem [resolvable:$true] %s485
          %488 = dma.hbm_to_vmem [thread:$0]  %s483, 128, %s486, %s475
        $region60: #{decoder_forward.1} parent=55 // pred_fallthru
          _
        // Predicated region
        $region61: #{decoder_forward.1} parent=55 // pred_check
          %p489 = pneg %p90
        $region62: #{decoder_forward.1} parent=55 // pred_check_branch
          %491 = sbr.rel (%p489) target = $region64
        $region63: #{decoder_forward.1} parent=55 // pred_region
          %s492 = sand.u32 %s32, 1
          %s493 = scalar_lea.sflag [#allocation8], %s492
          %s494 = sand.u32 %s80, 1
          %s495 = smul.addr %s494, 8
          %s496 = scalar_lea.vmem [#allocation7], %s495
          %s498 = ssub.s32 128, 128
          %499 = vsyncadd %s493, %s498
          %s500 = smul.addr %s39, 128
          %s501 = scalar_lea.hbm %s1, %s500
          %s503 = sshll.u32 %s496, 4
          %s504 = int_to_ptr.vmem [resolvable:$true] %s503
          %506 = dma.hbm_to_vmem [thread:$0]  %s501, 128, %s504, %s493
        $region64: #{decoder_forward.1} parent=55 // pred_fallthru
          _
      $region56: #{decoder_forward.1} parent=5 // pred_fallthru
        _
      %p507 = scmp.le.s32.totalorder 1, %s32
      %p508 = scmp.lt.s32.totalorder %s32, 3
      %p509 = pnand %p507, %p508
      %p510 = pneg %p509
      // Predicated region
      $region65: #{decoder_forward.1} parent=5 // pred_check
        _
      $region66: #{decoder_forward.1} parent=5 // pred_check_branch
        %512 = sbr.rel (%p509) target = $region68
      $region67: #{decoder_forward.1} parent=5 // pred_region
        %s513 = ssub.s32 %s32, 1
        %s514 = sand.u32 %s57, 1
        %s515 = scalar_lea.sflag [#allocation5], %s514
        %s516 = sand.u32 %s57, 1
        %s517 = smul.addr %s516, 8
        %s518 = scalar_lea.vmem [#allocation4], %s517
        // Predicated region
        $region69: #{decoder_forward.1} parent=67 // pred_check
          %p519 = pneg %p70
        $region70: #{decoder_forward.1} parent=67 // pred_check_branch
          %521 = sbr.rel (%p519) target = $region72
        $region71: #{decoder_forward.1} parent=67 // pred_region
          %522 = dma.done %s515, 128
        $region72: #{decoder_forward.1} parent=67 // pred_fallthru
          _
        %s523 = sand.u32 %s37, 1
        %s524 = scalar_lea.sflag [#allocation8], %s523
        %s525 = sand.u32 %s83, 1
        %s526 = smul.addr %s525, 8
        %s527 = scalar_lea.vmem [#allocation7], %s526
        // Predicated region
        $region73: #{decoder_forward.1} parent=67 // pred_check
          %p528 = pneg %p96
        $region74: #{decoder_forward.1} parent=67 // pred_check_branch
          %530 = sbr.rel (%p528) target = $region76
        $region75: #{decoder_forward.1} parent=67 // pred_region
          %531 = dma.done %s524, 128
        $region76: #{decoder_forward.1} parent=67 // pred_fallthru
          _
        // Predicated region
        $region77: #{decoder_forward.1} parent=67 // pred_check
          %p532 = pneg %p117
        $region78: #{decoder_forward.1} parent=67 // pred_check_branch
          %534 = sbr.rel (%p532) target = $region80
        $region79: #{decoder_forward.1} parent=67 // pred_region
          %535 = dma.done [#allocation8], 1024
        $region80: #{decoder_forward.1} parent=67 // pred_fallthru
          _
        // Predicated region
        $region81: #{decoder_forward.1} parent=67 // pred_check
          %p536 = pneg %p138
        $region82: #{decoder_forward.1} parent=67 // pred_check_branch
          %538 = sbr.rel (%p536) target = $region84
        $region83: #{decoder_forward.1} parent=67 // pred_region
          %539 = dma.done [#allocation11], 64
        $region84: #{decoder_forward.1} parent=67 // pred_fallthru
          _
        // Predicated region
        $region85: #{decoder_forward.1} parent=67 // pred_check
          %p540 = pneg %p159
        $region86: #{decoder_forward.1} parent=67 // pred_check_branch
          %542 = sbr.rel (%p540) target = $region88
        $region87: #{decoder_forward.1} parent=67 // pred_region
          %543 = dma.done [#allocation11], 1024
        $region88: #{decoder_forward.1} parent=67 // pred_fallthru
          _
        // Predicated region
        $region89: #{decoder_forward.1} parent=67 // pred_check
          %p544 = pneg %p180
        $region90: #{decoder_forward.1} parent=67 // pred_check_branch
          %546 = sbr.rel (%p544) target = $region92
        $region91: #{decoder_forward.1} parent=67 // pred_region
          %547 = dma.done [#allocation14], 64
        $region92: #{decoder_forward.1} parent=67 // pred_fallthru
          _
        // Predicated region
        $region93: #{decoder_forward.1} parent=67 // pred_check
          %p548 = pneg %p201
        $region94: #{decoder_forward.1} parent=67 // pred_check_branch
          %550 = sbr.rel (%p548) target = $region96
        $region95: #{decoder_forward.1} parent=67 // pred_region
          %551 = dma.done [#allocation14], 256
        $region96: #{decoder_forward.1} parent=67 // pred_fallthru
          _
        // Predicated region
        $region97: #{decoder_forward.1} parent=67 // pred_check
          %p552 = pneg %p222
        $region98: #{decoder_forward.1} parent=67 // pred_check_branch
          %554 = sbr.rel (%p552) target = $region100
        $region99: #{decoder_forward.1} parent=67 // pred_region
          %555 = dma.done [#allocation17], 16
        $region100: #{decoder_forward.1} parent=67 // pred_fallthru
          _
        // Predicated region
        $region101: #{decoder_forward.1} parent=67 // pred_check
          %p556 = pneg %p243
        $region102: #{decoder_forward.1} parent=67 // pred_check_branch
          %558 = sbr.rel (%p556) target = $region104
        $region103: #{decoder_forward.1} parent=67 // pred_region
          %559 = dma.done [#allocation17], 1024
        $region104: #{decoder_forward.1} parent=67 // pred_fallthru
          _
        // Predicated region
        $region105: #{decoder_forward.1} parent=67 // pred_check
          %p560 = pneg %p264
        $region106: #{decoder_forward.1} parent=67 // pred_check_branch
          %562 = sbr.rel (%p560) target = $region108
        $region107: #{decoder_forward.1} parent=67 // pred_region
          %563 = dma.done [#allocation20], 16
        $region108: #{decoder_forward.1} parent=67 // pred_fallthru
          _
        // Predicated region
        $region109: #{decoder_forward.1} parent=67 // pred_check
          %p564 = pneg %p285
        $region110: #{decoder_forward.1} parent=67 // pred_check_branch
          %566 = sbr.rel (%p564) target = $region112
        $region111: #{decoder_forward.1} parent=67 // pred_region
          %567 = dma.done [#allocation20], 64
        $region112: #{decoder_forward.1} parent=67 // pred_fallthru
          _
        // Predicated region
        $region113: #{decoder_forward.1} parent=67 // pred_check
          %p568 = pneg %p306
        $region114: #{decoder_forward.1} parent=67 // pred_check_branch
          %570 = sbr.rel (%p568) target = $region116
        $region115: #{decoder_forward.1} parent=67 // pred_region
          %571 = dma.done [#allocation23], 64
        $region116: #{decoder_forward.1} parent=67 // pred_fallthru
          _
        %s572 = sand.u32 %s57, 1
        %s573 = scalar_lea.sflag [#allocation5], %s572
        %s574 = sand.u32 %s57, 1
        %s575 = smul.addr %s574, 8
        %s576 = scalar_lea.vmem [#allocation4], %s575
        %p577 = pneg %p70
        %p578 = pneg %p67
        %s579 = sand.u32 %s37, 1
        %s580 = scalar_lea.sflag [#allocation8], %s579
        %s581 = sand.u32 %s83, 1
        %s582 = smul.addr %s581, 8
        %s583 = scalar_lea.vmem [#allocation7], %s582
        %p584 = pneg %p96
        %p585 = pneg %p93
        %p586 = pneg %p117
        %p587 = pneg %p114
        %p588 = pneg %p138
        %p589 = pneg %p135
        %p590 = pneg %p159
        %p591 = pneg %p156
        %p592 = pneg %p180
        %p593 = pneg %p177
        %p594 = pneg %p201
        %p595 = pneg %p198
        %p596 = pneg %p222
        %p597 = pneg %p219
        %p598 = pneg %p243
        %p599 = pneg %p240
        %p600 = pneg %p264
        %p601 = pneg %p261
        %p602 = pneg %p285
        %p603 = pneg %p282
        %p604 = pneg %p306
        %p605 = pneg %p303
        %p606 = pneg %p334
        %p607 = pneg %p331
        %s608 = sand.u32 %s321, 1
        %s609 = scalar_lea.sflag [#allocation6], %s608
        %s610 = sand.u32 %s321, 1
        %s611 = smul.addr %s610, 8
        %s612 = scalar_lea.vmem [#allocation24], %s611
        %p614 = scmp.eq.s32.totalorder %s42, 0
        // Predicated region
        $region117: #{decoder_forward.1} parent=67 // pred_check
          %p615 = pneg %p614
        $region118: #{decoder_forward.1} parent=67 // pred_check_branch
          %617 = sbr.rel (%p615) target = $region120
        $region119: #{decoder_forward.1} parent=67 // pred_region
          %v618 = vld [vmem:[%s518] sm:$0xff]
          %v619 = vpack.c.bf16 %v618, %v618
          %v620 = vld [vmem:[%s527] sm:$0xff]
          %v621 = vpack.c.bf16 %v620, %v620
          %s622 = scalar_lea.vmem [#allocation9], 16
          %v623 = vld [vmem:[%s622] sm:$0xf]
          %v624 = vld [vmem:[%s622 + $0x4] sm:$0xf]
          %v625 = vld [vmem:[%s622 + $0x8] sm:$0xf]
          %v626 = vld [vmem:[%s622 + $0xc] sm:$0xf]
          %v627 = vld [vmem:[#allocation10 + $0x1] sm:$0x1]
          %v628 = vlaneseq
          %v629 = vshrl.u32 %v628, 7
          %v630 = vsub.s32 0, %v629
          %v631 = vrot.slane %v627, %v630
          %v636 = vunpack.c.l.b16 %v623
          %v637 = vunpack.c.l.b16 %v624
          %v638 = vunpack.c.l.b16 %v625
          %v639 = vunpack.c.l.b16 %v626
          %v640 = vpack.c.b16 %v637, %v636
          %v641 = vpack.c.b16 %v639, %v638
          %vm644 = vcmask 261120
          %v646 = vsel %vm644, %v619, 0
          %648 = vmatprep.subr.bf16.mxu0 0
          %649 = vmatpush1.bf16.msra.mxu0 %v640
          %650 = vmatprep.subr.bf16.mxu0 0
          %651 = vmatpush1.bf16.msra.mxu0 %v641
          %652 = vmatprep.subr.bf16.mxu0 0
          %653 = vmatpush1.bf16.msra.mxu0 0
          %654 = vmatprep.subr.bf16.mxu0 0
          %655 = vmatpush1.bf16.msra.mxu0 0
          %656 = vmatprep.subr.bf16.mxu0 0
          %657 = vmatpush1.bf16.msra.mxu0 0
          %658 = vmatprep.subr.bf16.mxu0 0
          %659 = vmatpush1.bf16.msra.mxu0 0
          %660 = vmatprep.subr.bf16.mxu0 0
          %661 = vmatpush1.bf16.msra.mxu0 0
          %662 = vmatprep.subr.bf16.mxu0 0
          %663 = vmatpush1.bf16.msra.mxu0 0
          %664 = vmatprep.subr.bf16.mxu0 0
          %665 = vmatpush1.bf16.msra.mxu0 0
          %666 = vmatprep.subr.bf16.mxu0 0
          %667 = vmatpush1.bf16.msra.mxu0 0
          %668 = vmatprep.subr.bf16.mxu0 0
          %669 = vmatpush1.bf16.msra.mxu0 0
          %670 = vmatprep.subr.bf16.mxu0 0
          %671 = vmatpush1.bf16.msra.mxu0 0
          %672 = vmatprep.subr.bf16.mxu0 0
          %673 = vmatpush1.bf16.msra.mxu0 0
          %674 = vmatprep.subr.bf16.mxu0 0
          %675 = vmatpush1.bf16.msra.mxu0 0
          %676 = vmatprep.subr.bf16.mxu0 0
          %677 = vmatpush1.bf16.msra.mxu0 0
          %678 = vmatprep.subr.bf16.mxu0 0
          %679 = vmatpush1.bf16.msra.mxu0 0
          %680 = vmatprep.mubr.bf16.mxu0 0
          %681 = vmatmul.mubr.bf16.gmra.mrb[0].mxu0 %v646
          %v682 = vpop.f32.mrb[0].mxu0
          %v683 = vadd.f32 %v631, %v682
          %v684 = vpop.f32.mrb[0].mxu0
          %v685 = vpop.f32.mrb[0].mxu0
          %v686 = vpop.f32.mrb[0].mxu0
          %687 = vdwg.mxu0
          %s688 = scalar_lea.vmem [#allocation9], 32
          %v689 = vld [vmem:[%s688] sm:$0xf]
          %v690 = vld [vmem:[%s688 + $0x4] sm:$0xf]
          %v691 = vld [vmem:[%s688 + $0x8] sm:$0xf]
          %v692 = vld [vmem:[%s688 + $0xc] sm:$0xf]
          %v693 = vld [vmem:[#allocation10 + $0x2] sm:$0x1]
          %v694 = vlaneseq
          %v695 = vshrl.u32 %v694, 7
          %v696 = vsub.s32 0, %v695
          %v697 = vrot.slane %v693, %v696
          %v702 = vunpack.c.l.b16 %v689
          %v703 = vunpack.c.l.b16 %v690
          %v704 = vunpack.c.l.b16 %v691
          %v705 = vunpack.c.l.b16 %v692
          %v706 = vpack.c.b16 %v703, %v702
          %v707 = vpack.c.b16 %v705, %v704
          %710 = vmatprep.subr.bf16.mxu0 0
          %711 = vmatpush1.bf16.msra.mxu0 %v706
          %712 = vmatprep.subr.bf16.mxu0 0
          %713 = vmatpush1.bf16.msra.mxu0 %v707
          %714 = vmatprep.subr.bf16.mxu0 0
          %715 = vmatpush1.bf16.msra.mxu0 0
          %716 = vmatprep.subr.bf16.mxu0 0
          %717 = vmatpush1.bf16.msra.mxu0 0
          %718 = vmatprep.subr.bf16.mxu0 0
          %719 = vmatpush1.bf16.msra.mxu0 0
          %720 = vmatprep.subr.bf16.mxu0 0
          %721 = vmatpush1.bf16.msra.mxu0 0
          %722 = vmatprep.subr.bf16.mxu0 0
          %723 = vmatpush1.bf16.msra.mxu0 0
          %724 = vmatprep.subr.bf16.mxu0 0
          %725 = vmatpush1.bf16.msra.mxu0 0
          %726 = vmatprep.subr.bf16.mxu0 0
          %727 = vmatpush1.bf16.msra.mxu0 0
          %728 = vmatprep.subr.bf16.mxu0 0
          %729 = vmatpush1.bf16.msra.mxu0 0
          %730 = vmatprep.subr.bf16.mxu0 0
          %731 = vmatpush1.bf16.msra.mxu0 0
          %732 = vmatprep.subr.bf16.mxu0 0
          %733 = vmatpush1.bf16.msra.mxu0 0
          %734 = vmatprep.subr.bf16.mxu0 0
          %735 = vmatpush1.bf16.msra.mxu0 0
          %736 = vmatprep.subr.bf16.mxu0 0
          %737 = vmatpush1.bf16.msra.mxu0 0
          %738 = vmatprep.subr.bf16.mxu0 0
          %739 = vmatpush1.bf16.msra.mxu0 0
          %740 = vmatprep.subr.bf16.mxu0 0
          %741 = vmatpush1.bf16.msra.mxu0 0
          %742 = vmatprep.mubr.bf16.mxu0 0
          %743 = vmatmul.mubr.bf16.gmra.mrb[0].mxu0 %v646
          %v744 = vpop.f32.mrb[0].mxu0
          %v745 = vadd.f32 %v697, %v744
          %v746 = vpop.f32.mrb[0].mxu0
          %v747 = vpop.f32.mrb[0].mxu0
          %v748 = vpop.f32.mrb[0].mxu0
          %749 = vdwg.mxu0
          %750 = vxpose.xlu0.b32.start [1/16] %v683, 128
          %751 = vxpose.xlu0.b32.cont [2/16] 0.0, 128
          %752 = vxpose.xlu0.b32.cont [3/16] 0.0, 128
          %753 = vxpose.xlu0.b32.cont [4/16] 0.0, 128
          %754 = vxpose.xlu0.b32.cont [5/16] 0.0, 128
          %755 = vxpose.xlu0.b32.cont [6/16] 0.0, 128
          %756 = vxpose.xlu0.b32.cont [7/16] 0.0, 128
          %757 = vxpose.xlu0.b32.cont [8/16] 0.0, 128
          %758 = vxpose.xlu0.b32.cont [9/16] 0.0, 128
          %759 = vxpose.xlu0.b32.cont [10/16] 0.0, 128
          %760 = vxpose.xlu0.b32.cont [11/16] 0.0, 128
          %761 = vxpose.xlu0.b32.cont [12/16] 0.0, 128
          %762 = vxpose.xlu0.b32.cont [13/16] 0.0, 128
          %763 = vxpose.xlu0.b32.cont [14/16] 0.0, 128
          %764 = vxpose.xlu0.b32.cont [15/16] 0.0, 128
          %765 = vxpose.xlu0.b32.end [16/16] 0.0, 128
          %v766 = vpop.trf.xlu0
          %v767 = vpop.trf.xlu0
          %v768 = vpop.trf.xlu0
          %v769 = vpop.trf.xlu0
          %v770 = vpop.trf.xlu0
          %v771 = vpop.trf.xlu0
          %v772 = vpop.trf.xlu0
          %v773 = vpop.trf.xlu0
          %v774 = vpop.trf.xlu0
          %v775 = vpop.trf.xlu0
          %v776 = vpop.trf.xlu0
          %v777 = vpop.trf.xlu0
          %v778 = vpop.trf.xlu0
          %v779 = vpop.trf.xlu0
          %v780 = vpop.trf.xlu0
          %v781 = vpop.trf.xlu0
          %v782 = vpack.c.bf16 %v766, %v766
          %v783 = vpack.c.bf16 %v767, %v767
          %v784 = vpack.c.bf16 %v768, %v768
          %v785 = vpack.c.bf16 %v769, %v769
          %786 = vxpose.xlu0.b32.start [1/16] %v745, 128
          %787 = vxpose.xlu0.b32.cont [2/16] 0.0, 128
          %788 = vxpose.xlu0.b32.cont [3/16] 0.0, 128
          %789 = vxpose.xlu0.b32.cont [4/16] 0.0, 128
          %790 = vxpose.xlu0.b32.cont [5/16] 0.0, 128
          %791 = vxpose.xlu0.b32.cont [6/16] 0.0, 128
          %792 = vxpose.xlu0.b32.cont [7/16] 0.0, 128
          %793 = vxpose.xlu0.b32.cont [8/16] 0.0, 128
          %794 = vxpose.xlu0.b32.cont [9/16] 0.0, 128
          %795 = vxpose.xlu0.b32.cont [10/16] 0.0, 128
          %796 = vxpose.xlu0.b32.cont [11/16] 0.0, 128
          %797 = vxpose.xlu0.b32.cont [12/16] 0.0, 128
          %798 = vxpose.xlu0.b32.cont [13/16] 0.0, 128
          %799 = vxpose.xlu0.b32.cont [14/16] 0.0, 128
          %800 = vxpose.xlu0.b32.cont [15/16] 0.0, 128
          %801 = vxpose.xlu0.b32.end [16/16] 0.0, 128
          %v802 = vpop.trf.xlu0
          %v803 = vpop.trf.xlu0
          %v804 = vpop.trf.xlu0
          %v805 = vpop.trf.xlu0
          %v806 = vpop.trf.xlu0
          %v807 = vpop.trf.xlu0
          %v808 = vpop.trf.xlu0
          %v809 = vpop.trf.xlu0
          %v810 = vpop.trf.xlu0
          %v811 = vpop.trf.xlu0
          %v812 = vpop.trf.xlu0
          %v813 = vpop.trf.xlu0
          %v814 = vpop.trf.xlu0
          %v815 = vpop.trf.xlu0
          %v816 = vpop.trf.xlu0
          %v817 = vpop.trf.xlu0
          %v818 = vpack.c.bf16 %v802, %v802
          %v819 = vpack.c.bf16 %v803, %v803
          %v820 = vpack.c.bf16 %v804, %v804
          %v821 = vpack.c.bf16 %v805, %v805
          %vm822 = vcmask 60416
          %823 = vst.msk [vmem:[#allocation2] sm:$0xf] %vm822, %v782
          %824 = vst.msk [vmem:[#allocation2 + $0x4] sm:$0xf] %vm822, %v783
          %825 = vst.msk [vmem:[#allocation2 + $0x8] sm:$0xf] %vm822, %v784
          %826 = vst.msk [vmem:[#allocation2 + $0xc] sm:$0xf] %vm822, %v785
          %s827 = scalar_lea.vmem [#allocation2], 16
          %828 = vst.msk [vmem:[%s827] sm:$0xf] %vm822, %v818
          %829 = vst.msk [vmem:[%s827 + $0x4] sm:$0xf] %vm822, %v819
          %830 = vst.msk [vmem:[%s827 + $0x8] sm:$0xf] %vm822, %v820
          %831 = vst.msk [vmem:[%s827 + $0xc] sm:$0xf] %vm822, %v821
          %s832 = scalar_lea.vmem [#allocation12], 16
          %v833 = vld [vmem:[%s832] sm:$0xf]
          %v834 = vld [vmem:[%s832 + $0x4] sm:$0xf]
          %v835 = vld [vmem:[%s832 + $0x8] sm:$0xf]
          %v836 = vld [vmem:[%s832 + $0xc] sm:$0xf]
          %v837 = vld [vmem:[#allocation13 + $0x1] sm:$0x1]
          %v838 = vlaneseq
          %v839 = vshrl.u32 %v838, 7
          %v840 = vsub.s32 0, %v839
          %v841 = vrot.slane %v837, %v840
          %v846 = vunpack.c.l.b16 %v833
          %v847 = vunpack.c.l.b16 %v834
          %v848 = vunpack.c.l.b16 %v835
          %v849 = vunpack.c.l.b16 %v836
          %v850 = vpack.c.b16 %v847, %v846
          %v851 = vpack.c.b16 %v849, %v848
          %v855 = vsel %vm644, %v621, 0
          %857 = vmatprep.subr.bf16.mxu0 0
          %858 = vmatpush1.bf16.msra.mxu0 %v850
          %859 = vmatprep.subr.bf16.mxu0 0
          %860 = vmatpush1.bf16.msra.mxu0 %v851
          %861 = vmatprep.subr.bf16.mxu0 0
          %862 = vmatpush1.bf16.msra.mxu0 0
          %863 = vmatprep.subr.bf16.mxu0 0
          %864 = vmatpush1.bf16.msra.mxu0 0
          %865 = vmatprep.subr.bf16.mxu0 0
          %866 = vmatpush1.bf16.msra.mxu0 0
          %867 = vmatprep.subr.bf16.mxu0 0
          %868 = vmatpush1.bf16.msra.mxu0 0
          %869 = vmatprep.subr.bf16.mxu0 0
          %870 = vmatpush1.bf16.msra.mxu0 0
          %871 = vmatprep.subr.bf16.mxu0 0
          %872 = vmatpush1.bf16.msra.mxu0 0
          %873 = vmatprep.subr.bf16.mxu0 0
          %874 = vmatpush1.bf16.msra.mxu0 0
          %875 = vmatprep.subr.bf16.mxu0 0
          %876 = vmatpush1.bf16.msra.mxu0 0
          %877 = vmatprep.subr.bf16.mxu0 0
          %878 = vmatpush1.bf16.msra.mxu0 0
          %879 = vmatprep.subr.bf16.mxu0 0
          %880 = vmatpush1.bf16.msra.mxu0 0
          %881 = vmatprep.subr.bf16.mxu0 0
          %882 = vmatpush1.bf16.msra.mxu0 0
          %883 = vmatprep.subr.bf16.mxu0 0
          %884 = vmatpush1.bf16.msra.mxu0 0
          %885 = vmatprep.subr.bf16.mxu0 0
          %886 = vmatpush1.bf16.msra.mxu0 0
          %887 = vmatprep.subr.bf16.mxu0 0
          %888 = vmatpush1.bf16.msra.mxu0 0
          %889 = vmatprep.mubr.bf16.mxu0 0
          %890 = vmatmul.mubr.bf16.gmra.mrb[0].mxu0 %v855
          %v891 = vpop.f32.mrb[0].mxu0
          %v892 = vadd.f32 %v841, %v891
          %v893 = vpop.f32.mrb[0].mxu0
          %v894 = vpop.f32.mrb[0].mxu0
          %v895 = vpop.f32.mrb[0].mxu0
          %896 = vdwg.mxu0
          %s897 = scalar_lea.vmem [#allocation12], 32
          %v898 = vld [vmem:[%s897] sm:$0xf]
          %v899 = vld [vmem:[%s897 + $0x4] sm:$0xf]
          %v900 = vld [vmem:[%s897 + $0x8] sm:$0xf]
          %v901 = vld [vmem:[%s897 + $0xc] sm:$0xf]
          %v902 = vld [vmem:[#allocation13 + $0x2] sm:$0x1]
          %v903 = vlaneseq
          %v904 = vshrl.u32 %v903, 7
          %v905 = vsub.s32 0, %v904
          %v906 = vrot.slane %v902, %v905
          %v911 = vunpack.c.l.b16 %v898
          %v912 = vunpack.c.l.b16 %v899
          %v913 = vunpack.c.l.b16 %v900
          %v914 = vunpack.c.l.b16 %v901
          %v915 = vpack.c.b16 %v912, %v911
          %v916 = vpack.c.b16 %v914, %v913
          %919 = vmatprep.subr.bf16.mxu0 0
          %920 = vmatpush1.bf16.msra.mxu0 %v915
          %921 = vmatprep.subr.bf16.mxu0 0
          %922 = vmatpush1.bf16.msra.mxu0 %v916
          %923 = vmatprep.subr.bf16.mxu0 0
          %924 = vmatpush1.bf16.msra.mxu0 0
          %925 = vmatprep.subr.bf16.mxu0 0
          %926 = vmatpush1.bf16.msra.mxu0 0
          %927 = vmatprep.subr.bf16.mxu0 0
          %928 = vmatpush1.bf16.msra.mxu0 0
          %929 = vmatprep.subr.bf16.mxu0 0
          %930 = vmatpush1.bf16.msra.mxu0 0
          %931 = vmatprep.subr.bf16.mxu0 0
          %932 = vmatpush1.bf16.msra.mxu0 0
          %933 = vmatprep.subr.bf16.mxu0 0
          %934 = vmatpush1.bf16.msra.mxu0 0
          %935 = vmatprep.subr.bf16.mxu0 0
          %936 = vmatpush1.bf16.msra.mxu0 0
          %937 = vmatprep.subr.bf16.mxu0 0
          %938 = vmatpush1.bf16.msra.mxu0 0
          %939 = vmatprep.subr.bf16.mxu0 0
          %940 = vmatpush1.bf16.msra.mxu0 0
          %941 = vmatprep.subr.bf16.mxu0 0
          %942 = vmatpush1.bf16.msra.mxu0 0
          %943 = vmatprep.subr.bf16.mxu0 0
          %944 = vmatpush1.bf16.msra.mxu0 0
          %945 = vmatprep.subr.bf16.mxu0 0
          %946 = vmatpush1.bf16.msra.mxu0 0
          %947 = vmatprep.subr.bf16.mxu0 0
          %948 = vmatpush1.bf16.msra.mxu0 0
          %949 = vmatprep.subr.bf16.mxu0 0
          %950 = vmatpush1.bf16.msra.mxu0 0
          %951 = vmatprep.mubr.bf16.mxu0 0
          %952 = vmatmul.mubr.bf16.gmra.mrb[0].mxu0 %v855
          %v953 = vpop.f32.mrb[0].mxu0
          %v954 = vadd.f32 %v906, %v953
          %v955 = vpop.f32.mrb[0].mxu0
          %v956 = vpop.f32.mrb[0].mxu0
          %v957 = vpop.f32.mrb[0].mxu0
          %958 = vdwg.mxu0
          %959 = vxpose.xlu0.b32.start [1/16] %v892, 128
          %960 = vxpose.xlu0.b32.cont [2/16] 0.0, 128
          %961 = vxpose.xlu0.b32.cont [3/16] 0.0, 128
          %962 = vxpose.xlu0.b32.cont [4/16] 0.0, 128
          %963 = vxpose.xlu0.b32.cont [5/16] 0.0, 128
          %964 = vxpose.xlu0.b32.cont [6/16] 0.0, 128
          %965 = vxpose.xlu0.b32.cont [7/16] 0.0, 128
          %966 = vxpose.xlu0.b32.cont [8/16] 0.0, 128
          %967 = vxpose.xlu0.b32.cont [9/16] 0.0, 128
          %968 = vxpose.xlu0.b32.cont [10/16] 0.0, 128
          %969 = vxpose.xlu0.b32.cont [11/16] 0.0, 128
          %970 = vxpose.xlu0.b32.cont [12/16] 0.0, 128
          %971 = vxpose.xlu0.b32.cont [13/16] 0.0, 128
          %972 = vxpose.xlu0.b32.cont [14/16] 0.0, 128
          %973 = vxpose.xlu0.b32.cont [15/16] 0.0, 128
          %974 = vxpose.xlu0.b32.end [16/16] 0.0, 128
          %v975 = vpop.trf.xlu0
          %v976 = vpop.trf.xlu0
          %v977 = vpop.trf.xlu0
          %v978 = vpop.trf.xlu0
          %v979 = vpop.trf.xlu0
          %v980 = vpop.trf.xlu0
          %v981 = vpop.trf.xlu0
          %v982 = vpop.trf.xlu0
          %v983 = vpop.trf.xlu0
          %v984 = vpop.trf.xlu0
          %v985 = vpop.trf.xlu0
          %v986 = vpop.trf.xlu0
          %v987 = vpop.trf.xlu0
          %v988 = vpop.trf.xlu0
          %v989 = vpop.trf.xlu0
          %v990 = vpop.trf.xlu0
          %v991 = vpack.c.bf16 %v975, %v975
          %v992 = vpack.c.bf16 %v976, %v976
          %v993 = vpack.c.bf16 %v977, %v977
          %v994 = vpack.c.bf16 %v978, %v978
          %995 = vxpose.xlu0.b32.start [1/16] %v954, 128
          %996 = vxpose.xlu0.b32.cont [2/16] 0.0, 128
          %997 = vxpose.xlu0.b32.cont [3/16] 0.0, 128
          %998 = vxpose.xlu0.b32.cont [4/16] 0.0, 128
          %999 = vxpose.xlu0.b32.cont [5/16] 0.0, 128
          %1000 = vxpose.xlu0.b32.cont [6/16] 0.0, 128
          %1001 = vxpose.xlu0.b32.cont [7/16] 0.0, 128
          %1002 = vxpose.xlu0.b32.cont [8/16] 0.0, 128
          %1003 = vxpose.xlu0.b32.cont [9/16] 0.0, 128
          %1004 = vxpose.xlu0.b32.cont [10/16] 0.0, 128
          %1005 = vxpose.xlu0.b32.cont [11/16] 0.0, 128
          %1006 = vxpose.xlu0.b32.cont [12/16] 0.0, 128
          %1007 = vxpose.xlu0.b32.cont [13/16] 0.0, 128
          %1008 = vxpose.xlu0.b32.cont [14/16] 0.0, 128
          %1009 = vxpose.xlu0.b32.cont [15/16] 0.0, 128
          %1010 = vxpose.xlu0.b32.end [16/16] 0.0, 128
          %v1011 = vpop.trf.xlu0
          %v1012 = vpop.trf.xlu0
          %v1013 = vpop.trf.xlu0
          %v1014 = vpop.trf.xlu0
          %v1015 = vpop.trf.xlu0
          %v1016 = vpop.trf.xlu0
          %v1017 = vpop.trf.xlu0
          %v1018 = vpop.trf.xlu0
          %v1019 = vpop.trf.xlu0
          %v1020 = vpop.trf.xlu0
          %v1021 = vpop.trf.xlu0
          %v1022 = vpop.trf.xlu0
          %v1023 = vpop.trf.xlu0
          %v1024 = vpop.trf.xlu0
          %v1025 = vpop.trf.xlu0
          %v1026 = vpop.trf.xlu0
          %v1027 = vpack.c.bf16 %v1011, %v1011
          %v1028 = vpack.c.bf16 %v1012, %v1012
          %v1029 = vpack.c.bf16 %v1013, %v1013
          %v1030 = vpack.c.bf16 %v1014, %v1014
          %1031 = vst.msk [vmem:[#allocation3] sm:$0xf] %vm822, %v991
          %1032 = vst.msk [vmem:[#allocation3 + $0x4] sm:$0xf] %vm822, %v992
          %1033 = vst.msk [vmem:[#allocation3 + $0x8] sm:$0xf] %vm822, %v993
          %1034 = vst.msk [vmem:[#allocation3 + $0xc] sm:$0xf] %vm822, %v994
          %s1035 = scalar_lea.vmem [#allocation3], 16
          %1036 = vst.msk [vmem:[%s1035] sm:$0xf] %vm822, %v1027
          %1037 = vst.msk [vmem:[%s1035 + $0x4] sm:$0xf] %vm822, %v1028
          %1038 = vst.msk [vmem:[%s1035 + $0x8] sm:$0xf] %vm822, %v1029
          %1039 = vst.msk [vmem:[%s1035 + $0xc] sm:$0xf] %vm822, %v1030
        $region120: #{decoder_forward.1} parent=67 // pred_fallthru
          _
        %s1040 = smul.u32 %s42, 8
        %s1041 = scalar_lea.vmem %s518, %s1040 [#allocation4]
        %v1042 = vld [vmem:[%s1041] sm:$0xff]
        %v1043 = vpack.c.bf16 %v1042, %v1042
        %v1044 = vld [vmem:[#allocation9] sm:$0xf]
        %v1045 = vld [vmem:[#allocation9 + $0x4] sm:$0xf]
        %v1046 = vld [vmem:[#allocation9 + $0x8] sm:$0xf]
        %v1047 = vld [vmem:[#allocation9 + $0xc] sm:$0xf]
        %v1048 = vld [vmem:[#allocation10] sm:$0x1]
        %v1049 = vlaneseq
        %v1050 = vshrl.u32 %v1049, 7
        %v1051 = vsub.s32 0, %v1050
        %v1052 = vrot.slane %v1048, %v1051
        %v1057 = vunpack.c.l.b16 %v1044
        %v1058 = vunpack.c.l.b16 %v1045
        %v1059 = vunpack.c.l.b16 %v1046
        %v1060 = vunpack.c.l.b16 %v1047
        %v1061 = vpack.c.b16 %v1058, %v1057
        %v1062 = vpack.c.b16 %v1060, %v1059
        %vm1065 = vcmask 261120
        %v1067 = vsel %vm1065, %v1043, 0
        %1069 = vmatprep.subr.bf16.mxu0 0
        %1070 = vmatpush1.bf16.msra.mxu0 %v1061
        %1071 = vmatprep.subr.bf16.mxu0 0
        %1072 = vmatpush1.bf16.msra.mxu0 %v1062
        %1073 = vmatprep.subr.bf16.mxu0 0
        %1074 = vmatpush1.bf16.msra.mxu0 0
        %1075 = vmatprep.subr.bf16.mxu0 0
        %1076 = vmatpush1.bf16.msra.mxu0 0
        %1077 = vmatprep.subr.bf16.mxu0 0
        %1078 = vmatpush1.bf16.msra.mxu0 0
        %1079 = vmatprep.subr.bf16.mxu0 0
        %1080 = vmatpush1.bf16.msra.mxu0 0
        %1081 = vmatprep.subr.bf16.mxu0 0
        %1082 = vmatpush1.bf16.msra.mxu0 0
        %1083 = vmatprep.subr.bf16.mxu0 0
        %1084 = vmatpush1.bf16.msra.mxu0 0
        %1085 = vmatprep.subr.bf16.mxu0 0
        %1086 = vmatpush1.bf16.msra.mxu0 0
        %1087 = vmatprep.subr.bf16.mxu0 0
        %1088 = vmatpush1.bf16.msra.mxu0 0
        %1089 = vmatprep.subr.bf16.mxu0 0
        %1090 = vmatpush1.bf16.msra.mxu0 0
        %1091 = vmatprep.subr.bf16.mxu0 0
        %1092 = vmatpush1.bf16.msra.mxu0 0
        %1093 = vmatprep.subr.bf16.mxu0 0
        %1094 = vmatpush1.bf16.msra.mxu0 0
        %1095 = vmatprep.subr.bf16.mxu0 0
        %1096 = vmatpush1.bf16.msra.mxu0 0
        %1097 = vmatprep.subr.bf16.mxu0 0
        %1098 = vmatpush1.bf16.msra.mxu0 0
        %1099 = vmatprep.subr.bf16.mxu0 0
        %1100 = vmatpush1.bf16.msra.mxu0 0
        %1101 = vmatprep.mubr.bf16.mxu0 0
        %1102 = vmatmul.mubr.bf16.gmra.mrb[0].mxu0 %v1067
        %v1103 = vpop.f32.mrb[0].mxu0
        %v1104 = vadd.f32 %v1052, %v1103
        %v1105 = vpop.f32.mrb[0].mxu0
        %v1106 = vpop.f32.mrb[0].mxu0
        %v1107 = vpop.f32.mrb[0].mxu0
        %1108 = vdwg.mxu0
        %1109 = vxpose.xlu0.b32.start [1/16] %v1104, 128
        %1110 = vxpose.xlu0.b32.cont [2/16] 0.0, 128
        %1111 = vxpose.xlu0.b32.cont [3/16] 0.0, 128
        %1112 = vxpose.xlu0.b32.cont [4/16] 0.0, 128
        %1113 = vxpose.xlu0.b32.cont [5/16] 0.0, 128
        %1114 = vxpose.xlu0.b32.cont [6/16] 0.0, 128
        %1115 = vxpose.xlu0.b32.cont [7/16] 0.0, 128
        %1116 = vxpose.xlu0.b32.cont [8/16] 0.0, 128
        %1117 = vxpose.xlu0.b32.cont [9/16] 0.0, 128
        %1118 = vxpose.xlu0.b32.cont [10/16] 0.0, 128
        %1119 = vxpose.xlu0.b32.cont [11/16] 0.0, 128
        %1120 = vxpose.xlu0.b32.cont [12/16] 0.0, 128
        %1121 = vxpose.xlu0.b32.cont [13/16] 0.0, 128
        %1122 = vxpose.xlu0.b32.cont [14/16] 0.0, 128
        %1123 = vxpose.xlu0.b32.cont [15/16] 0.0, 128
        %1124 = vxpose.xlu0.b32.end [16/16] 0.0, 128
        %v1125 = vpop.trf.xlu0
        %v1126 = vpop.trf.xlu0
        %v1127 = vpop.trf.xlu0
        %v1128 = vpop.trf.xlu0
        %v1129 = vpop.trf.xlu0
        %v1130 = vpop.trf.xlu0
        %v1131 = vpop.trf.xlu0
        %v1132 = vpop.trf.xlu0
        %v1133 = vpop.trf.xlu0
        %v1134 = vpop.trf.xlu0
        %v1135 = vpop.trf.xlu0
        %v1136 = vpop.trf.xlu0
        %v1137 = vpop.trf.xlu0
        %v1138 = vpop.trf.xlu0
        %v1139 = vpop.trf.xlu0
        %v1140 = vpop.trf.xlu0
        %1141 = vxpose.xlu0.b32.start [1/16] %v1125, 128
        %1142 = vxpose.xlu0.b32.cont [2/16] 0.0, 128
        %1143 = vxpose.xlu0.b32.cont [3/16] 0.0, 128
        %1144 = vxpose.xlu0.b32.cont [4/16] 0.0, 128
        %1145 = vxpose.xlu0.b32.cont [5/16] 0.0, 128
        %1146 = vxpose.xlu0.b32.cont [6/16] 0.0, 128
        %1147 = vxpose.xlu0.b32.cont [7/16] 0.0, 128
        %1148 = vxpose.xlu0.b32.cont [8/16] 0.0, 128
        %1149 = vxpose.xlu0.b32.cont [9/16] 0.0, 128
        %1150 = vxpose.xlu0.b32.cont [10/16] 0.0, 128
        %1151 = vxpose.xlu0.b32.cont [11/16] 0.0, 128
        %1152 = vxpose.xlu0.b32.cont [12/16] 0.0, 128
        %1153 = vxpose.xlu0.b32.cont [13/16] 0.0, 128
        %1154 = vxpose.xlu0.b32.cont [14/16] 0.0, 128
        %1155 = vxpose.xlu0.b32.cont [15/16] 0.0, 128
        %1156 = vxpose.xlu0.b32.end [16/16] 0.0, 128
        %v1157 = vpop.trf.xlu0
        %v1158 = vpop.trf.xlu0
        %v1159 = vpop.trf.xlu0
        %v1160 = vpop.trf.xlu0
        %v1161 = vpop.trf.xlu0
        %v1162 = vpop.trf.xlu0
        %v1163 = vpop.trf.xlu0
        %v1164 = vpop.trf.xlu0
        %v1165 = vpop.trf.xlu0
        %v1166 = vpop.trf.xlu0
        %v1167 = vpop.trf.xlu0
        %v1168 = vpop.trf.xlu0
        %v1169 = vpop.trf.xlu0
        %v1170 = vpop.trf.xlu0
        %v1171 = vpop.trf.xlu0
        %v1172 = vpop.trf.xlu0
        %1173 = vxpose.xlu0.b32.start [1/16] %v1126, 128
        %1174 = vxpose.xlu0.b32.cont [2/16] 0.0, 128
        %1175 = vxpose.xlu0.b32.cont [3/16] 0.0, 128
        %1176 = vxpose.xlu0.b32.cont [4/16] 0.0, 128
        %1177 = vxpose.xlu0.b32.cont [5/16] 0.0, 128
        %1178 = vxpose.xlu0.b32.cont [6/16] 0.0, 128
        %1179 = vxpose.xlu0.b32.cont [7/16] 0.0, 128
        %1180 = vxpose.xlu0.b32.cont [8/16] 0.0, 128
        %1181 = vxpose.xlu0.b32.cont [9/16] 0.0, 128
        %1182 = vxpose.xlu0.b32.cont [10/16] 0.0, 128
        %1183 = vxpose.xlu0.b32.cont [11/16] 0.0, 128
        %1184 = vxpose.xlu0.b32.cont [12/16] 0.0, 128
        %1185 = vxpose.xlu0.b32.cont [13/16] 0.0, 128
        %1186 = vxpose.xlu0.b32.cont [14/16] 0.0, 128
        %1187 = vxpose.xlu0.b32.cont [15/16] 0.0, 128
        %1188 = vxpose.xlu0.b32.end [16/16] 0.0, 128
        %v1189 = vpop.trf.xlu0
        %v1190 = vpop.trf.xlu0
        %v1191 = vpop.trf.xlu0
        %v1192 = vpop.trf.xlu0
        %v1193 = vpop.trf.xlu0
        %v1194 = vpop.trf.xlu0
        %v1195 = vpop.trf.xlu0
        %v1196 = vpop.trf.xlu0
        %v1197 = vpop.trf.xlu0
        %v1198 = vpop.trf.xlu0
        %v1199 = vpop.trf.xlu0
        %v1200 = vpop.trf.xlu0
        %v1201 = vpop.trf.xlu0
        %v1202 = vpop.trf.xlu0
        %v1203 = vpop.trf.xlu0
        %v1204 = vpop.trf.xlu0
        %1205 = vxpose.xlu0.b32.start [1/16] %v1127, 128
        %1206 = vxpose.xlu0.b32.cont [2/16] 0.0, 128
        %1207 = vxpose.xlu0.b32.cont [3/16] 0.0, 128
        %1208 = vxpose.xlu0.b32.cont [4/16] 0.0, 128
        %1209 = vxpose.xlu0.b32.cont [5/16] 0.0, 128
        %1210 = vxpose.xlu0.b32.cont [6/16] 0.0, 128
        %1211 = vxpose.xlu0.b32.cont [7/16] 0.0, 128
        %1212 = vxpose.xlu0.b32.cont [8/16] 0.0, 128
        %1213 = vxpose.xlu0.b32.cont [9/16] 0.0, 128
        %1214 = vxpose.xlu0.b32.cont [10/16] 0.0, 128
        %1215 = vxpose.xlu0.b32.cont [11/16] 0.0, 128
        %1216 = vxpose.xlu0.b32.cont [12/16] 0.0, 128
        %1217 = vxpose.xlu0.b32.cont [13/16] 0.0, 128
        %1218 = vxpose.xlu0.b32.cont [14/16] 0.0, 128
        %1219 = vxpose.xlu0.b32.cont [15/16] 0.0, 128
        %1220 = vxpose.xlu0.b32.end [16/16] 0.0, 128
        %v1221 = vpop.trf.xlu0
        %v1222 = vpop.trf.xlu0
        %v1223 = vpop.trf.xlu0
        %v1224 = vpop.trf.xlu0
        %v1225 = vpop.trf.xlu0
        %v1226 = vpop.trf.xlu0
        %v1227 = vpop.trf.xlu0
        %v1228 = vpop.trf.xlu0
        %v1229 = vpop.trf.xlu0
        %v1230 = vpop.trf.xlu0
        %v1231 = vpop.trf.xlu0
        %v1232 = vpop.trf.xlu0
        %v1233 = vpop.trf.xlu0
        %v1234 = vpop.trf.xlu0
        %v1235 = vpop.trf.xlu0
        %v1236 = vpop.trf.xlu0
        %1237 = vxpose.xlu0.b32.start [1/16] %v1128, 128
        %1238 = vxpose.xlu0.b32.cont [2/16] 0.0, 128
        %1239 = vxpose.xlu0.b32.cont [3/16] 0.0, 128
        %1240 = vxpose.xlu0.b32.cont [4/16] 0.0, 128
        %1241 = vxpose.xlu0.b32.cont [5/16] 0.0, 128
        %1242 = vxpose.xlu0.b32.cont [6/16] 0.0, 128
        %1243 = vxpose.xlu0.b32.cont [7/16] 0.0, 128
        %1244 = vxpose.xlu0.b32.cont [8/16] 0.0, 128
        %1245 = vxpose.xlu0.b32.cont [9/16] 0.0, 128
        %1246 = vxpose.xlu0.b32.cont [10/16] 0.0, 128
        %1247 = vxpose.xlu0.b32.cont [11/16] 0.0, 128
        %1248 = vxpose.xlu0.b32.cont [12/16] 0.0, 128
        %1249 = vxpose.xlu0.b32.cont [13/16] 0.0, 128
        %1250 = vxpose.xlu0.b32.cont [14/16] 0.0, 128
        %1251 = vxpose.xlu0.b32.cont [15/16] 0.0, 128
        %1252 = vxpose.xlu0.b32.end [16/16] 0.0, 128
        %v1253 = vpop.trf.xlu0
        %v1254 = vpop.trf.xlu0
        %v1255 = vpop.trf.xlu0
        %v1256 = vpop.trf.xlu0
        %v1257 = vpop.trf.xlu0
        %v1258 = vpop.trf.xlu0
        %v1259 = vpop.trf.xlu0
        %v1260 = vpop.trf.xlu0
        %v1261 = vpop.trf.xlu0
        %v1262 = vpop.trf.xlu0
        %v1263 = vpop.trf.xlu0
        %v1264 = vpop.trf.xlu0
        %v1265 = vpop.trf.xlu0
        %v1266 = vpop.trf.xlu0
        %v1267 = vpop.trf.xlu0
        %v1268 = vpop.trf.xlu0
        %v1269 = vpack.c.bf16 %v1157, %v1157
        %v1270 = vpack.c.bf16 %v1189, %v1189
        %v1271 = vpack.c.bf16 %v1221, %v1221
        %v1272 = vpack.c.bf16 %v1253, %v1253
        %v1273 = vld [vmem:[#allocation2] sm:$0xf]
        %v1274 = vld [vmem:[#allocation2 + $0x4] sm:$0xf]
        %v1275 = vld [vmem:[#allocation2 + $0x8] sm:$0xf]
        %v1276 = vld [vmem:[#allocation2 + $0xc] sm:$0xf]
        %s1277 = scalar_lea.vmem [#allocation2], 16
        %v1278 = vld [vmem:[%s1277] sm:$0xf]
        %v1279 = vld [vmem:[%s1277 + $0x4] sm:$0xf]
        %v1280 = vld [vmem:[%s1277 + $0x8] sm:$0xf]
        %v1281 = vld [vmem:[%s1277 + $0xc] sm:$0xf]
        %v1282 = vlaneseq
        %v1283 = vshrl.u32 %v1282, 7
        %v1284 = vstv %s1040
        %v1285 = vadd.s32 %v1284, %v1283
        %v1286 = vlaneseq
        %v1287 = vand.u32 %v1286, 127
        %vm1288 = vcmp.gt.s32.totalorder %v1287, %v1285
        %v1289 = vsel %vm1288, -1e+09, 0.0
        %vm1290 = vcmask 64512
        %v1292 = vsel %vm1290, %v1269, 0
        %vm1294 = vcmask 1043456
        %v1296 = vsel %vm1294, %v1273, 0
        %1298 = vmatprep.subr.bf16.mxu0 0
        %1299 = vmatpush1.bf16.msra.mxu0 %v1296
        %1300 = vmatprep.subr.bf16.mxu0 0
        %1301 = vmatpush1.bf16.msra.mxu0 0
        %1302 = vmatprep.subr.bf16.mxu0 0
        %1303 = vmatpush1.bf16.msra.mxu0 0
        %1304 = vmatprep.subr.bf16.mxu0 0
        %1305 = vmatpush1.bf16.msra.mxu0 0
        %1306 = vmatprep.subr.bf16.mxu0 0
        %1307 = vmatpush1.bf16.msra.mxu0 0
        %1308 = vmatprep.subr.bf16.mxu0 0
        %1309 = vmatpush1.bf16.msra.mxu0 0
        %1310 = vmatprep.subr.bf16.mxu0 0
        %1311 = vmatpush1.bf16.msra.mxu0 0
        %1312 = vmatprep.subr.bf16.mxu0 0
        %1313 = vmatpush1.bf16.msra.mxu0 0
        %1314 = vmatprep.subr.bf16.mxu0 0
        %1315 = vmatpush1.bf16.msra.mxu0 0
        %1316 = vmatprep.subr.bf16.mxu0 0
        %1317 = vmatpush1.bf16.msra.mxu0 0
        %1318 = vmatprep.subr.bf16.mxu0 0
        %1319 = vmatpush1.bf16.msra.mxu0 0
        %1320 = vmatprep.subr.bf16.mxu0 0
        %1321 = vmatpush1.bf16.msra.mxu0 0
        %1322 = vmatprep.subr.bf16.mxu0 0
        %1323 = vmatpush1.bf16.msra.mxu0 0
        %1324 = vmatprep.subr.bf16.mxu0 0
        %1325 = vmatpush1.bf16.msra.mxu0 0
        %1326 = vmatprep.subr.bf16.mxu0 0
        %1327 = vmatpush1.bf16.msra.mxu0 0
        %1328 = vmatprep.subr.bf16.mxu0 0
        %1329 = vmatpush1.bf16.msra.mxu0 0
        %1330 = vmatprep.mubr.bf16.mxu0 0
        %1331 = vmatmul.mubr.bf16.gmra.mrb[0].mxu0 %v1292
        %v1332 = vpop.f32.mrb[0].mxu0
        %v1333 = vadd.f32 %v1289, %v1332
        %v1334 = vpop.f32.mrb[0].mxu0
        %v1335 = vpop.f32.mrb[0].mxu0
        %v1336 = vpop.f32.mrb[0].mxu0
        %1337 = vdwg.mxu0
        %v1339 = vsel %vm1290, %v1270, 0
        %v1342 = vsel %vm1294, %v1274, 0
        %1344 = vmatprep.subr.bf16.mxu0 0
        %1345 = vmatpush1.bf16.msra.mxu0 %v1342
        %1346 = vmatprep.subr.bf16.mxu0 0
        %1347 = vmatpush1.bf16.msra.mxu0 0
        %1348 = vmatprep.subr.bf16.mxu0 0
        %1349 = vmatpush1.bf16.msra.mxu0 0
        %1350 = vmatprep.subr.bf16.mxu0 0
        %1351 = vmatpush1.bf16.msra.mxu0 0
        %1352 = vmatprep.subr.bf16.mxu0 0
        %1353 = vmatpush1.bf16.msra.mxu0 0
        %1354 = vmatprep.subr.bf16.mxu0 0
        %1355 = vmatpush1.bf16.msra.mxu0 0
        %1356 = vmatprep.subr.bf16.mxu0 0
        %1357 = vmatpush1.bf16.msra.mxu0 0
        %1358 = vmatprep.subr.bf16.mxu0 0
        %1359 = vmatpush1.bf16.msra.mxu0 0
        %1360 = vmatprep.subr.bf16.mxu0 0
        %1361 = vmatpush1.bf16.msra.mxu0 0
        %1362 = vmatprep.subr.bf16.mxu0 0
        %1363 = vmatpush1.bf16.msra.mxu0 0
        %1364 = vmatprep.subr.bf16.mxu0 0
        %1365 = vmatpush1.bf16.msra.mxu0 0
        %1366 = vmatprep.subr.bf16.mxu0 0
        %1367 = vmatpush1.bf16.msra.mxu0 0
        %1368 = vmatprep.subr.bf16.mxu0 0
        %1369 = vmatpush1.bf16.msra.mxu0 0
        %1370 = vmatprep.subr.bf16.mxu0 0
        %1371 = vmatpush1.bf16.msra.mxu0 0
        %1372 = vmatprep.subr.bf16.mxu0 0
        %1373 = vmatpush1.bf16.msra.mxu0 0
        %1374 = vmatprep.subr.bf16.mxu0 0
        %1375 = vmatpush1.bf16.msra.mxu0 0
        %1376 = vmatprep.mubr.bf16.mxu0 0
        %1377 = vmatmul.mubr.bf16.gmra.mrb[0].mxu0 %v1339
        %v1378 = vpop.f32.mrb[0].mxu0
        %v1379 = vadd.f32 %v1289, %v1378
        %v1380 = vpop.f32.mrb[0].mxu0
        %v1381 = vpop.f32.mrb[0].mxu0
        %v1382 = vpop.f32.mrb[0].mxu0
        %1383 = vdwg.mxu0
        %v1385 = vsel %vm1290, %v1271, 0
        %v1388 = vsel %vm1294, %v1275, 0
        %1390 = vmatprep.subr.bf16.mxu0 0
        %1391 = vmatpush1.bf16.msra.mxu0 %v1388
        %1392 = vmatprep.subr.bf16.mxu0 0
        %1393 = vmatpush1.bf16.msra.mxu0 0
        %1394 = vmatprep.subr.bf16.mxu0 0
        %1395 = vmatpush1.bf16.msra.mxu0 0
        %1396 = vmatprep.subr.bf16.mxu0 0
        %1397 = vmatpush1.bf16.msra.mxu0 0
        %1398 = vmatprep.subr.bf16.mxu0 0
        %1399 = vmatpush1.bf16.msra.mxu0 0
        %1400 = vmatprep.subr.bf16.mxu0 0
        %1401 = vmatpush1.bf16.msra.mxu0 0
        %1402 = vmatprep.subr.bf16.mxu0 0
        %1403 = vmatpush1.bf16.msra.mxu0 0
        %1404 = vmatprep.subr.bf16.mxu0 0
        %1405 = vmatpush1.bf16.msra.mxu0 0
        %1406 = vmatprep.subr.bf16.mxu0 0
        %1407 = vmatpush1.bf16.msra.mxu0 0
        %1408 = vmatprep.subr.bf16.mxu0 0
        %1409 = vmatpush1.bf16.msra.mxu0 0
        %1410 = vmatprep.subr.bf16.mxu0 0
        %1411 = vmatpush1.bf16.msra.mxu0 0
        %1412 = vmatprep.subr.bf16.mxu0 0
        %1413 = vmatpush1.bf16.msra.mxu0 0
        %1414 = vmatprep.subr.bf16.mxu0 0
        %1415 = vmatpush1.bf16.msra.mxu0 0
        %1416 = vmatprep.subr.bf16.mxu0 0
        %1417 = vmatpush1.bf16.msra.mxu0 0
        %1418 = vmatprep.subr.bf16.mxu0 0
        %1419 = vmatpush1.bf16.msra.mxu0 0
        %1420 = vmatprep.subr.bf16.mxu0 0
        %1421 = vmatpush1.bf16.msra.mxu0 0
        %1422 = vmatprep.mubr.bf16.mxu0 0
        %1423 = vmatmul.mubr.bf16.gmra.mrb[0].mxu0 %v1385
        %v1424 = vpop.f32.mrb[0].mxu0
        %v1425 = vadd.f32 %v1289, %v1424
        %v1426 = vpop.f32.mrb[0].mxu0
        %v1427 = vpop.f32.mrb[0].mxu0
        %v1428 = vpop.f32.mrb[0].mxu0
        %1429 = vdwg.mxu0
        %v1431 = vsel %vm1290, %v1272, 0
        %v1434 = vsel %vm1294, %v1276, 0
        %1436 = vmatprep.subr.bf16.mxu0 0
        %1437 = vmatpush1.bf16.msra.mxu0 %v1434
        %1438 = vmatprep.subr.bf16.mxu0 0
        %1439 = vmatpush1.bf16.msra.mxu0 0
        %1440 = vmatprep.subr.bf16.mxu0 0
        %1441 = vmatpush1.bf16.msra.mxu0 0
        %1442 = vmatprep.subr.bf16.mxu0 0
        %1443 = vmatpush1.bf16.msra.mxu0 0
        %1444 = vmatprep.subr.bf16.mxu0 0
        %1445 = vmatpush1.bf16.msra.mxu0 0
        %1446 = vmatprep.subr.bf16.mxu0 0
        %1447 = vmatpush1.bf16.msra.mxu0 0
        %1448 = vmatprep.subr.bf16.mxu0 0
        %1449 = vmatpush1.bf16.msra.mxu0 0
        %1450 = vmatprep.subr.bf16.mxu0 0
        %1451 = vmatpush1.bf16.msra.mxu0 0
        %1452 = vmatprep.subr.bf16.mxu0 0
        %1453 = vmatpush1.bf16.msra.mxu0 0
        %1454 = vmatprep.subr.bf16.mxu0 0
        %1455 = vmatpush1.bf16.msra.mxu0 0
        %1456 = vmatprep.subr.bf16.mxu0 0
        %1457 = vmatpush1.bf16.msra.mxu0 0
        %1458 = vmatprep.subr.bf16.mxu0 0
        %1459 = vmatpush1.bf16.msra.mxu0 0
        %1460 = vmatprep.subr.bf16.mxu0 0
        %1461 = vmatpush1.bf16.msra.mxu0 0
        %1462 = vmatprep.subr.bf16.mxu0 0
        %1463 = vmatpush1.bf16.msra.mxu0 0
        %1464 = vmatprep.subr.bf16.mxu0 0
        %1465 = vmatpush1.bf16.msra.mxu0 0
        %1466 = vmatprep.subr.bf16.mxu0 0
        %1467 = vmatpush1.bf16.msra.mxu0 0
        %1468 = vmatprep.mubr.bf16.mxu0 0
        %1469 = vmatmul.mubr.bf16.gmra.mrb[0].mxu0 %v1431
        %v1470 = vpop.f32.mrb[0].mxu0
        %v1471 = vadd.f32 %v1289, %v1470
        %v1472 = vpop.f32.mrb[0].mxu0
        %v1473 = vpop.f32.mrb[0].mxu0
        %v1474 = vpop.f32.mrb[0].mxu0
        %1475 = vdwg.mxu0
        %v1476 = vsel %vm1290, %v1333, -inf
        %1477 = vmax.xlane.f32.xlu0 %v1476
        %v1478 = vpop.xlane.xlu0 %1477
        %v1479 = vsel %vm1290, %v1379, -inf
        %1480 = vmax.xlane.f32.xlu0 %v1479
        %v1481 = vpop.xlane.xlu0 %1480
        %v1482 = vsel %vm1290, %v1425, -inf
        %1483 = vmax.xlane.f32.xlu0 %v1482
        %v1484 = vpop.xlane.xlu0 %1483
        %v1485 = vsel %vm1290, %v1471, -inf
        %1486 = vmax.xlane.f32.xlu0 %v1485
        %v1487 = vpop.xlane.xlu0 %1486
        %v1488 = vsub.f32 %v1333, %v1478
        %v1489 = vsub.f32 %v1379, %v1481
        %v1490 = vsub.f32 %v1425, %v1484
        %v1491 = vsub.f32 %v1471, %v1487
        %v1492 = vmul.f32 %v1488, 1.442695
        %v1493 = vpow.pop %v1492
        %v1494 = vmul.f32 %v1489, 1.442695
        %v1495 = vpow.pop %v1494
        %v1496 = vmul.f32 %v1490, 1.442695
        %v1497 = vpow.pop %v1496
        %v1498 = vmul.f32 %v1491, 1.442695
        %v1499 = vpow.pop %v1498
        %v1500 = vsel %vm1290, %v1493, 0.0
        %1501 = vadd.xlane.f32.xlu0 %v1500
        %v1502 = vpop.xlane.xlu0 %1501
        %v1503 = vsel %vm1290, %v1495, 0.0
        %1504 = vadd.xlane.f32.xlu0 %v1503
        %v1505 = vpop.xlane.xlu0 %1504
        %v1506 = vsel %vm1290, %v1497, 0.0
        %1507 = vadd.xlane.f32.xlu0 %v1506
        %v1508 = vpop.xlane.xlu0 %1507
        %v1509 = vsel %vm1290, %v1499, 0.0
        %1510 = vadd.xlane.f32.xlu0 %v1509
        %v1511 = vpop.xlane.xlu0 %1510
        %v1512 = vrcp.pop %v1502
        %v1513 = vrcp.pop %v1505
        %v1514 = vrcp.pop %v1508
        %v1515 = vrcp.pop %v1511
        %v1516 = vmul.f32 %v1493, %v1512
        %v1517 = vmul.f32 %v1495, %v1513
        %v1518 = vmul.f32 %v1497, %v1514
        %v1519 = vmul.f32 %v1499, %v1515
        %v1520 = vpack.c.bf16 %v1516, %v1516
        %v1521 = vpack.c.bf16 %v1517, %v1517
        %v1522 = vpack.c.bf16 %v1518, %v1518
        %v1523 = vpack.c.bf16 %v1519, %v1519
        %v1525 = vsel %vm1290, %v1278, 0
        %v1528 = vsel %vm1290, %v1520, 0
        %1530 = vmatprep.subr.bf16.mxu0 0
        %1531 = vmatpush1.bf16.xpose.msra.mxu0 %v1528
        %1532 = vmatprep.subr.bf16.mxu0 0
        %1533 = vmatpush1.bf16.xpose.msra.mxu0 0
        %1534 = vmatprep.subr.bf16.mxu0 0
        %1535 = vmatpush1.bf16.xpose.msra.mxu0 0
        %1536 = vmatprep.subr.bf16.mxu0 0
        %1537 = vmatpush1.bf16.xpose.msra.mxu0 0
        %1538 = vmatprep.subr.bf16.mxu0 0
        %1539 = vmatpush1.bf16.xpose.msra.mxu0 0
        %1540 = vmatprep.subr.bf16.mxu0 0
        %1541 = vmatpush1.bf16.xpose.msra.mxu0 0
        %1542 = vmatprep.subr.bf16.mxu0 0
        %1543 = vmatpush1.bf16.xpose.msra.mxu0 0
        %1544 = vmatprep.subr.bf16.mxu0 0
        %1545 = vmatpush1.bf16.xpose.msra.mxu0 0
        %1546 = vmatprep.subr.bf16.mxu0 0
        %1547 = vmatpush1.bf16.xpose.msra.mxu0 0
        %1548 = vmatprep.subr.bf16.mxu0 0
        %1549 = vmatpush1.bf16.xpose.msra.mxu0 0
        %1550 = vmatprep.subr.bf16.mxu0 0
        %1551 = vmatpush1.bf16.xpose.msra.mxu0 0
        %1552 = vmatprep.subr.bf16.mxu0 0
        %1553 = vmatpush1.bf16.xpose.msra.mxu0 0
        %1554 = vmatprep.subr.bf16.mxu0 0
        %1555 = vmatpush1.bf16.xpose.msra.mxu0 0
        %1556 = vmatprep.subr.bf16.mxu0 0
        %1557 = vmatpush1.bf16.xpose.msra.mxu0 0
        %1558 = vmatprep.subr.bf16.mxu0 0
        %1559 = vmatpush1.bf16.xpose.msra.mxu0 0
        %1560 = vmatprep.subr.bf16.mxu0 0
        %1561 = vmatpush1.bf16.xpose.msra.mxu0 0
        %1562 = vmatprep.mubr.bf16.mxu0 0
        %1563 = vmatmul.mubr.bf16.gmra.mrb[0].mxu0 %v1525
        %v1564 = vpop.f32.mrb[0].mxu0
        %v1565 = vadd.f32 0.0, %v1564
        %v1566 = vpop.f32.mrb[0].mxu0
        %v1567 = vpop.f32.mrb[0].mxu0
        %v1568 = vpop.f32.mrb[0].mxu0
        %1569 = vdwg.mxu0
        %v1571 = vsel %vm1290, %v1279, 0
        %v1574 = vsel %vm1290, %v1521, 0
        %1576 = vmatprep.subr.bf16.mxu0 0
        %1577 = vmatpush1.bf16.xpose.msra.mxu0 %v1574
        %1578 = vmatprep.subr.bf16.mxu0 0
        %1579 = vmatpush1.bf16.xpose.msra.mxu0 0
        %1580 = vmatprep.subr.bf16.mxu0 0
        %1581 = vmatpush1.bf16.xpose.msra.mxu0 0
        %1582 = vmatprep.subr.bf16.mxu0 0
        %1583 = vmatpush1.bf16.xpose.msra.mxu0 0
        %1584 = vmatprep.subr.bf16.mxu0 0
        %1585 = vmatpush1.bf16.xpose.msra.mxu0 0
        %1586 = vmatprep.subr.bf16.mxu0 0
        %1587 = vmatpush1.bf16.xpose.msra.mxu0 0
        %1588 = vmatprep.subr.bf16.mxu0 0
        %1589 = vmatpush1.bf16.xpose.msra.mxu0 0
        %1590 = vmatprep.subr.bf16.mxu0 0
        %1591 = vmatpush1.bf16.xpose.msra.mxu0 0
        %1592 = vmatprep.subr.bf16.mxu0 0
        %1593 = vmatpush1.bf16.xpose.msra.mxu0 0
        %1594 = vmatprep.subr.bf16.mxu0 0
        %1595 = vmatpush1.bf16.xpose.msra.mxu0 0
        %1596 = vmatprep.subr.bf16.mxu0 0
        %1597 = vmatpush1.bf16.xpose.msra.mxu0 0
        %1598 = vmatprep.subr.bf16.mxu0 0
        %1599 = vmatpush1.bf16.xpose.msra.mxu0 0
        %1600 = vmatprep.subr.bf16.mxu0 0
        %1601 = vmatpush1.bf16.xpose.msra.mxu0 0
        %1602 = vmatprep.subr.bf16.mxu0 0
        %1603 = vmatpush1.bf16.xpose.msra.mxu0 0
        %1604 = vmatprep.subr.bf16.mxu0 0
        %1605 = vmatpush1.bf16.xpose.msra.mxu0 0
        %1606 = vmatprep.subr.bf16.mxu0 0
        %1607 = vmatpush1.bf16.xpose.msra.mxu0 0
        %1608 = vmatprep.mubr.bf16.mxu0 0
        %1609 = vmatmul.mubr.bf16.gmra.mrb[0].mxu0 %v1571
        %v1610 = vpop.f32.mrb[0].mxu0
        %v1611 = vadd.f32 0.0, %v1610
        %v1612 = vpop.f32.mrb[0].mxu0
        %v1613 = vpop.f32.mrb[0].mxu0
        %v1614 = vpop.f32.mrb[0].mxu0
        %1615 = vdwg.mxu0
        %v1617 = vsel %vm1290, %v1280, 0
        %v1620 = vsel %vm1290, %v1522, 0
        %1622 = vmatprep.subr.bf16.mxu0 0
        %1623 = vmatpush1.bf16.xpose.msra.mxu0 %v1620
        %1624 = vmatprep.subr.bf16.mxu0 0
        %1625 = vmatpush1.bf16.xpose.msra.mxu0 0
        %1626 = vmatprep.subr.bf16.mxu0 0
        %1627 = vmatpush1.bf16.xpose.msra.mxu0 0
        %1628 = vmatprep.subr.bf16.mxu0 0
        %1629 = vmatpush1.bf16.xpose.msra.mxu0 0
        %1630 = vmatprep.subr.bf16.mxu0 0
        %1631 = vmatpush1.bf16.xpose.msra.mxu0 0
        %1632 = vmatprep.subr.bf16.mxu0 0
        %1633 = vmatpush1.bf16.xpose.msra.mxu0 0
        %1634 = vmatprep.subr.bf16.mxu0 0
        %1635 = vmatpush1.bf16.xpose.msra.mxu0 0
        %1636 = vmatprep.subr.bf16.mxu0 0
        %1637 = vmatpush1.bf16.xpose.msra.mxu0 0
        %1638 = vmatprep.subr.bf16.mxu0 0
        %1639 = vmatpush1.bf16.xpose.msra.mxu0 0
        %1640 = vmatprep.subr.bf16.mxu0 0
        %1641 = vmatpush1.bf16.xpose.msra.mxu0 0
        %1642 = vmatprep.subr.bf16.mxu0 0
        %1643 = vmatpush1.bf16.xpose.msra.mxu0 0
        %1644 = vmatprep.subr.bf16.mxu0 0
        %1645 = vmatpush1.bf16.xpose.msra.mxu0 0
        %1646 = vmatprep.subr.bf16.mxu0 0
        %1647 = vmatpush1.bf16.xpose.msra.mxu0 0
        %1648 = vmatprep.subr.bf16.mxu0 0
        %1649 = vmatpush1.bf16.xpose.msra.mxu0 0
        %1650 = vmatprep.subr.bf16.mxu0 0
        %1651 = vmatpush1.bf16.xpose.msra.mxu0 0
        %1652 = vmatprep.subr.bf16.mxu0 0
        %1653 = vmatpush1.bf16.xpose.msra.mxu0 0
        %1654 = vmatprep.mubr.bf16.mxu0 0
        %1655 = vmatmul.mubr.bf16.gmra.mrb[0].mxu0 %v1617
        %v1656 = vpop.f32.mrb[0].mxu0
        %v1657 = vadd.f32 0.0, %v1656
        %v1658 = vpop.f32.mrb[0].mxu0
        %v1659 = vpop.f32.mrb[0].mxu0
        %v1660 = vpop.f32.mrb[0].mxu0
        %1661 = vdwg.mxu0
        %v1663 = vsel %vm1290, %v1281, 0
        %v1666 = vsel %vm1290, %v1523, 0
        %1668 = vmatprep.subr.bf16.mxu0 0
        %1669 = vmatpush1.bf16.xpose.msra.mxu0 %v1666
        %1670 = vmatprep.subr.bf16.mxu0 0
        %1671 = vmatpush1.bf16.xpose.msra.mxu0 0
        %1672 = vmatprep.subr.bf16.mxu0 0
        %1673 = vmatpush1.bf16.xpose.msra.mxu0 0
        %1674 = vmatprep.subr.bf16.mxu0 0
        %1675 = vmatpush1.bf16.xpose.msra.mxu0 0
        %1676 = vmatprep.subr.bf16.mxu0 0
        %1677 = vmatpush1.bf16.xpose.msra.mxu0 0
        %1678 = vmatprep.subr.bf16.mxu0 0
        %1679 = vmatpush1.bf16.xpose.msra.mxu0 0
        %1680 = vmatprep.subr.bf16.mxu0 0
        %1681 = vmatpush1.bf16.xpose.msra.mxu0 0
        %1682 = vmatprep.subr.bf16.mxu0 0
        %1683 = vmatpush1.bf16.xpose.msra.mxu0 0
        %1684 = vmatprep.subr.bf16.mxu0 0
        %1685 = vmatpush1.bf16.xpose.msra.mxu0 0
        %1686 = vmatprep.subr.bf16.mxu0 0
        %1687 = vmatpush1.bf16.xpose.msra.mxu0 0
        %1688 = vmatprep.subr.bf16.mxu0 0
        %1689 = vmatpush1.bf16.xpose.msra.mxu0 0
        %1690 = vmatprep.subr.bf16.mxu0 0
        %1691 = vmatpush1.bf16.xpose.msra.mxu0 0
        %1692 = vmatprep.subr.bf16.mxu0 0
        %1693 = vmatpush1.bf16.xpose.msra.mxu0 0
        %1694 = vmatprep.subr.bf16.mxu0 0
        %1695 = vmatpush1.bf16.xpose.msra.mxu0 0
        %1696 = vmatprep.subr.bf16.mxu0 0
        %1697 = vmatpush1.bf16.xpose.msra.mxu0 0
        %1698 = vmatprep.subr.bf16.mxu0 0
        %1699 = vmatpush1.bf16.xpose.msra.mxu0 0
        %1700 = vmatprep.mubr.bf16.mxu0 0
        %1701 = vmatmul.mubr.bf16.gmra.mrb[0].mxu0 %v1663
        %v1702 = vpop.f32.mrb[0].mxu0
        %v1703 = vadd.f32 0.0, %v1702
        %v1704 = vpop.f32.mrb[0].mxu0
        %v1705 = vpop.f32.mrb[0].mxu0
        %v1706 = vpop.f32.mrb[0].mxu0
        %1707 = vdwg.mxu0
        %1708 = vxpose.xlu0.b32.start [1/16] %v1565, 128
        %1709 = vxpose.xlu0.b32.cont [2/16] %v1611, 128
        %1710 = vxpose.xlu0.b32.cont [3/16] %v1657, 128
        %1711 = vxpose.xlu0.b32.cont [4/16] %v1703, 128
        %1712 = vxpose.xlu0.b32.cont [5/16] 0.0, 128
        %1713 = vxpose.xlu0.b32.cont [6/16] 0.0, 128
        %1714 = vxpose.xlu0.b32.cont [7/16] 0.0, 128
        %1715 = vxpose.xlu0.b32.cont [8/16] 0.0, 128
        %1716 = vxpose.xlu0.b32.cont [9/16] 0.0, 128
        %1717 = vxpose.xlu0.b32.cont [10/16] 0.0, 128
        %1718 = vxpose.xlu0.b32.cont [11/16] 0.0, 128
        %1719 = vxpose.xlu0.b32.cont [12/16] 0.0, 128
        %1720 = vxpose.xlu0.b32.cont [13/16] 0.0, 128
        %1721 = vxpose.xlu0.b32.cont [14/16] 0.0, 128
        %1722 = vxpose.xlu0.b32.cont [15/16] 0.0, 128
        %1723 = vxpose.xlu0.b32.end [16/16] 0.0, 128
        %v1724 = vpop.trf.xlu0
        %v1725 = vpop.trf.xlu0
        %v1726 = vpop.trf.xlu0
        %v1727 = vpop.trf.xlu0
        %v1728 = vpop.trf.xlu0
        %v1729 = vpop.trf.xlu0
        %v1730 = vpop.trf.xlu0
        %v1731 = vpop.trf.xlu0
        %v1732 = vpop.trf.xlu0
        %v1733 = vpop.trf.xlu0
        %v1734 = vpop.trf.xlu0
        %v1735 = vpop.trf.xlu0
        %v1736 = vpop.trf.xlu0
        %v1737 = vpop.trf.xlu0
        %v1738 = vpop.trf.xlu0
        %v1739 = vpop.trf.xlu0
        %v1740 = vpack.c.bf16 %v1724, %v1724
        %s1741 = scalar_lea.vmem [#allocation9], 48
        %v1742 = vld [vmem:[%s1741] sm:$0xf]
        %v1743 = vld [vmem:[%s1741 + $0x4] sm:$0xf]
        %v1744 = vld [vmem:[%s1741 + $0x8] sm:$0xf]
        %v1745 = vld [vmem:[%s1741 + $0xc] sm:$0xf]
        %v1746 = vld [vmem:[#allocation10 + $0x3] sm:$0x1]
        %v1747 = vlaneseq
        %v1748 = vshrl.u32 %v1747, 7
        %v1749 = vsub.s32 0, %v1748
        %v1750 = vrot.slane %v1746, %v1749
        %v1755 = vunpack.c.l.b16 %v1742
        %v1756 = vunpack.c.l.b16 %v1743
        %v1757 = vunpack.c.l.b16 %v1744
        %v1758 = vunpack.c.l.b16 %v1745
        %v1759 = vpack.c.b16 %v1756, %v1755
        %v1760 = vpack.c.b16 %v1758, %v1757
        %v1764 = vsel %vm1065, %v1740, 0
        %1766 = vmatprep.subr.bf16.mxu0 0
        %1767 = vmatpush1.bf16.msra.mxu0 %v1759
        %1768 = vmatprep.subr.bf16.mxu0 0
        %1769 = vmatpush1.bf16.msra.mxu0 %v1760
        %1770 = vmatprep.subr.bf16.mxu0 0
        %1771 = vmatpush1.bf16.msra.mxu0 0
        %1772 = vmatprep.subr.bf16.mxu0 0
        %1773 = vmatpush1.bf16.msra.mxu0 0
        %1774 = vmatprep.subr.bf16.mxu0 0
        %1775 = vmatpush1.bf16.msra.mxu0 0
        %1776 = vmatprep.subr.bf16.mxu0 0
        %1777 = vmatpush1.bf16.msra.mxu0 0
        %1778 = vmatprep.subr.bf16.mxu0 0
        %1779 = vmatpush1.bf16.msra.mxu0 0
        %1780 = vmatprep.subr.bf16.mxu0 0
        %1781 = vmatpush1.bf16.msra.mxu0 0
        %1782 = vmatprep.subr.bf16.mxu0 0
        %1783 = vmatpush1.bf16.msra.mxu0 0
        %1784 = vmatprep.subr.bf16.mxu0 0
        %1785 = vmatpush1.bf16.msra.mxu0 0
        %1786 = vmatprep.subr.bf16.mxu0 0
        %1787 = vmatpush1.bf16.msra.mxu0 0
        %1788 = vmatprep.subr.bf16.mxu0 0
        %1789 = vmatpush1.bf16.msra.mxu0 0
        %1790 = vmatprep.subr.bf16.mxu0 0
        %1791 = vmatpush1.bf16.msra.mxu0 0
        %1792 = vmatprep.subr.bf16.mxu0 0
        %1793 = vmatpush1.bf16.msra.mxu0 0
        %1794 = vmatprep.subr.bf16.mxu0 0
        %1795 = vmatpush1.bf16.msra.mxu0 0
        %1796 = vmatprep.subr.bf16.mxu0 0
        %1797 = vmatpush1.bf16.msra.mxu0 0
        %1798 = vmatprep.mubr.bf16.mxu0 0
        %1799 = vmatmul.mubr.bf16.gmra.mrb[0].mxu0 %v1764
        %v1800 = vpop.f32.mrb[0].mxu0
        %v1801 = vadd.f32 %v1750, %v1800
        %v1802 = vpop.f32.mrb[0].mxu0
        %v1803 = vpop.f32.mrb[0].mxu0
        %v1804 = vpop.f32.mrb[0].mxu0
        %1805 = vdwg.mxu0
        %v1806 = vadd.f32 %v1042, %v1801
        %v1807 = vld [vmem:[#allocation21] sm:$0x1]
        %v1808 = vld [vmem:[#allocation22] sm:$0x1]
        %v1809 = vsel %vm1065, %v1806, 0.0
        %1810 = vadd.xlane.f32.xlu0 %v1809
        %v1811 = vpop.xlane.xlu0 %1810
        %v1812 = vrcp.pop 32.0
        %v1813 = vmul.f32 %v1811, %v1812
        %v1814 = vsub.f32 %v1806, %v1813
        %v1815 = vmul.f32 %v1814, %v1814
        %v1816 = vsel %vm1065, %v1815, 0.0
        %1817 = vadd.xlane.f32.xlu0 %v1816
        %v1818 = vpop.xlane.xlu0 %1817
        %v1819 = vmul.f32 %v1818, %v1812
        %v1820 = vadd.f32 %v1819, 1e-05
        %v1821 = vrsqrt.pop %v1820
        %v1822 = vmul.f32 %v1814, %v1821
        %v1823 = vlaneseq
        %v1824 = vshrl.u32 %v1823, 7
        %v1825 = vsub.s32 0, %v1824
        %v1826 = vrot.slane %v1807, %v1825
        %v1827 = vmul.f32 %v1822, %v1826
        %v1828 = vlaneseq
        %v1829 = vshrl.u32 %v1828, 7
        %v1830 = vsub.s32 0, %v1829
        %v1831 = vrot.slane %v1808, %v1830
        %v1832 = vadd.f32 %v1827, %v1831
        %v1833 = vpack.c.bf16 %v1832, %v1832
        %v1834 = vld [vmem:[#allocation12] sm:$0xf]
        %v1835 = vld [vmem:[#allocation12 + $0x4] sm:$0xf]
        %v1836 = vld [vmem:[#allocation12 + $0x8] sm:$0xf]
        %v1837 = vld [vmem:[#allocation12 + $0xc] sm:$0xf]
        %v1838 = vld [vmem:[#allocation13] sm:$0x1]
        %v1839 = vlaneseq
        %v1840 = vshrl.u32 %v1839, 7
        %v1841 = vsub.s32 0, %v1840
        %v1842 = vrot.slane %v1838, %v1841
        %v1847 = vunpack.c.l.b16 %v1834
        %v1848 = vunpack.c.l.b16 %v1835
        %v1849 = vunpack.c.l.b16 %v1836
        %v1850 = vunpack.c.l.b16 %v1837
        %v1851 = vpack.c.b16 %v1848, %v1847
        %v1852 = vpack.c.b16 %v1850, %v1849
        %v1856 = vsel %vm1065, %v1833, 0
        %1858 = vmatprep.subr.bf16.mxu0 0
        %1859 = vmatpush1.bf16.msra.mxu0 %v1851
        %1860 = vmatprep.subr.bf16.mxu0 0
        %1861 = vmatpush1.bf16.msra.mxu0 %v1852
        %1862 = vmatprep.subr.bf16.mxu0 0
        %1863 = vmatpush1.bf16.msra.mxu0 0
        %1864 = vmatprep.subr.bf16.mxu0 0
        %1865 = vmatpush1.bf16.msra.mxu0 0
        %1866 = vmatprep.subr.bf16.mxu0 0
        %1867 = vmatpush1.bf16.msra.mxu0 0
        %1868 = vmatprep.subr.bf16.mxu0 0
        %1869 = vmatpush1.bf16.msra.mxu0 0
        %1870 = vmatprep.subr.bf16.mxu0 0
        %1871 = vmatpush1.bf16.msra.mxu0 0
        %1872 = vmatprep.subr.bf16.mxu0 0
        %1873 = vmatpush1.bf16.msra.mxu0 0
        %1874 = vmatprep.subr.bf16.mxu0 0
        %1875 = vmatpush1.bf16.msra.mxu0 0
        %1876 = vmatprep.subr.bf16.mxu0 0
        %1877 = vmatpush1.bf16.msra.mxu0 0
        %1878 = vmatprep.subr.bf16.mxu0 0
        %1879 = vmatpush1.bf16.msra.mxu0 0
        %1880 = vmatprep.subr.bf16.mxu0 0
        %1881 = vmatpush1.bf16.msra.mxu0 0
        %1882 = vmatprep.subr.bf16.mxu0 0
        %1883 = vmatpush1.bf16.msra.mxu0 0
        %1884 = vmatprep.subr.bf16.mxu0 0
        %1885 = vmatpush1.bf16.msra.mxu0 0
        %1886 = vmatprep.subr.bf16.mxu0 0
        %1887 = vmatpush1.bf16.msra.mxu0 0
        %1888 = vmatprep.subr.bf16.mxu0 0
        %1889 = vmatpush1.bf16.msra.mxu0 0
        %1890 = vmatprep.mubr.bf16.mxu0 0
        %1891 = vmatmul.mubr.bf16.gmra.mrb[0].mxu0 %v1856
        %v1892 = vpop.f32.mrb[0].mxu0
        %v1893 = vadd.f32 %v1842, %v1892
        %v1894 = vpop.f32.mrb[0].mxu0
        %v1895 = vpop.f32.mrb[0].mxu0
        %v1896 = vpop.f32.mrb[0].mxu0
        %1897 = vdwg.mxu0
        %1898 = vxpose.xlu0.b32.start [1/16] %v1893, 128
        %1899 = vxpose.xlu0.b32.cont [2/16] 0.0, 128
        %1900 = vxpose.xlu0.b32.cont [3/16] 0.0, 128
        %1901 = vxpose.xlu0.b32.cont [4/16] 0.0, 128
        %1902 = vxpose.xlu0.b32.cont [5/16] 0.0, 128
        %1903 = vxpose.xlu0.b32.cont [6/16] 0.0, 128
        %1904 = vxpose.xlu0.b32.cont [7/16] 0.0, 128
        %1905 = vxpose.xlu0.b32.cont [8/16] 0.0, 128
        %1906 = vxpose.xlu0.b32.cont [9/16] 0.0, 128
        %1907 = vxpose.xlu0.b32.cont [10/16] 0.0, 128
        %1908 = vxpose.xlu0.b32.cont [11/16] 0.0, 128
        %1909 = vxpose.xlu0.b32.cont [12/16] 0.0, 128
        %1910 = vxpose.xlu0.b32.cont [13/16] 0.0, 128
        %1911 = vxpose.xlu0.b32.cont [14/16] 0.0, 128
        %1912 = vxpose.xlu0.b32.cont [15/16] 0.0, 128
        %1913 = vxpose.xlu0.b32.end [16/16] 0.0, 128
        %v1914 = vpop.trf.xlu0
        %v1915 = vpop.trf.xlu0
        %v1916 = vpop.trf.xlu0
        %v1917 = vpop.trf.xlu0
        %v1918 = vpop.trf.xlu0
        %v1919 = vpop.trf.xlu0
        %v1920 = vpop.trf.xlu0
        %v1921 = vpop.trf.xlu0
        %v1922 = vpop.trf.xlu0
        %v1923 = vpop.trf.xlu0
        %v1924 = vpop.trf.xlu0
        %v1925 = vpop.trf.xlu0
        %v1926 = vpop.trf.xlu0
        %v1927 = vpop.trf.xlu0
        %v1928 = vpop.trf.xlu0
        %v1929 = vpop.trf.xlu0
        %1930 = vxpose.xlu0.b32.start [1/16] %v1914, 128
        %1931 = vxpose.xlu0.b32.cont [2/16] 0.0, 128
        %1932 = vxpose.xlu0.b32.cont [3/16] 0.0, 128
        %1933 = vxpose.xlu0.b32.cont [4/16] 0.0, 128
        %1934 = vxpose.xlu0.b32.cont [5/16] 0.0, 128
        %1935 = vxpose.xlu0.b32.cont [6/16] 0.0, 128
        %1936 = vxpose.xlu0.b32.cont [7/16] 0.0, 128
        %1937 = vxpose.xlu0.b32.cont [8/16] 0.0, 128
        %1938 = vxpose.xlu0.b32.cont [9/16] 0.0, 128
        %1939 = vxpose.xlu0.b32.cont [10/16] 0.0, 128
        %1940 = vxpose.xlu0.b32.cont [11/16] 0.0, 128
        %1941 = vxpose.xlu0.b32.cont [12/16] 0.0, 128
        %1942 = vxpose.xlu0.b32.cont [13/16] 0.0, 128
        %1943 = vxpose.xlu0.b32.cont [14/16] 0.0, 128
        %1944 = vxpose.xlu0.b32.cont [15/16] 0.0, 128
        %1945 = vxpose.xlu0.b32.end [16/16] 0.0, 128
        %v1946 = vpop.trf.xlu0
        %v1947 = vpop.trf.xlu0
        %v1948 = vpop.trf.xlu0
        %v1949 = vpop.trf.xlu0
        %v1950 = vpop.trf.xlu0
        %v1951 = vpop.trf.xlu0
        %v1952 = vpop.trf.xlu0
        %v1953 = vpop.trf.xlu0
        %v1954 = vpop.trf.xlu0
        %v1955 = vpop.trf.xlu0
        %v1956 = vpop.trf.xlu0
        %v1957 = vpop.trf.xlu0
        %v1958 = vpop.trf.xlu0
        %v1959 = vpop.trf.xlu0
        %v1960 = vpop.trf.xlu0
        %v1961 = vpop.trf.xlu0
        %1962 = vxpose.xlu0.b32.start [1/16] %v1915, 128
        %1963 = vxpose.xlu0.b32.cont [2/16] 0.0, 128
        %1964 = vxpose.xlu0.b32.cont [3/16] 0.0, 128
        %1965 = vxpose.xlu0.b32.cont [4/16] 0.0, 128
        %1966 = vxpose.xlu0.b32.cont [5/16] 0.0, 128
        %1967 = vxpose.xlu0.b32.cont [6/16] 0.0, 128
        %1968 = vxpose.xlu0.b32.cont [7/16] 0.0, 128
        %1969 = vxpose.xlu0.b32.cont [8/16] 0.0, 128
        %1970 = vxpose.xlu0.b32.cont [9/16] 0.0, 128
        %1971 = vxpose.xlu0.b32.cont [10/16] 0.0, 128
        %1972 = vxpose.xlu0.b32.cont [11/16] 0.0, 128
        %1973 = vxpose.xlu0.b32.cont [12/16] 0.0, 128
        %1974 = vxpose.xlu0.b32.cont [13/16] 0.0, 128
        %1975 = vxpose.xlu0.b32.cont [14/16] 0.0, 128
        %1976 = vxpose.xlu0.b32.cont [15/16] 0.0, 128
        %1977 = vxpose.xlu0.b32.end [16/16] 0.0, 128
        %v1978 = vpop.trf.xlu0
        %v1979 = vpop.trf.xlu0
        %v1980 = vpop.trf.xlu0
        %v1981 = vpop.trf.xlu0
        %v1982 = vpop.trf.xlu0
        %v1983 = vpop.trf.xlu0
        %v1984 = vpop.trf.xlu0
        %v1985 = vpop.trf.xlu0
        %v1986 = vpop.trf.xlu0
        %v1987 = vpop.trf.xlu0
        %v1988 = vpop.trf.xlu0
        %v1989 = vpop.trf.xlu0
        %v1990 = vpop.trf.xlu0
        %v1991 = vpop.trf.xlu0
        %v1992 = vpop.trf.xlu0
        %v1993 = vpop.trf.xlu0
        %1994 = vxpose.xlu0.b32.start [1/16] %v1916, 128
        %1995 = vxpose.xlu0.b32.cont [2/16] 0.0, 128
        %1996 = vxpose.xlu0.b32.cont [3/16] 0.0, 128
        %1997 = vxpose.xlu0.b32.cont [4/16] 0.0, 128
        %1998 = vxpose.xlu0.b32.cont [5/16] 0.0, 128
        %1999 = vxpose.xlu0.b32.cont [6/16] 0.0, 128
        %2000 = vxpose.xlu0.b32.cont [7/16] 0.0, 128
        %2001 = vxpose.xlu0.b32.cont [8/16] 0.0, 128
        %2002 = vxpose.xlu0.b32.cont [9/16] 0.0, 128
        %2003 = vxpose.xlu0.b32.cont [10/16] 0.0, 128
        %2004 = vxpose.xlu0.b32.cont [11/16] 0.0, 128
        %2005 = vxpose.xlu0.b32.cont [12/16] 0.0, 128
        %2006 = vxpose.xlu0.b32.cont [13/16] 0.0, 128
        %2007 = vxpose.xlu0.b32.cont [14/16] 0.0, 128
        %2008 = vxpose.xlu0.b32.cont [15/16] 0.0, 128
        %2009 = vxpose.xlu0.b32.end [16/16] 0.0, 128
        %v2010 = vpop.trf.xlu0
        %v2011 = vpop.trf.xlu0
        %v2012 = vpop.trf.xlu0
        %v2013 = vpop.trf.xlu0
        %v2014 = vpop.trf.xlu0
        %v2015 = vpop.trf.xlu0
        %v2016 = vpop.trf.xlu0
        %v2017 = vpop.trf.xlu0
        %v2018 = vpop.trf.xlu0
        %v2019 = vpop.trf.xlu0
        %v2020 = vpop.trf.xlu0
        %v2021 = vpop.trf.xlu0
        %v2022 = vpop.trf.xlu0
        %v2023 = vpop.trf.xlu0
        %v2024 = vpop.trf.xlu0
        %v2025 = vpop.trf.xlu0
        %2026 = vxpose.xlu0.b32.start [1/16] %v1917, 128
        %2027 = vxpose.xlu0.b32.cont [2/16] 0.0, 128
        %2028 = vxpose.xlu0.b32.cont [3/16] 0.0, 128
        %2029 = vxpose.xlu0.b32.cont [4/16] 0.0, 128
        %2030 = vxpose.xlu0.b32.cont [5/16] 0.0, 128
        %2031 = vxpose.xlu0.b32.cont [6/16] 0.0, 128
        %2032 = vxpose.xlu0.b32.cont [7/16] 0.0, 128
        %2033 = vxpose.xlu0.b32.cont [8/16] 0.0, 128
        %2034 = vxpose.xlu0.b32.cont [9/16] 0.0, 128
        %2035 = vxpose.xlu0.b32.cont [10/16] 0.0, 128
        %2036 = vxpose.xlu0.b32.cont [11/16] 0.0, 128
        %2037 = vxpose.xlu0.b32.cont [12/16] 0.0, 128
        %2038 = vxpose.xlu0.b32.cont [13/16] 0.0, 128
        %2039 = vxpose.xlu0.b32.cont [14/16] 0.0, 128
        %2040 = vxpose.xlu0.b32.cont [15/16] 0.0, 128
        %2041 = vxpose.xlu0.b32.end [16/16] 0.0, 128
        %v2042 = vpop.trf.xlu0
        %v2043 = vpop.trf.xlu0
        %v2044 = vpop.trf.xlu0
        %v2045 = vpop.trf.xlu0
        %v2046 = vpop.trf.xlu0
        %v2047 = vpop.trf.xlu0
        %v2048 = vpop.trf.xlu0
        %v2049 = vpop.trf.xlu0
        %v2050 = vpop.trf.xlu0
        %v2051 = vpop.trf.xlu0
        %v2052 = vpop.trf.xlu0
        %v2053 = vpop.trf.xlu0
        %v2054 = vpop.trf.xlu0
        %v2055 = vpop.trf.xlu0
        %v2056 = vpop.trf.xlu0
        %v2057 = vpop.trf.xlu0
        %v2058 = vpack.c.bf16 %v1946, %v1946
        %v2059 = vpack.c.bf16 %v1978, %v1978
        %v2060 = vpack.c.bf16 %v2010, %v2010
        %v2061 = vpack.c.bf16 %v2042, %v2042
        %v2062 = vld [vmem:[#allocation3] sm:$0xf]
        %v2063 = vld [vmem:[#allocation3 + $0x4] sm:$0xf]
        %v2064 = vld [vmem:[#allocation3 + $0x8] sm:$0xf]
        %v2065 = vld [vmem:[#allocation3 + $0xc] sm:$0xf]
        %s2066 = scalar_lea.vmem [#allocation3], 16
        %v2067 = vld [vmem:[%s2066] sm:$0xf]
        %v2068 = vld [vmem:[%s2066 + $0x4] sm:$0xf]
        %v2069 = vld [vmem:[%s2066 + $0x8] sm:$0xf]
        %v2070 = vld [vmem:[%s2066 + $0xc] sm:$0xf]
        %v2072 = vsel %vm1290, %v2058, 0
        %v2075 = vsel %vm1294, %v2062, 0
        %2077 = vmatprep.subr.bf16.mxu0 0
        %2078 = vmatpush1.bf16.msra.mxu0 %v2075
        %2079 = vmatprep.subr.bf16.mxu0 0
        %2080 = vmatpush1.bf16.msra.mxu0 0
        %2081 = vmatprep.subr.bf16.mxu0 0
        %2082 = vmatpush1.bf16.msra.mxu0 0
        %2083 = vmatprep.subr.bf16.mxu0 0
        %2084 = vmatpush1.bf16.msra.mxu0 0
        %2085 = vmatprep.subr.bf16.mxu0 0
        %2086 = vmatpush1.bf16.msra.mxu0 0
        %2087 = vmatprep.subr.bf16.mxu0 0
        %2088 = vmatpush1.bf16.msra.mxu0 0
        %2089 = vmatprep.subr.bf16.mxu0 0
        %2090 = vmatpush1.bf16.msra.mxu0 0
        %2091 = vmatprep.subr.bf16.mxu0 0
        %2092 = vmatpush1.bf16.msra.mxu0 0
        %2093 = vmatprep.subr.bf16.mxu0 0
        %2094 = vmatpush1.bf16.msra.mxu0 0
        %2095 = vmatprep.subr.bf16.mxu0 0
        %2096 = vmatpush1.bf16.msra.mxu0 0
        %2097 = vmatprep.subr.bf16.mxu0 0
        %2098 = vmatpush1.bf16.msra.mxu0 0
        %2099 = vmatprep.subr.bf16.mxu0 0
        %2100 = vmatpush1.bf16.msra.mxu0 0
        %2101 = vmatprep.subr.bf16.mxu0 0
        %2102 = vmatpush1.bf16.msra.mxu0 0
        %2103 = vmatprep.subr.bf16.mxu0 0
        %2104 = vmatpush1.bf16.msra.mxu0 0
        %2105 = vmatprep.subr.bf16.mxu0 0
        %2106 = vmatpush1.bf16.msra.mxu0 0
        %2107 = vmatprep.subr.bf16.mxu0 0
        %2108 = vmatpush1.bf16.msra.mxu0 0
        %2109 = vmatprep.mubr.bf16.mxu0 0
        %2110 = vmatmul.mubr.bf16.gmra.mrb[0].mxu0 %v2072
        %v2111 = vpop.f32.mrb[0].mxu0
        %v2112 = vadd.f32 0.0, %v2111
        %v2113 = vpop.f32.mrb[0].mxu0
        %v2114 = vpop.f32.mrb[0].mxu0
        %v2115 = vpop.f32.mrb[0].mxu0
        %2116 = vdwg.mxu0
        %v2118 = vsel %vm1290, %v2059, 0
        %v2121 = vsel %vm1294, %v2063, 0
        %2123 = vmatprep.subr.bf16.mxu0 0
        %2124 = vmatpush1.bf16.msra.mxu0 %v2121
        %2125 = vmatprep.subr.bf16.mxu0 0
        %2126 = vmatpush1.bf16.msra.mxu0 0
        %2127 = vmatprep.subr.bf16.mxu0 0
        %2128 = vmatpush1.bf16.msra.mxu0 0
        %2129 = vmatprep.subr.bf16.mxu0 0
        %2130 = vmatpush1.bf16.msra.mxu0 0
        %2131 = vmatprep.subr.bf16.mxu0 0
        %2132 = vmatpush1.bf16.msra.mxu0 0
        %2133 = vmatprep.subr.bf16.mxu0 0
        %2134 = vmatpush1.bf16.msra.mxu0 0
        %2135 = vmatprep.subr.bf16.mxu0 0
        %2136 = vmatpush1.bf16.msra.mxu0 0
        %2137 = vmatprep.subr.bf16.mxu0 0
        %2138 = vmatpush1.bf16.msra.mxu0 0
        %2139 = vmatprep.subr.bf16.mxu0 0
        %2140 = vmatpush1.bf16.msra.mxu0 0
        %2141 = vmatprep.subr.bf16.mxu0 0
        %2142 = vmatpush1.bf16.msra.mxu0 0
        %2143 = vmatprep.subr.bf16.mxu0 0
        %2144 = vmatpush1.bf16.msra.mxu0 0
        %2145 = vmatprep.subr.bf16.mxu0 0
        %2146 = vmatpush1.bf16.msra.mxu0 0
        %2147 = vmatprep.subr.bf16.mxu0 0
        %2148 = vmatpush1.bf16.msra.mxu0 0
        %2149 = vmatprep.subr.bf16.mxu0 0
        %2150 = vmatpush1.bf16.msra.mxu0 0
        %2151 = vmatprep.subr.bf16.mxu0 0
        %2152 = vmatpush1.bf16.msra.mxu0 0
        %2153 = vmatprep.subr.bf16.mxu0 0
        %2154 = vmatpush1.bf16.msra.mxu0 0
        %2155 = vmatprep.mubr.bf16.mxu0 0
        %2156 = vmatmul.mubr.bf16.gmra.mrb[0].mxu0 %v2118
        %v2157 = vpop.f32.mrb[0].mxu0
        %v2158 = vadd.f32 0.0, %v2157
        %v2159 = vpop.f32.mrb[0].mxu0
        %v2160 = vpop.f32.mrb[0].mxu0
        %v2161 = vpop.f32.mrb[0].mxu0
        %2162 = vdwg.mxu0
        %v2164 = vsel %vm1290, %v2060, 0
        %v2167 = vsel %vm1294, %v2064, 0
        %2169 = vmatprep.subr.bf16.mxu0 0
        %2170 = vmatpush1.bf16.msra.mxu0 %v2167
        %2171 = vmatprep.subr.bf16.mxu0 0
        %2172 = vmatpush1.bf16.msra.mxu0 0
        %2173 = vmatprep.subr.bf16.mxu0 0
        %2174 = vmatpush1.bf16.msra.mxu0 0
        %2175 = vmatprep.subr.bf16.mxu0 0
        %2176 = vmatpush1.bf16.msra.mxu0 0
        %2177 = vmatprep.subr.bf16.mxu0 0
        %2178 = vmatpush1.bf16.msra.mxu0 0
        %2179 = vmatprep.subr.bf16.mxu0 0
        %2180 = vmatpush1.bf16.msra.mxu0 0
        %2181 = vmatprep.subr.bf16.mxu0 0
        %2182 = vmatpush1.bf16.msra.mxu0 0
        %2183 = vmatprep.subr.bf16.mxu0 0
        %2184 = vmatpush1.bf16.msra.mxu0 0
        %2185 = vmatprep.subr.bf16.mxu0 0
        %2186 = vmatpush1.bf16.msra.mxu0 0
        %2187 = vmatprep.subr.bf16.mxu0 0
        %2188 = vmatpush1.bf16.msra.mxu0 0
        %2189 = vmatprep.subr.bf16.mxu0 0
        %2190 = vmatpush1.bf16.msra.mxu0 0
        %2191 = vmatprep.subr.bf16.mxu0 0
        %2192 = vmatpush1.bf16.msra.mxu0 0
        %2193 = vmatprep.subr.bf16.mxu0 0
        %2194 = vmatpush1.bf16.msra.mxu0 0
        %2195 = vmatprep.subr.bf16.mxu0 0
        %2196 = vmatpush1.bf16.msra.mxu0 0
        %2197 = vmatprep.subr.bf16.mxu0 0
        %2198 = vmatpush1.bf16.msra.mxu0 0
        %2199 = vmatprep.subr.bf16.mxu0 0
        %2200 = vmatpush1.bf16.msra.mxu0 0
        %2201 = vmatprep.mubr.bf16.mxu0 0
        %2202 = vmatmul.mubr.bf16.gmra.mrb[0].mxu0 %v2164
        %v2203 = vpop.f32.mrb[0].mxu0
        %v2204 = vadd.f32 0.0, %v2203
        %v2205 = vpop.f32.mrb[0].mxu0
        %v2206 = vpop.f32.mrb[0].mxu0
        %v2207 = vpop.f32.mrb[0].mxu0
        %2208 = vdwg.mxu0
        %v2210 = vsel %vm1290, %v2061, 0
        %v2213 = vsel %vm1294, %v2065, 0
        %2215 = vmatprep.subr.bf16.mxu0 0
        %2216 = vmatpush1.bf16.msra.mxu0 %v2213
        %2217 = vmatprep.subr.bf16.mxu0 0
        %2218 = vmatpush1.bf16.msra.mxu0 0
        %2219 = vmatprep.subr.bf16.mxu0 0
        %2220 = vmatpush1.bf16.msra.mxu0 0
        %2221 = vmatprep.subr.bf16.mxu0 0
        %2222 = vmatpush1.bf16.msra.mxu0 0
        %2223 = vmatprep.subr.bf16.mxu0 0
        %2224 = vmatpush1.bf16.msra.mxu0 0
        %2225 = vmatprep.subr.bf16.mxu0 0
        %2226 = vmatpush1.bf16.msra.mxu0 0
        %2227 = vmatprep.subr.bf16.mxu0 0
        %2228 = vmatpush1.bf16.msra.mxu0 0
        %2229 = vmatprep.subr.bf16.mxu0 0
        %2230 = vmatpush1.bf16.msra.mxu0 0
        %2231 = vmatprep.subr.bf16.mxu0 0
        %2232 = vmatpush1.bf16.msra.mxu0 0
        %2233 = vmatprep.subr.bf16.mxu0 0
        %2234 = vmatpush1.bf16.msra.mxu0 0
        %2235 = vmatprep.subr.bf16.mxu0 0
        %2236 = vmatpush1.bf16.msra.mxu0 0
        %2237 = vmatprep.subr.bf16.mxu0 0
        %2238 = vmatpush1.bf16.msra.mxu0 0
        %2239 = vmatprep.subr.bf16.mxu0 0
        %2240 = vmatpush1.bf16.msra.mxu0 0
        %2241 = vmatprep.subr.bf16.mxu0 0
        %2242 = vmatpush1.bf16.msra.mxu0 0
        %2243 = vmatprep.subr.bf16.mxu0 0
        %2244 = vmatpush1.bf16.msra.mxu0 0
        %2245 = vmatprep.subr.bf16.mxu0 0
        %2246 = vmatpush1.bf16.msra.mxu0 0
        %2247 = vmatprep.mubr.bf16.mxu0 0
        %2248 = vmatmul.mubr.bf16.gmra.mrb[0].mxu0 %v2210
        %v2249 = vpop.f32.mrb[0].mxu0
        %v2250 = vadd.f32 0.0, %v2249
        %v2251 = vpop.f32.mrb[0].mxu0
        %v2252 = vpop.f32.mrb[0].mxu0
        %v2253 = vpop.f32.mrb[0].mxu0
        %2254 = vdwg.mxu0
        %v2255 = vsel %vm1290, %v2112, -inf
        %2256 = vmax.xlane.f32.xlu0 %v2255
        %v2257 = vpop.xlane.xlu0 %2256
        %v2258 = vsel %vm1290, %v2158, -inf
        %2259 = vmax.xlane.f32.xlu0 %v2258
        %v2260 = vpop.xlane.xlu0 %2259
        %v2261 = vsel %vm1290, %v2204, -inf
        %2262 = vmax.xlane.f32.xlu0 %v2261
        %v2263 = vpop.xlane.xlu0 %2262
        %v2264 = vsel %vm1290, %v2250, -inf
        %2265 = vmax.xlane.f32.xlu0 %v2264
        %v2266 = vpop.xlane.xlu0 %2265
        %v2267 = vsub.f32 %v2112, %v2257
        %v2268 = vsub.f32 %v2158, %v2260
        %v2269 = vsub.f32 %v2204, %v2263
        %v2270 = vsub.f32 %v2250, %v2266
        %v2271 = vmul.f32 %v2267, 1.442695
        %v2272 = vpow.pop %v2271
        %v2273 = vmul.f32 %v2268, 1.442695
        %v2274 = vpow.pop %v2273
        %v2275 = vmul.f32 %v2269, 1.442695
        %v2276 = vpow.pop %v2275
        %v2277 = vmul.f32 %v2270, 1.442695
        %v2278 = vpow.pop %v2277
        %v2279 = vsel %vm1290, %v2272, 0.0
        %2280 = vadd.xlane.f32.xlu0 %v2279
        %v2281 = vpop.xlane.xlu0 %2280
        %v2282 = vsel %vm1290, %v2274, 0.0
        %2283 = vadd.xlane.f32.xlu0 %v2282
        %v2284 = vpop.xlane.xlu0 %2283
        %v2285 = vsel %vm1290, %v2276, 0.0
        %2286 = vadd.xlane.f32.xlu0 %v2285
        %v2287 = vpop.xlane.xlu0 %2286
        %v2288 = vsel %vm1290, %v2278, 0.0
        %2289 = vadd.xlane.f32.xlu0 %v2288
        %v2290 = vpop.xlane.xlu0 %2289
        %v2291 = vrcp.pop %v2281
        %v2292 = vrcp.pop %v2284
        %v2293 = vrcp.pop %v2287
        %v2294 = vrcp.pop %v2290
        %v2295 = vmul.f32 %v2272, %v2291
        %v2296 = vmul.f32 %v2274, %v2292
        %v2297 = vmul.f32 %v2276, %v2293
        %v2298 = vmul.f32 %v2278, %v2294
        %v2299 = vpack.c.bf16 %v2295, %v2295
        %v2300 = vpack.c.bf16 %v2296, %v2296
        %v2301 = vpack.c.bf16 %v2297, %v2297
        %v2302 = vpack.c.bf16 %v2298, %v2298
        %v2304 = vsel %vm1290, %v2067, 0
        %v2307 = vsel %vm1290, %v2299, 0
        %2309 = vmatprep.subr.bf16.mxu0 0
        %2310 = vmatpush1.bf16.xpose.msra.mxu0 %v2307
        %2311 = vmatprep.subr.bf16.mxu0 0
        %2312 = vmatpush1.bf16.xpose.msra.mxu0 0
        %2313 = vmatprep.subr.bf16.mxu0 0
        %2314 = vmatpush1.bf16.xpose.msra.mxu0 0
        %2315 = vmatprep.subr.bf16.mxu0 0
        %2316 = vmatpush1.bf16.xpose.msra.mxu0 0
        %2317 = vmatprep.subr.bf16.mxu0 0
        %2318 = vmatpush1.bf16.xpose.msra.mxu0 0
        %2319 = vmatprep.subr.bf16.mxu0 0
        %2320 = vmatpush1.bf16.xpose.msra.mxu0 0
        %2321 = vmatprep.subr.bf16.mxu0 0
        %2322 = vmatpush1.bf16.xpose.msra.mxu0 0
        %2323 = vmatprep.subr.bf16.mxu0 0
        %2324 = vmatpush1.bf16.xpose.msra.mxu0 0
        %2325 = vmatprep.subr.bf16.mxu0 0
        %2326 = vmatpush1.bf16.xpose.msra.mxu0 0
        %2327 = vmatprep.subr.bf16.mxu0 0
        %2328 = vmatpush1.bf16.xpose.msra.mxu0 0
        %2329 = vmatprep.subr.bf16.mxu0 0
        %2330 = vmatpush1.bf16.xpose.msra.mxu0 0
        %2331 = vmatprep.subr.bf16.mxu0 0
        %2332 = vmatpush1.bf16.xpose.msra.mxu0 0
        %2333 = vmatprep.subr.bf16.mxu0 0
        %2334 = vmatpush1.bf16.xpose.msra.mxu0 0
        %2335 = vmatprep.subr.bf16.mxu0 0
        %2336 = vmatpush1.bf16.xpose.msra.mxu0 0
        %2337 = vmatprep.subr.bf16.mxu0 0
        %2338 = vmatpush1.bf16.xpose.msra.mxu0 0
        %2339 = vmatprep.subr.bf16.mxu0 0
        %2340 = vmatpush1.bf16.xpose.msra.mxu0 0
        %2341 = vmatprep.mubr.bf16.mxu0 0
        %2342 = vmatmul.mubr.bf16.gmra.mrb[0].mxu0 %v2304
        %v2343 = vpop.f32.mrb[0].mxu0
        %v2344 = vadd.f32 0.0, %v2343
        %v2345 = vpop.f32.mrb[0].mxu0
        %v2346 = vpop.f32.mrb[0].mxu0
        %v2347 = vpop.f32.mrb[0].mxu0
        %2348 = vdwg.mxu0
        %v2350 = vsel %vm1290, %v2068, 0
        %v2353 = vsel %vm1290, %v2300, 0
        %2355 = vmatprep.subr.bf16.mxu0 0
        %2356 = vmatpush1.bf16.xpose.msra.mxu0 %v2353
        %2357 = vmatprep.subr.bf16.mxu0 0
        %2358 = vmatpush1.bf16.xpose.msra.mxu0 0
        %2359 = vmatprep.subr.bf16.mxu0 0
        %2360 = vmatpush1.bf16.xpose.msra.mxu0 0
        %2361 = vmatprep.subr.bf16.mxu0 0
        %2362 = vmatpush1.bf16.xpose.msra.mxu0 0
        %2363 = vmatprep.subr.bf16.mxu0 0
        %2364 = vmatpush1.bf16.xpose.msra.mxu0 0
        %2365 = vmatprep.subr.bf16.mxu0 0
        %2366 = vmatpush1.bf16.xpose.msra.mxu0 0
        %2367 = vmatprep.subr.bf16.mxu0 0
        %2368 = vmatpush1.bf16.xpose.msra.mxu0 0
        %2369 = vmatprep.subr.bf16.mxu0 0
        %2370 = vmatpush1.bf16.xpose.msra.mxu0 0
        %2371 = vmatprep.subr.bf16.mxu0 0
        %2372 = vmatpush1.bf16.xpose.msra.mxu0 0
        %2373 = vmatprep.subr.bf16.mxu0 0
        %2374 = vmatpush1.bf16.xpose.msra.mxu0 0
        %2375 = vmatprep.subr.bf16.mxu0 0
        %2376 = vmatpush1.bf16.xpose.msra.mxu0 0
        %2377 = vmatprep.subr.bf16.mxu0 0
        %2378 = vmatpush1.bf16.xpose.msra.mxu0 0
        %2379 = vmatprep.subr.bf16.mxu0 0
        %2380 = vmatpush1.bf16.xpose.msra.mxu0 0
        %2381 = vmatprep.subr.bf16.mxu0 0
        %2382 = vmatpush1.bf16.xpose.msra.mxu0 0
        %2383 = vmatprep.subr.bf16.mxu0 0
        %2384 = vmatpush1.bf16.xpose.msra.mxu0 0
        %2385 = vmatprep.subr.bf16.mxu0 0
        %2386 = vmatpush1.bf16.xpose.msra.mxu0 0
        %2387 = vmatprep.mubr.bf16.mxu0 0
        %2388 = vmatmul.mubr.bf16.gmra.mrb[0].mxu0 %v2350
        %v2389 = vpop.f32.mrb[0].mxu0
        %v2390 = vadd.f32 0.0, %v2389
        %v2391 = vpop.f32.mrb[0].mxu0
        %v2392 = vpop.f32.mrb[0].mxu0
        %v2393 = vpop.f32.mrb[0].mxu0
        %2394 = vdwg.mxu0
        %v2396 = vsel %vm1290, %v2069, 0
        %v2399 = vsel %vm1290, %v2301, 0
        %2401 = vmatprep.subr.bf16.mxu0 0
        %2402 = vmatpush1.bf16.xpose.msra.mxu0 %v2399
        %2403 = vmatprep.subr.bf16.mxu0 0
        %2404 = vmatpush1.bf16.xpose.msra.mxu0 0
        %2405 = vmatprep.subr.bf16.mxu0 0
        %2406 = vmatpush1.bf16.xpose.msra.mxu0 0
        %2407 = vmatprep.subr.bf16.mxu0 0
        %2408 = vmatpush1.bf16.xpose.msra.mxu0 0
        %2409 = vmatprep.subr.bf16.mxu0 0
        %2410 = vmatpush1.bf16.xpose.msra.mxu0 0
        %2411 = vmatprep.subr.bf16.mxu0 0
        %2412 = vmatpush1.bf16.xpose.msra.mxu0 0
        %2413 = vmatprep.subr.bf16.mxu0 0
        %2414 = vmatpush1.bf16.xpose.msra.mxu0 0
        %2415 = vmatprep.subr.bf16.mxu0 0
        %2416 = vmatpush1.bf16.xpose.msra.mxu0 0
        %2417 = vmatprep.subr.bf16.mxu0 0
        %2418 = vmatpush1.bf16.xpose.msra.mxu0 0
        %2419 = vmatprep.subr.bf16.mxu0 0
        %2420 = vmatpush1.bf16.xpose.msra.mxu0 0
        %2421 = vmatprep.subr.bf16.mxu0 0
        %2422 = vmatpush1.bf16.xpose.msra.mxu0 0
        %2423 = vmatprep.subr.bf16.mxu0 0
        %2424 = vmatpush1.bf16.xpose.msra.mxu0 0
        %2425 = vmatprep.subr.bf16.mxu0 0
        %2426 = vmatpush1.bf16.xpose.msra.mxu0 0
        %2427 = vmatprep.subr.bf16.mxu0 0
        %2428 = vmatpush1.bf16.xpose.msra.mxu0 0
        %2429 = vmatprep.subr.bf16.mxu0 0
        %2430 = vmatpush1.bf16.xpose.msra.mxu0 0
        %2431 = vmatprep.subr.bf16.mxu0 0
        %2432 = vmatpush1.bf16.xpose.msra.mxu0 0
        %2433 = vmatprep.mubr.bf16.mxu0 0
        %2434 = vmatmul.mubr.bf16.gmra.mrb[0].mxu0 %v2396
        %v2435 = vpop.f32.mrb[0].mxu0
        %v2436 = vadd.f32 0.0, %v2435
        %v2437 = vpop.f32.mrb[0].mxu0
        %v2438 = vpop.f32.mrb[0].mxu0
        %v2439 = vpop.f32.mrb[0].mxu0
        %2440 = vdwg.mxu0
        %v2442 = vsel %vm1290, %v2070, 0
        %v2445 = vsel %vm1290, %v2302, 0
        %2447 = vmatprep.subr.bf16.mxu0 0
        %2448 = vmatpush1.bf16.xpose.msra.mxu0 %v2445
        %2449 = vmatprep.subr.bf16.mxu0 0
        %2450 = vmatpush1.bf16.xpose.msra.mxu0 0
        %2451 = vmatprep.subr.bf16.mxu0 0
        %2452 = vmatpush1.bf16.xpose.msra.mxu0 0
        %2453 = vmatprep.subr.bf16.mxu0 0
        %2454 = vmatpush1.bf16.xpose.msra.mxu0 0
        %2455 = vmatprep.subr.bf16.mxu0 0
        %2456 = vmatpush1.bf16.xpose.msra.mxu0 0
        %2457 = vmatprep.subr.bf16.mxu0 0
        %2458 = vmatpush1.bf16.xpose.msra.mxu0 0
        %2459 = vmatprep.subr.bf16.mxu0 0
        %2460 = vmatpush1.bf16.xpose.msra.mxu0 0
        %2461 = vmatprep.subr.bf16.mxu0 0
        %2462 = vmatpush1.bf16.xpose.msra.mxu0 0
        %2463 = vmatprep.subr.bf16.mxu0 0
        %2464 = vmatpush1.bf16.xpose.msra.mxu0 0
        %2465 = vmatprep.subr.bf16.mxu0 0
        %2466 = vmatpush1.bf16.xpose.msra.mxu0 0
        %2467 = vmatprep.subr.bf16.mxu0 0
        %2468 = vmatpush1.bf16.xpose.msra.mxu0 0
        %2469 = vmatprep.subr.bf16.mxu0 0
        %2470 = vmatpush1.bf16.xpose.msra.mxu0 0
        %2471 = vmatprep.subr.bf16.mxu0 0
        %2472 = vmatpush1.bf16.xpose.msra.mxu0 0
        %2473 = vmatprep.subr.bf16.mxu0 0
        %2474 = vmatpush1.bf16.xpose.msra.mxu0 0
        %2475 = vmatprep.subr.bf16.mxu0 0
        %2476 = vmatpush1.bf16.xpose.msra.mxu0 0
        %2477 = vmatprep.subr.bf16.mxu0 0
        %2478 = vmatpush1.bf16.xpose.msra.mxu0 0
        %2479 = vmatprep.mubr.bf16.mxu0 0
        %2480 = vmatmul.mubr.bf16.gmra.mrb[0].mxu0 %v2442
        %v2481 = vpop.f32.mrb[0].mxu0
        %v2482 = vadd.f32 0.0, %v2481
        %v2483 = vpop.f32.mrb[0].mxu0
        %v2484 = vpop.f32.mrb[0].mxu0
        %v2485 = vpop.f32.mrb[0].mxu0
        %2486 = vdwg.mxu0
        %2487 = vxpose.xlu0.b32.start [1/16] %v2344, 128
        %2488 = vxpose.xlu0.b32.cont [2/16] %v2390, 128
        %2489 = vxpose.xlu0.b32.cont [3/16] %v2436, 128
        %2490 = vxpose.xlu0.b32.cont [4/16] %v2482, 128
        %2491 = vxpose.xlu0.b32.cont [5/16] 0.0, 128
        %2492 = vxpose.xlu0.b32.cont [6/16] 0.0, 128
        %2493 = vxpose.xlu0.b32.cont [7/16] 0.0, 128
        %2494 = vxpose.xlu0.b32.cont [8/16] 0.0, 128
        %2495 = vxpose.xlu0.b32.cont [9/16] 0.0, 128
        %2496 = vxpose.xlu0.b32.cont [10/16] 0.0, 128
        %2497 = vxpose.xlu0.b32.cont [11/16] 0.0, 128
        %2498 = vxpose.xlu0.b32.cont [12/16] 0.0, 128
        %2499 = vxpose.xlu0.b32.cont [13/16] 0.0, 128
        %2500 = vxpose.xlu0.b32.cont [14/16] 0.0, 128
        %2501 = vxpose.xlu0.b32.cont [15/16] 0.0, 128
        %2502 = vxpose.xlu0.b32.end [16/16] 0.0, 128
        %v2503 = vpop.trf.xlu0
        %v2504 = vpop.trf.xlu0
        %v2505 = vpop.trf.xlu0
        %v2506 = vpop.trf.xlu0
        %v2507 = vpop.trf.xlu0
        %v2508 = vpop.trf.xlu0
        %v2509 = vpop.trf.xlu0
        %v2510 = vpop.trf.xlu0
        %v2511 = vpop.trf.xlu0
        %v2512 = vpop.trf.xlu0
        %v2513 = vpop.trf.xlu0
        %v2514 = vpop.trf.xlu0
        %v2515 = vpop.trf.xlu0
        %v2516 = vpop.trf.xlu0
        %v2517 = vpop.trf.xlu0
        %v2518 = vpop.trf.xlu0
        %v2519 = vpack.c.bf16 %v2503, %v2503
        %s2520 = scalar_lea.vmem [#allocation12], 48
        %v2521 = vld [vmem:[%s2520] sm:$0xf]
        %v2522 = vld [vmem:[%s2520 + $0x4] sm:$0xf]
        %v2523 = vld [vmem:[%s2520 + $0x8] sm:$0xf]
        %v2524 = vld [vmem:[%s2520 + $0xc] sm:$0xf]
        %v2525 = vld [vmem:[#allocation13 + $0x3] sm:$0x1]
        %v2526 = vlaneseq
        %v2527 = vshrl.u32 %v2526, 7
        %v2528 = vsub.s32 0, %v2527
        %v2529 = vrot.slane %v2525, %v2528
        %v2534 = vunpack.c.l.b16 %v2521
        %v2535 = vunpack.c.l.b16 %v2522
        %v2536 = vunpack.c.l.b16 %v2523
        %v2537 = vunpack.c.l.b16 %v2524
        %v2538 = vpack.c.b16 %v2535, %v2534
        %v2539 = vpack.c.b16 %v2537, %v2536
        %v2543 = vsel %vm1065, %v2519, 0
        %2545 = vmatprep.subr.bf16.mxu0 0
        %2546 = vmatpush1.bf16.msra.mxu0 %v2538
        %2547 = vmatprep.subr.bf16.mxu0 0
        %2548 = vmatpush1.bf16.msra.mxu0 %v2539
        %2549 = vmatprep.subr.bf16.mxu0 0
        %2550 = vmatpush1.bf16.msra.mxu0 0
        %2551 = vmatprep.subr.bf16.mxu0 0
        %2552 = vmatpush1.bf16.msra.mxu0 0
        %2553 = vmatprep.subr.bf16.mxu0 0
        %2554 = vmatpush1.bf16.msra.mxu0 0
        %2555 = vmatprep.subr.bf16.mxu0 0
        %2556 = vmatpush1.bf16.msra.mxu0 0
        %2557 = vmatprep.subr.bf16.mxu0 0
        %2558 = vmatpush1.bf16.msra.mxu0 0
        %2559 = vmatprep.subr.bf16.mxu0 0
        %2560 = vmatpush1.bf16.msra.mxu0 0
        %2561 = vmatprep.subr.bf16.mxu0 0
        %2562 = vmatpush1.bf16.msra.mxu0 0
        %2563 = vmatprep.subr.bf16.mxu0 0
        %2564 = vmatpush1.bf16.msra.mxu0 0
        %2565 = vmatprep.subr.bf16.mxu0 0
        %2566 = vmatpush1.bf16.msra.mxu0 0
        %2567 = vmatprep.subr.bf16.mxu0 0
        %2568 = vmatpush1.bf16.msra.mxu0 0
        %2569 = vmatprep.subr.bf16.mxu0 0
        %2570 = vmatpush1.bf16.msra.mxu0 0
        %2571 = vmatprep.subr.bf16.mxu0 0
        %2572 = vmatpush1.bf16.msra.mxu0 0
        %2573 = vmatprep.subr.bf16.mxu0 0
        %2574 = vmatpush1.bf16.msra.mxu0 0
        %2575 = vmatprep.subr.bf16.mxu0 0
        %2576 = vmatpush1.bf16.msra.mxu0 0
        %2577 = vmatprep.mubr.bf16.mxu0 0
        %2578 = vmatmul.mubr.bf16.gmra.mrb[0].mxu0 %v2543
        %v2579 = vpop.f32.mrb[0].mxu0
        %v2580 = vadd.f32 %v2529, %v2579
        %v2581 = vpop.f32.mrb[0].mxu0
        %v2582 = vpop.f32.mrb[0].mxu0
        %v2583 = vpop.f32.mrb[0].mxu0
        %2584 = vdwg.mxu0
        %v2585 = vadd.f32 %v1832, %v2580
        %v2586 = vld [vmem:[#allocation21 + $0x1] sm:$0x1]
        %v2587 = vld [vmem:[#allocation22 + $0x1] sm:$0x1]
        %v2588 = vsel %vm1065, %v2585, 0.0
        %2589 = vadd.xlane.f32.xlu0 %v2588
        %v2590 = vpop.xlane.xlu0 %2589
        %v2591 = vmul.f32 %v2590, %v1812
        %v2592 = vsub.f32 %v2585, %v2591
        %v2593 = vmul.f32 %v2592, %v2592
        %v2594 = vsel %vm1065, %v2593, 0.0
        %2595 = vadd.xlane.f32.xlu0 %v2594
        %v2596 = vpop.xlane.xlu0 %2595
        %v2597 = vmul.f32 %v2596, %v1812
        %v2598 = vadd.f32 %v2597, 1e-05
        %v2599 = vrsqrt.pop %v2598
        %v2600 = vmul.f32 %v2592, %v2599
        %v2601 = vlaneseq
        %v2602 = vshrl.u32 %v2601, 7
        %v2603 = vsub.s32 0, %v2602
        %v2604 = vrot.slane %v2586, %v2603
        %v2605 = vmul.f32 %v2600, %v2604
        %v2606 = vlaneseq
        %v2607 = vshrl.u32 %v2606, 7
        %v2608 = vsub.s32 0, %v2607
        %v2609 = vrot.slane %v2587, %v2608
        %v2610 = vadd.f32 %v2605, %v2609
        %v2611 = vpack.c.bf16 %v2610, %v2610
        %v2612 = vld [vmem:[#allocation15] sm:$0xf]
        %v2613 = vld [vmem:[#allocation15 + $0x4] sm:$0xf]
        %v2614 = vld [vmem:[#allocation15 + $0x8] sm:$0xf]
        %v2615 = vld [vmem:[#allocation15 + $0xc] sm:$0xf]
        %v2616 = vld [vmem:[#allocation16] sm:$0x1]
        %v2618 = vlaneseq
        %v2619 = vshrl.u32 %v2618, 7
        %v2620 = vsub.s32 0, %v2619
        %v2621 = vrot.slane %v2616, %v2620
        %v2627 = vunpack.c.l.b16 %v2612
        %v2628 = vunpack.c.l.b16 %v2613
        %v2629 = vunpack.c.l.b16 %v2614
        %v2630 = vunpack.c.l.b16 %v2615
        %v2631 = vpack.c.b16 %v2628, %v2627
        %v2632 = vpack.c.b16 %v2630, %v2629
        %v2636 = vsel %vm1065, %v2611, 0
        %2638 = vmatprep.subr.bf16.mxu0 0
        %2639 = vmatpush1.bf16.msra.mxu0 %v2631
        %2640 = vmatprep.subr.bf16.mxu0 0
        %2641 = vmatpush1.bf16.msra.mxu0 %v2632
        %2642 = vmatprep.subr.bf16.mxu0 0
        %2643 = vmatpush1.bf16.msra.mxu0 0
        %2644 = vmatprep.subr.bf16.mxu0 0
        %2645 = vmatpush1.bf16.msra.mxu0 0
        %2646 = vmatprep.subr.bf16.mxu0 0
        %2647 = vmatpush1.bf16.msra.mxu0 0
        %2648 = vmatprep.subr.bf16.mxu0 0
        %2649 = vmatpush1.bf16.msra.mxu0 0
        %2650 = vmatprep.subr.bf16.mxu0 0
        %2651 = vmatpush1.bf16.msra.mxu0 0
        %2652 = vmatprep.subr.bf16.mxu0 0
        %2653 = vmatpush1.bf16.msra.mxu0 0
        %2654 = vmatprep.subr.bf16.mxu0 0
        %2655 = vmatpush1.bf16.msra.mxu0 0
        %2656 = vmatprep.subr.bf16.mxu0 0
        %2657 = vmatpush1.bf16.msra.mxu0 0
        %2658 = vmatprep.subr.bf16.mxu0 0
        %2659 = vmatpush1.bf16.msra.mxu0 0
        %2660 = vmatprep.subr.bf16.mxu0 0
        %2661 = vmatpush1.bf16.msra.mxu0 0
        %2662 = vmatprep.subr.bf16.mxu0 0
        %2663 = vmatpush1.bf16.msra.mxu0 0
        %2664 = vmatprep.subr.bf16.mxu0 0
        %2665 = vmatpush1.bf16.msra.mxu0 0
        %2666 = vmatprep.subr.bf16.mxu0 0
        %2667 = vmatpush1.bf16.msra.mxu0 0
        %2668 = vmatprep.subr.bf16.mxu0 0
        %2669 = vmatpush1.bf16.msra.mxu0 0
        %2670 = vmatprep.mubr.bf16.mxu0 0
        %2671 = vmatmul.mubr.bf16.gmra.mrb[0].mxu0 %v2636
        %v2672 = vpop.f32.mrb[0].mxu0
        %v2673 = vadd.f32 %v2621, %v2672
        %v2674 = vpop.f32.mrb[0].mxu0
        %v2675 = vpop.f32.mrb[0].mxu0
        %v2676 = vpop.f32.mrb[0].mxu0
        %2677 = vdwg.mxu0
        %v2678 = vmax.f32 %v2673, 0.0
        %v2679 = vpack.c.bf16 %v2678, %v2678
        %v2680 = vld [vmem:[#allocation18] sm:$0xf]
        %v2681 = vld [vmem:[#allocation18 + $0x4] sm:$0xf]
        %v2682 = vld [vmem:[#allocation18 + $0x8] sm:$0xf]
        %v2683 = vld [vmem:[#allocation18 + $0xc] sm:$0xf]
        %v2684 = vld [vmem:[#allocation18 + $0x10] sm:$0xf]
        %v2685 = vld [vmem:[#allocation18 + $0x14] sm:$0xf]
        %v2686 = vld [vmem:[#allocation18 + $0x18] sm:$0xf]
        %v2687 = vld [vmem:[#allocation18 + $0x1c] sm:$0xf]
        %v2688 = vld [vmem:[#allocation18 + $0x20] sm:$0xf]
        %v2689 = vld [vmem:[#allocation18 + $0x24] sm:$0xf]
        %v2690 = vld [vmem:[#allocation18 + $0x28] sm:$0xf]
        %v2691 = vld [vmem:[#allocation18 + $0x2c] sm:$0xf]
        %v2692 = vld [vmem:[#allocation18 + $0x30] sm:$0xf]
        %v2693 = vld [vmem:[#allocation18 + $0x34] sm:$0xf]
        %v2694 = vld [vmem:[#allocation18 + $0x38] sm:$0xf]
        %v2695 = vld [vmem:[#allocation18 + $0x3c] sm:$0xf]
        %v2696 = vld [vmem:[#allocation19] sm:$0x1]
        %v2698 = vlaneseq
        %v2699 = vshrl.u32 %v2698, 7
        %v2700 = vsub.s32 0, %v2699
        %v2701 = vrot.slane %v2696, %v2700
        %v2719 = vunpack.c.l.b16 %v2680
        %v2720 = vunpack.c.l.b16 %v2681
        %v2721 = vunpack.c.l.b16 %v2682
        %v2722 = vunpack.c.l.b16 %v2683
        %v2723 = vunpack.c.l.b16 %v2684
        %v2724 = vunpack.c.l.b16 %v2685
        %v2725 = vunpack.c.l.b16 %v2686
        %v2726 = vunpack.c.l.b16 %v2687
        %v2727 = vunpack.c.l.b16 %v2688
        %v2728 = vunpack.c.l.b16 %v2689
        %v2729 = vunpack.c.l.b16 %v2690
        %v2730 = vunpack.c.l.b16 %v2691
        %v2731 = vunpack.c.l.b16 %v2692
        %v2732 = vunpack.c.l.b16 %v2693
        %v2733 = vunpack.c.l.b16 %v2694
        %v2734 = vunpack.c.l.b16 %v2695
        %v2735 = vpack.c.b16 %v2720, %v2719
        %v2736 = vpack.c.b16 %v2722, %v2721
        %v2737 = vpack.c.b16 %v2724, %v2723
        %v2738 = vpack.c.b16 %v2726, %v2725
        %v2739 = vpack.c.b16 %v2728, %v2727
        %v2740 = vpack.c.b16 %v2730, %v2729
        %v2741 = vpack.c.b16 %v2732, %v2731
        %v2742 = vpack.c.b16 %v2734, %v2733
        %2751 = vmatprep.subr.bf16.mxu0 0
        %2752 = vmatpush1.bf16.msra.mxu0 %v2735
        %2753 = vmatprep.subr.bf16.mxu0 0
        %2754 = vmatpush1.bf16.msra.mxu0 %v2736
        %2755 = vmatprep.subr.bf16.mxu0 0
        %2756 = vmatpush1.bf16.msra.mxu0 %v2737
        %2757 = vmatprep.subr.bf16.mxu0 0
        %2758 = vmatpush1.bf16.msra.mxu0 %v2738
        %2759 = vmatprep.subr.bf16.mxu0 0
        %2760 = vmatpush1.bf16.msra.mxu0 %v2739
        %2761 = vmatprep.subr.bf16.mxu0 0
        %2762 = vmatpush1.bf16.msra.mxu0 %v2740
        %2763 = vmatprep.subr.bf16.mxu0 0
        %2764 = vmatpush1.bf16.msra.mxu0 %v2741
        %2765 = vmatprep.subr.bf16.mxu0 0
        %2766 = vmatpush1.bf16.msra.mxu0 %v2742
        %2767 = vmatprep.subr.bf16.mxu0 0
        %2768 = vmatpush1.bf16.msra.mxu0 0
        %2769 = vmatprep.subr.bf16.mxu0 0
        %2770 = vmatpush1.bf16.msra.mxu0 0
        %2771 = vmatprep.subr.bf16.mxu0 0
        %2772 = vmatpush1.bf16.msra.mxu0 0
        %2773 = vmatprep.subr.bf16.mxu0 0
        %2774 = vmatpush1.bf16.msra.mxu0 0
        %2775 = vmatprep.subr.bf16.mxu0 0
        %2776 = vmatpush1.bf16.msra.mxu0 0
        %2777 = vmatprep.subr.bf16.mxu0 0
        %2778 = vmatpush1.bf16.msra.mxu0 0
        %2779 = vmatprep.subr.bf16.mxu0 0
        %2780 = vmatpush1.bf16.msra.mxu0 0
        %2781 = vmatprep.subr.bf16.mxu0 0
        %2782 = vmatpush1.bf16.msra.mxu0 0
        %2783 = vmatprep.mubr.bf16.mxu0 0
        %2784 = vmatmul.mubr.bf16.gmra.mrb[0].mxu0 %v2679
        %v2785 = vpop.f32.mrb[0].mxu0
        %v2786 = vadd.f32 %v2701, %v2785
        %v2787 = vpop.f32.mrb[0].mxu0
        %v2788 = vpop.f32.mrb[0].mxu0
        %v2789 = vpop.f32.mrb[0].mxu0
        %2790 = vdwg.mxu0
        %v2791 = vadd.f32 %v2610, %v2786
        %v2792 = vld [vmem:[#allocation21 + $0x2] sm:$0x1]
        %v2793 = vld [vmem:[#allocation22 + $0x2] sm:$0x1]
        %v2794 = vsel %vm1065, %v2791, 0.0
        %2795 = vadd.xlane.f32.xlu0 %v2794
        %v2796 = vpop.xlane.xlu0 %2795
        %v2797 = vmul.f32 %v2796, %v1812
        %v2798 = vsub.f32 %v2791, %v2797
        %v2799 = vmul.f32 %v2798, %v2798
        %v2800 = vsel %vm1065, %v2799, 0.0
        %2801 = vadd.xlane.f32.xlu0 %v2800
        %v2802 = vpop.xlane.xlu0 %2801
        %v2803 = vmul.f32 %v2802, %v1812
        %v2804 = vadd.f32 %v2803, 1e-05
        %v2805 = vrsqrt.pop %v2804
        %v2806 = vmul.f32 %v2798, %v2805
        %v2807 = vlaneseq
        %v2808 = vshrl.u32 %v2807, 7
        %v2809 = vsub.s32 0, %v2808
        %v2810 = vrot.slane %v2792, %v2809
        %v2811 = vmul.f32 %v2806, %v2810
        %v2812 = vlaneseq
        %v2813 = vshrl.u32 %v2812, 7
        %v2814 = vsub.s32 0, %v2813
        %v2815 = vrot.slane %v2793, %v2814
        %v2816 = vadd.f32 %v2811, %v2815
        %v2817 = vld [vmem:[#allocation21 + $0x3] sm:$0x1]
        %v2818 = vld [vmem:[#allocation22 + $0x3] sm:$0x1]
        %v2819 = vsel %vm1065, %v2816, 0.0
        %2820 = vadd.xlane.f32.xlu0 %v2819
        %v2821 = vpop.xlane.xlu0 %2820
        %v2822 = vmul.f32 %v2821, %v1812
        %v2823 = vsub.f32 %v2816, %v2822
        %v2824 = vmul.f32 %v2823, %v2823
        %v2825 = vsel %vm1065, %v2824, 0.0
        %2826 = vadd.xlane.f32.xlu0 %v2825
        %v2827 = vpop.xlane.xlu0 %2826
        %v2828 = vmul.f32 %v2827, %v1812
        %v2829 = vadd.f32 %v2828, 1e-05
        %v2830 = vrsqrt.pop %v2829
        %v2831 = vmul.f32 %v2823, %v2830
        %v2832 = vlaneseq
        %v2833 = vshrl.u32 %v2832, 7
        %v2834 = vsub.s32 0, %v2833
        %v2835 = vrot.slane %v2817, %v2834
        %v2836 = vmul.f32 %v2831, %v2835
        %v2837 = vlaneseq
        %v2838 = vshrl.u32 %v2837, 7
        %v2839 = vsub.s32 0, %v2838
        %v2840 = vrot.slane %v2818, %v2839
        %v2841 = vadd.f32 %v2836, %v2840
        %2842 = vst.msk [vmem:[%s612] sm:$0xff] %vm1065, %v2841
        %s2843 = sand.u32 %s321, 1
        %s2844 = scalar_lea.sflag [#allocation6], %s2843
        %s2845 = sand.u32 %s321, 1
        %s2846 = smul.addr %s2845, 8
        %s2847 = scalar_lea.vmem [#allocation24], %s2846
        // Predicated region
        $region121: #{decoder_forward.1} parent=67 // pred_check
          %p2848 = pneg %p331
        $region122: #{decoder_forward.1} parent=67 // pred_check_branch
          %2850 = sbr.rel (%p2848) target = $region124
        $region123: #{decoder_forward.1} parent=67 // pred_region
          %s2852 = ssub.s32 128, 128
          %2853 = vsyncadd %s2844, %s2852
          %s2854 = sadd.s32 %s42, %s41
          %s2855 = smul.addr %s2854, 128
          %s2856 = scalar_lea.hbm %s12, %s2855
          %s2858 = sshll.u32 %s2847, 4
          %s2859 = int_to_ptr.vmem [resolvable:$true] %s2858
          %2861 = dma.vmem_to_hbm [thread:$0]  %s2859, 128, %s2856, %s2844
        $region124: #{decoder_forward.1} parent=67 // pred_fallthru
          _
      $region68: #{decoder_forward.1} parent=5 // pred_fallthru
        _
      %p2862 = scmp.le.s32.totalorder 2, %s32
      // Predicated region
      $region125: #{decoder_forward.1} parent=5 // pred_check
        %p2863 = pneg %p2862
      $region126: #{decoder_forward.1} parent=5 // pred_check_branch
        %2865 = sbr.rel (%p2863) target = $region128
      $region127: #{decoder_forward.1} parent=5 // pred_region
        %s2866 = ssub.s32 %s32, 2
        // Predicated region
        $region129: #{decoder_forward.1} parent=127 // pred_check
          %p2867 = pneg %p337
        $region130: #{decoder_forward.1} parent=127 // pred_check_branch
          %2869 = sbr.rel (%p2867) target = $region132
        $region131: #{decoder_forward.1} parent=127 // pred_region
          %s2870 = sand.u32 %s322, 1
          %s2871 = scalar_lea.sflag [#allocation6], %s2870
          %s2872 = sand.u32 %s322, 1
          %s2873 = smul.addr %s2872, 8
          %s2874 = scalar_lea.vmem [#allocation24], %s2873
          %2875 = dma.done %s2871, 128
        $region132: #{decoder_forward.1} parent=127 // pred_fallthru
          _
      $region128: #{decoder_forward.1} parent=5 // pred_fallthru
        _
    $region6: #{decoder_forward.1} parent=1 // loop_footer
      %s36 = sadd.s32 1, %s32
    $region7: #{decoder_forward.1} parent=1 // loop_footer_branch
      %31 = sbr.rel target = $region3
    $region8: #{decoder_forward.1} parent=1 // loop_exit
      _
    %2876 = vsyncpa [#allocation5], 1
    %s2877 = scalar_lea.sflag [#allocation5], 1
    %2878 = vsyncpa %s2877, 1
    %2879 = vsyncpa [#allocation8], 1
    %s2880 = scalar_lea.sflag [#allocation8], 1
    %2881 = vsyncpa %s2880, 1
    %2882 = vsyncpa [#allocation11], 1
    %2883 = vsyncpa [#allocation14], 1
    %2884 = vsyncpa [#allocation17], 1
    %2885 = vsyncpa [#allocation20], 1
    %2886 = vsyncpa [#allocation23], 1
    %2887 = vsyncpa [#allocation6], 1
    %s2888 = scalar_lea.sflag [#allocation6], 1
    %2889 = vsyncpa %s2888, 1

</llo_original>
